<compile_context>
chip_gen: v6e
topology: v6e:2x2x1
jax: 0.10.0
libtpu: 0.0.40
codegen_flags: <defaults>
</compile_context>

<pallas_src>
import functools

import jax
import jax.numpy as jnp
from jax import lax
from jax.experimental import pallas as pl
from jax.experimental.pallas import tpu as pltpu


def _layernorm(x, w, b, eps=1e-5):
    # x: (R, C), w/b: (1, C).  Matches nn.LayerNorm (biased variance, eps=1e-5).  f32 math.
    mu = jnp.mean(x, axis=-1, keepdims=True)
    var = jnp.mean((x - mu) ** 2, axis=-1, keepdims=True)
    return (x - mu) * lax.rsqrt(var + eps) * w + b


def _softmax_rows(s):
    # Numerically stable softmax along the last axis (f32 max/sum); the
    # reciprocal goes to the otherwise-idle EUP slot instead of the VALU.
    s = s - jnp.max(s, axis=-1, keepdims=True)
    p = jnp.exp(s)
    return p * pl.reciprocal(jnp.sum(p, axis=-1, keepdims=True), approx=True)


def block_kernel(x_ref, ln1w_ref, ln1b_ref, wk_ref, wproj_ref, bproj_ref,
                 ln2w_ref, ln2b_ref, w1_ref, b1_ref, w2_ref, b2_ref,
                 o_ref, *, num_heads, head_size, use_bf16):
    Bb, T, C = x_ref.shape
    R = Bb * T
    cd = jnp.bfloat16 if use_bf16 else jnp.float32   # matmul-operand dtype

    # Flatten (Bb, T, C) -> (Bb*T, C): leading-dim collapse only, no relayout.
    x = x_ref[...].astype(jnp.float32).reshape(R, C)

    # ---------------- multihead attention branch ----------------
    h = _layernorm(x, ln1w_ref[...], ln1b_ref[...])
    # q = k = v = LayerNorm(x) @ Wk  (module quirk: all three use `key`)
    qkv = jnp.dot(h.astype(cd), wk_ref[...].astype(cd),
                  preferred_element_type=jnp.float32)               # (R, C) f32

    scale = float(C) ** (-0.5)                 # module quirk: n_embed ** -0.5
    row = lax.broadcasted_iota(jnp.int32, (T, T), 0)
    col = lax.broadcasted_iota(jnp.int32, (T, T), 1)
    causal = row >= col                                               # (T, T)
    mask3 = jnp.broadcast_to(causal[None, :, :], (Bb, T, T))          # hoisted out of head loop
    neg = jnp.float32(-1e30)                   # finite fill (safe: causal rows never fully masked)

    # Scale is folded into the q operand (one (R, C) multiply) instead of the
    # (.., T, T) score tensor.  k = v = unscaled qkv (module quirk).
    v3 = qkv.reshape(Bb, T, C).astype(cd)
    q3 = (qkv * scale).reshape(Bb, T, C).astype(cd)

    wproj = wproj_ref[...]
    proj = jnp.zeros((R, C), jnp.float32) + bproj_ref[...]            # start from proj bias

    # TODO(synk): flash-tile over a kv-block grid axis for production T.
    for hd in range(num_heads):
        lo = hd * head_size
        vh = v3[:, :, lo:lo + head_size]                              # (Bb, T, hs) static lane slice
        qh = q3[:, :, lo:lo + head_size]
        s = jnp.einsum('bqd,bkd->bqk', qh, vh,
                       preferred_element_type=jnp.float32)            # (Bb, T, T) f32
        p = _softmax_rows(jnp.where(mask3, s, neg))                    # f32 softmax
        ctx = jnp.einsum('bqk,bkd->bqd', p.astype(cd), vh,
                         preferred_element_type=jnp.float32)           # (Bb, T, hs)
        # Fold the output projection per head: == torch.cat(heads) @ Wproj.
        proj += jnp.dot(ctx.reshape(R, head_size).astype(cd),
                        wproj[lo:lo + head_size, :].astype(cd),
                        preferred_element_type=jnp.float32)

    x1 = x + proj                              # residual 1 (proj already includes bproj)

    # ---------------- feed-forward branch ----------------
    h2 = _layernorm(x1, ln2w_ref[...], ln2b_ref[...])
    ff = jnp.dot(h2.astype(cd), w1_ref[...].astype(cd),
                 preferred_element_type=jnp.float32) + b1_ref[...]
    ff = jnp.maximum(ff, 0.0)                  # ReLU
    ff = jnp.dot(ff.astype(cd), w2_ref[...].astype(cd),
                 preferred_element_type=jnp.float32) + b2_ref[...]

    # residual 2; reshape is a leading-dim split only (lane dim C unchanged).
    # TODO(synk): lane-dense store packing for C < 128.
    o_ref[...] = (x1 + ff).reshape(Bb, T, C).astype(o_ref.dtype)


def _vmem_capacity_bytes():
    try:
        return int(pltpu.get_tpu_info().vmem_capacity_bytes)
    except Exception:  # noqa: BLE001 - be conservative if the query is unavailable
        return 64 * 1024 * 1024          # v7x per-TC VMEM (smallest current generation)


def _pick_batch_block(B, T, C, hidden, vmem_cap, x_itemsize):
    # Generation-aware per-step VMEM budget.  Guarantees >= 2 grid steps when
    # B >= 2 so both v7x TensorCores get work under dimension_semantics=("parallel",).
    weights = 4 * (2 * C * C + 2 * C * hidden) + 4 * (6 * C + hidden)   # f32 upper bound

    def step_bytes(bb):
        rows = bb * T
        io = 2 * 2 * rows * C * x_itemsize        # double-buffered x + out tiles
        inter = rows * (16 * C + 4 * T) * 4       # live f32 intermediates (FF 4C slab dominates)
        return weights + io + inter

    budget = int(vmem_cap * 0.6)                  # leave headroom for compiler scratch
    best = 1
    for bb in range(1, B + 1):
        if B % bb:
            continue
        if B >= 2 and B // bb < 2:                # keep grid length >= 2 (v7x megacore)
            continue
        if step_bytes(bb) <= budget:
            best = bb
    return best


def transformer_block(x, params, *, num_heads, use_bf16=True, batch_block=None):
    (ln1w, ln1b, wk, wproj, bproj, ln2w, ln2b, w1, b1, w2, b2) = params
    B, T, C = x.shape
    assert C % num_heads == 0
    head_size = C // num_heads
    hidden = w1.shape[1]

    vmem_cap = _vmem_capacity_bytes()
    if batch_block is None:
        batch_block = _pick_batch_block(B, T, C, hidden, vmem_cap, x.dtype.itemsize)
    assert B % batch_block == 0, "batch_block must divide B"
    grid = (B // batch_block,)

    # ~75% of physical VMEM, capped at 96 MiB: ~96 MiB on v5e/v6e (128 MiB),
    # ~48 MiB on v7x (64 MiB).
    vmem_limit = max(32 << 20, min((vmem_cap * 3) // 4, 96 << 20))

    # Matmul weights in bf16 (MXU-native on v6e/v7x, halves weight DMA traffic);
    # LayerNorm params and biases stay f32 (they feed f32 VPU math / f32 accumulators).
    cd = jnp.bfloat16 if use_bf16 else x.dtype
    wk_c, wproj_c, w1_c, w2_c = (w.astype(cd) for w in (wk, wproj, w1, w2))

    kernel = functools.partial(block_kernel, num_heads=num_heads,
                               head_size=head_size, use_bf16=use_bf16)

    def build(single_buffer_weights):
        # Constant-index weight/bias blocks do not need double buffering.
        wkwargs = {"pipeline_mode": pl.Buffered(1)} if single_buffer_weights else {}

        def wspec(*shape):
            return pl.BlockSpec(shape, lambda b: (0,) * len(shape), **wkwargs)

        return pl.pallas_call(
            kernel,
            out_shape=jax.ShapeDtypeStruct((B, T, C), x.dtype),
            grid_spec=pltpu.PrefetchScalarGridSpec(
                num_scalar_prefetch=0,
                grid=grid,
                in_specs=[
                    pl.BlockSpec((batch_block, T, C), lambda b: (b, 0, 0)),  # x (pipelined)
                    wspec(1, C), wspec(1, C),            # LayerNorm1 weight / bias
                    wspec(C, C),                         # Wk (all heads, columns head-major)
                    wspec(C, C), wspec(1, C),            # projection weight / bias
                    wspec(1, C), wspec(1, C),            # LayerNorm2 weight / bias
                    wspec(C, hidden), wspec(1, hidden),  # FF W1 / b1
                    wspec(hidden, C), wspec(1, C),       # FF W2 / b2
                ],
                out_specs=pl.BlockSpec((batch_block, T, C), lambda b: (b, 0, 0)),
            ),
            compiler_params=pltpu.CompilerParams(
                dimension_semantics=("parallel",),
                vmem_limit_bytes=vmem_limit,
            ),
        )

    args = (x, ln1w, ln1b, wk_c, wproj_c, bproj, ln2w, ln2b, w1_c, b1, w2_c, b2)
    err = None
    for sb in (True, False):   # fall back to double-buffered weights if Buffered(1) unsupported
        try:
            return jax.block_until_ready(build(sb)(*args))
        except Exception as e:  # noqa: BLE001
            err = e
    raise err


def _reference(x, params, *, num_heads):
    # pure-JAX f32 reference with identical semantics, for a sanity check
    (ln1w, ln1b, wk, wproj, bproj, ln2w, ln2b, w1, b1, w2, b2) = params
    B, T, C = x.shape
    hs = C // num_heads

    def ln(v, w, b):
        mu = jnp.mean(v, -1, keepdims=True)
        var = jnp.mean((v - mu) ** 2, -1, keepdims=True)
        return (v - mu) / jnp.sqrt(var + 1e-5) * w + b

    h = ln(x, ln1w, ln1b)
    qkv = h @ wk                                     # (B, T, C)
    causal = jnp.tril(jnp.ones((T, T), bool))
    outs = []
    for hd in range(num_heads):
        v = qkv[..., hd * hs:(hd + 1) * hs]
        s = jnp.einsum('btd,bsd->bts', v, v) * (C ** -0.5)
        s = jnp.where(causal, s, -jnp.inf)
        p = jax.nn.softmax(s, axis=-1)
        outs.append(jnp.einsum('bts,bsd->btd', p, v))
    attn = jnp.concatenate(outs, -1)
    x1 = x + attn @ wproj + bproj
    h2 = ln(x1, ln2w, ln2b)
    ff = jax.nn.relu(h2 @ w1 + b1) @ w2 + b2
    return x1 + ff


if __name__ == "__main__":
    # small shapes consistent with the module
    B, T = 2, 8            # batch, sequence (block_size = 8)
    n_embed = 32
    num_heads = 4
    hidden = 4 * n_embed

    key = jax.random.PRNGKey(0)
    ks = jax.random.split(key, 8)

    x = jax.random.normal(ks[0], (B, T, n_embed), jnp.float32)

    # deterministic parameter init (weights stored pre-transposed for x @ W)
    s = 0.1
    ln1w = jnp.ones((1, n_embed), jnp.float32)
    ln1b = jnp.zeros((1, n_embed), jnp.float32)
    wk = s * jax.random.normal(ks[1], (n_embed, n_embed), jnp.float32)      # per-head cols
    wproj = s * jax.random.normal(ks[2], (n_embed, n_embed), jnp.float32)
    bproj = s * jax.random.normal(ks[3], (1, n_embed), jnp.float32)
    ln2w = jnp.ones((1, n_embed), jnp.float32)
    ln2b = jnp.zeros((1, n_embed), jnp.float32)
    w1 = s * jax.random.normal(ks[4], (n_embed, hidden), jnp.float32)
    b1 = s * jax.random.normal(ks[5], (1, hidden), jnp.float32)
    w2 = s * jax.random.normal(ks[6], (hidden, n_embed), jnp.float32)
    b2 = s * jax.random.normal(ks[7], (1, n_embed), jnp.float32)

    params = (ln1w, ln1b, wk, wproj, bproj, ln2w, ln2b, w1, b1, w2, b2)

    ref = _reference(x, params, num_heads=num_heads)

    # 1) f32 matmul operands: tight check of the kernel math (tolerance covers
    #    the approx-EUP reciprocal in the softmax denominator).
    out_f32 = transformer_block(x, params, num_heads=num_heads, use_bf16=False)
    assert out_f32.shape == (B, T, n_embed)
    assert jnp.allclose(out_f32, ref, atol=5e-3, rtol=5e-3), "f32 kernel mismatch vs reference"

    # 2) bf16 matmul operands (MXU-native path), f32 accumulation / LN / softmax
    #    stats; looser tolerance absorbs bf16 operand rounding.
    out_bf16 = transformer_block(x, params, num_heads=num_heads, use_bf16=True)
    assert out_bf16.shape == (B, T, n_embed)
    assert jnp.allclose(out_bf16, ref, atol=3e-2, rtol=3e-2), "bf16 kernel mismatch vs reference"

    print("KERNEL_OK")
</pallas_src>

<mosaic_0001>
module attributes {stable_mosaic.version = 11 : i64} {
  func.func @block_kernel(%arg0: i32, %arg1: memref<1x8x32xf32, #tpu.memory_space<vmem>>, %arg2: memref<1x32xf32, #tpu.memory_space<vmem>>, %arg3: memref<1x32xf32, #tpu.memory_space<vmem>>, %arg4: memref<32x32xf32, #tpu.memory_space<vmem>>, %arg5: memref<32x32xf32, #tpu.memory_space<vmem>>, %arg6: memref<1x32xf32, #tpu.memory_space<vmem>>, %arg7: memref<1x32xf32, #tpu.memory_space<vmem>>, %arg8: memref<1x32xf32, #tpu.memory_space<vmem>>, %arg9: memref<32x128xf32, #tpu.memory_space<vmem>>, %arg10: memref<1x128xf32, #tpu.memory_space<vmem>>, %arg11: memref<128x32xf32, #tpu.memory_space<vmem>>, %arg12: memref<1x32xf32, #tpu.memory_space<vmem>>, %arg13: memref<1x8x32xf32, #tpu.memory_space<vmem>>) attributes {dimension_semantics = [#tpu.dimension_semantics<parallel>], iteration_bounds = array<i64: 2>, scalar_prefetch = 0 : i64, scratch_operands = 0 : i64, tpu.core_type = #tpu.core_type<tc>, window_params = [{transform_indices = @transform_0, window_bounds = array<i64: 1, 8, 32>}, {pipeline_mode = #tpu.pipeline_mode<synchronous>, transform_indices = @transform_1, window_bounds = array<i64: 1, 32>}, {pipeline_mode = #tpu.pipeline_mode<synchronous>, transform_indices = @transform_2, window_bounds = array<i64: 1, 32>}, {pipeline_mode = #tpu.pipeline_mode<synchronous>, transform_indices = @transform_3, window_bounds = array<i64: 32, 32>}, {pipeline_mode = #tpu.pipeline_mode<synchronous>, transform_indices = @transform_4, window_bounds = array<i64: 32, 32>}, {pipeline_mode = #tpu.pipeline_mode<synchronous>, transform_indices = @transform_5, window_bounds = array<i64: 1, 32>}, {pipeline_mode = #tpu.pipeline_mode<synchronous>, transform_indices = @transform_6, window_bounds = array<i64: 1, 32>}, {pipeline_mode = #tpu.pipeline_mode<synchronous>, transform_indices = @transform_7, window_bounds = array<i64: 1, 32>}, {pipeline_mode = #tpu.pipeline_mode<synchronous>, transform_indices = @transform_8, window_bounds = array<i64: 32, 128>}, {pipeline_mode = #tpu.pipeline_mode<synchronous>, transform_indices = @transform_9, window_bounds = array<i64: 1, 128>}, {pipeline_mode = #tpu.pipeline_mode<synchronous>, transform_indices = @transform_10, window_bounds = array<i64: 128, 32>}, {pipeline_mode = #tpu.pipeline_mode<synchronous>, transform_indices = @transform_11, window_bounds = array<i64: 1, 32>}, {transform_indices = @transform_12, window_bounds = array<i64: 1, 8, 32>}]} {
    %c0 = arith.constant 0 : index
    %c0_0 = arith.constant 0 : index
    %c0_1 = arith.constant 0 : index
    %0 = vector.load %arg1[%c0, %c0_0, %c0_1] : memref<1x8x32xf32, #tpu.memory_space<vmem>>, vector<1x8x32xf32>
    %1 = vector.shape_cast %0 : vector<1x8x32xf32> to vector<8x32xf32>
    %c0_2 = arith.constant 0 : index
    %c0_3 = arith.constant 0 : index
    %2 = vector.load %arg2[%c0_2, %c0_3] : memref<1x32xf32, #tpu.memory_space<vmem>>, vector<1x32xf32>
    %c0_4 = arith.constant 0 : index
    %c0_5 = arith.constant 0 : index
    %3 = vector.load %arg3[%c0_4, %c0_5] : memref<1x32xf32, #tpu.memory_space<vmem>>, vector<1x32xf32>
    %cst = arith.constant dense<0.000000e+00> : vector<8xf32>
    %4 = vector.multi_reduction <add>, %1, %cst [1] : vector<8x32xf32> to vector<8xf32>
    %5 = vector.shape_cast %4 : vector<8xf32> to vector<8x1xf32>
    %cst_6 = arith.constant 3.200000e+01 : f32
    %6 = vector.broadcast %cst_6 : f32 to vector<8x1xf32>
    %7 = arith.divf %5, %6 : vector<8x1xf32>
    %8 = vector.broadcast %7 : vector<8x1xf32> to vector<8x32xf32>
    %9 = arith.subf %1, %8 : vector<8x32xf32>
    %10 = arith.mulf %9, %9 : vector<8x32xf32>
    %cst_7 = arith.constant dense<0.000000e+00> : vector<8xf32>
    %11 = vector.multi_reduction <add>, %10, %cst_7 [1] : vector<8x32xf32> to vector<8xf32>
    %12 = vector.shape_cast %11 : vector<8xf32> to vector<8x1xf32>
    %cst_8 = arith.constant 3.200000e+01 : f32
    %13 = vector.broadcast %cst_8 : f32 to vector<8x1xf32>
    %14 = arith.divf %12, %13 : vector<8x1xf32>
    %15 = vector.broadcast %7 : vector<8x1xf32> to vector<8x32xf32>
    %16 = arith.subf %1, %15 : vector<8x32xf32>
    %cst_9 = arith.constant 9.99999974E-6 : f32
    %17 = vector.broadcast %cst_9 : f32 to vector<8x1xf32>
    %18 = arith.addf %14, %17 : vector<8x1xf32>
    %19 = math.rsqrt %18 : vector<8x1xf32>
    %20 = vector.broadcast %19 : vector<8x1xf32> to vector<8x32xf32>
    %21 = arith.mulf %16, %20 : vector<8x32xf32>
    %22 = vector.broadcast %2 : vector<1x32xf32> to vector<8x32xf32>
    %23 = arith.mulf %21, %22 : vector<8x32xf32>
    %24 = vector.broadcast %3 : vector<1x32xf32> to vector<8x32xf32>
    %25 = arith.addf %23, %24 : vector<8x32xf32>
    %c0_10 = arith.constant 0 : index
    %c0_11 = arith.constant 0 : index
    %26 = vector.load %arg4[%c0_10, %c0_11] : memref<32x32xf32, #tpu.memory_space<vmem>>, vector<32x32xf32>
    %cst_12 = arith.constant dense<0.000000e+00> : vector<8x32xf32>
    %27 = tpu.matmul %25, %26, %cst_12 {dimension_numbers = #tpu.dot_dimension_numbers<[1], [0], [0], [1], [0, 0, 1, 1], [], []>} : vector<8x32xf32>, vector<32x32xf32>, vector<8x32xf32> -> vector<8x32xf32>
    %28 = tpu.iota {dimensions = array<i32: 0>} : vector<8x8xi32>
    %29 = tpu.iota {dimensions = array<i32: 1>} : vector<8x8xi32>
    %30 = arith.cmpi sge, %28, %29 : vector<8x8xi32>
    %31 = vector.shape_cast %30 : vector<8x8xi1> to vector<1x8x8xi1>
    %32 = vector.shape_cast %27 : vector<8x32xf32> to vector<1x8x32xf32>
    %cst_13 = arith.constant 0.176776692 : f32
    %33 = vector.broadcast %cst_13 : f32 to vector<8x32xf32>
    %34 = arith.mulf %27, %33 : vector<8x32xf32>
    %35 = vector.shape_cast %34 : vector<8x32xf32> to vector<1x8x32xf32>
    %c0_14 = arith.constant 0 : index
    %c0_15 = arith.constant 0 : index
    %36 = vector.load %arg5[%c0_14, %c0_15] : memref<32x32xf32, #tpu.memory_space<vmem>>, vector<32x32xf32>
    %cst_16 = arith.constant 0.000000e+00 : f32
    %37 = vector.broadcast %cst_16 : f32 to vector<8x32xf32>
    %c0_17 = arith.constant 0 : index
    %c0_18 = arith.constant 0 : index
    %38 = vector.load %arg6[%c0_17, %c0_18] : memref<1x32xf32, #tpu.memory_space<vmem>>, vector<1x32xf32>
    %39 = vector.broadcast %38 : vector<1x32xf32> to vector<8x32xf32>
    %40 = arith.addf %37, %39 : vector<8x32xf32>
    %41 = vector.extract_strided_slice %32 {offsets = [0, 0, 0], sizes = [1, 8, 8], strides = [1, 1, 1]} : vector<1x8x32xf32> to vector<1x8x8xf32>
    %42 = vector.extract_strided_slice %35 {offsets = [0, 0, 0], sizes = [1, 8, 8], strides = [1, 1, 1]} : vector<1x8x32xf32> to vector<1x8x8xf32>
    "tpu.trace_start"() <{level = 10 : i32, message = "bqd,bkd->bqk"}> : () -> ()
    %cst_19 = arith.constant dense<0.000000e+00> : vector<1x8x8xf32>
    %43 = tpu.matmul %42, %41, %cst_19 {dimension_numbers = #tpu.dot_dimension_numbers<[2], [2], [1], [1], [0, 0, 0, 1, 1, 1], [0], [0]>} : vector<1x8x8xf32>, vector<1x8x8xf32>, vector<1x8x8xf32> -> vector<1x8x8xf32>
    %cst_20 = arith.constant -1.000000e+30 : f32
    "tpu.trace_stop"() : () -> ()
    %44 = vector.broadcast %cst_20 : f32 to vector<1x8x8xf32>
    %45 = arith.select %31, %43, %44 : vector<1x8x8xi1>, vector<1x8x8xf32>
    %cst_21 = arith.constant dense<0xFF800000> : vector<1x8xf32>
    %46 = vector.multi_reduction <maximumf>, %45, %cst_21 [2] : vector<1x8x8xf32> to vector<1x8xf32>
    %47 = vector.shape_cast %46 : vector<1x8xf32> to vector<1x8x1xf32>
    %48 = vector.broadcast %47 : vector<1x8x1xf32> to vector<1x8x8xf32>
    %49 = arith.subf %45, %48 : vector<1x8x8xf32>
    %50 = math.exp %49 : vector<1x8x8xf32>
    %cst_22 = arith.constant dense<0.000000e+00> : vector<1x8xf32>
    %51 = vector.multi_reduction <add>, %50, %cst_22 [2] : vector<1x8x8xf32> to vector<1x8xf32>
    %52 = vector.shape_cast %51 : vector<1x8xf32> to vector<1x8x1xf32>
    %53 = tpu.reciprocal %52 {approx = true} : vector<1x8x1xf32> -> vector<1x8x1xf32>
    %54 = vector.broadcast %53 : vector<1x8x1xf32> to vector<1x8x8xf32>
    %55 = arith.mulf %50, %54 : vector<1x8x8xf32>
    "tpu.trace_start"() <{level = 10 : i32, message = "bqk,bkd->bqd"}> : () -> ()
    %cst_23 = arith.constant dense<0.000000e+00> : vector<1x8x8xf32>
    %56 = tpu.matmul %55, %41, %cst_23 {dimension_numbers = #tpu.dot_dimension_numbers<[2], [1], [1], [2], [0, 0, 0, 1, 1, 2], [0], [0]>} : vector<1x8x8xf32>, vector<1x8x8xf32>, vector<1x8x8xf32> -> vector<1x8x8xf32>
    "tpu.trace_stop"() : () -> ()
    %57 = vector.shape_cast %56 : vector<1x8x8xf32> to vector<8x8xf32>
    %58 = vector.extract_strided_slice %36 {offsets = [0, 0], sizes = [8, 32], strides = [1, 1]} : vector<32x32xf32> to vector<8x32xf32>
    %cst_24 = arith.constant dense<0.000000e+00> : vector<8x32xf32>
    %59 = tpu.matmul %57, %58, %cst_24 {dimension_numbers = #tpu.dot_dimension_numbers<[1], [0], [0], [1], [0, 0, 1, 1], [], []>} : vector<8x8xf32>, vector<8x32xf32>, vector<8x32xf32> -> vector<8x32xf32>
    %60 = arith.addf %40, %59 : vector<8x32xf32>
    %61 = vector.extract_strided_slice %32 {offsets = [0, 0, 8], sizes = [1, 8, 8], strides = [1, 1, 1]} : vector<1x8x32xf32> to vector<1x8x8xf32>
    %62 = vector.extract_strided_slice %35 {offsets = [0, 0, 8], sizes = [1, 8, 8], strides = [1, 1, 1]} : vector<1x8x32xf32> to vector<1x8x8xf32>
    "tpu.trace_start"() <{level = 10 : i32, message = "bqd,bkd->bqk"}> : () -> ()
    %cst_25 = arith.constant dense<0.000000e+00> : vector<1x8x8xf32>
    %63 = tpu.matmul %62, %61, %cst_25 {dimension_numbers = #tpu.dot_dimension_numbers<[2], [2], [1], [1], [0, 0, 0, 1, 1, 1], [0], [0]>} : vector<1x8x8xf32>, vector<1x8x8xf32>, vector<1x8x8xf32> -> vector<1x8x8xf32>
    %cst_26 = arith.constant -1.000000e+30 : f32
    "tpu.trace_stop"() : () -> ()
    %64 = vector.broadcast %cst_26 : f32 to vector<1x8x8xf32>
    %65 = arith.select %31, %63, %64 : vector<1x8x8xi1>, vector<1x8x8xf32>
    %cst_27 = arith.constant dense<0xFF800000> : vector<1x8xf32>
    %66 = vector.multi_reduction <maximumf>, %65, %cst_27 [2] : vector<1x8x8xf32> to vector<1x8xf32>
    %67 = vector.shape_cast %66 : vector<1x8xf32> to vector<1x8x1xf32>
    %68 = vector.broadcast %67 : vector<1x8x1xf32> to vector<1x8x8xf32>
    %69 = arith.subf %65, %68 : vector<1x8x8xf32>
    %70 = math.exp %69 : vector<1x8x8xf32>
    %cst_28 = arith.constant dense<0.000000e+00> : vector<1x8xf32>
    %71 = vector.multi_reduction <add>, %70, %cst_28 [2] : vector<1x8x8xf32> to vector<1x8xf32>
    %72 = vector.shape_cast %71 : vector<1x8xf32> to vector<1x8x1xf32>
    %73 = tpu.reciprocal %72 {approx = true} : vector<1x8x1xf32> -> vector<1x8x1xf32>
    %74 = vector.broadcast %73 : vector<1x8x1xf32> to vector<1x8x8xf32>
    %75 = arith.mulf %70, %74 : vector<1x8x8xf32>
    "tpu.trace_start"() <{level = 10 : i32, message = "bqk,bkd->bqd"}> : () -> ()
    %cst_29 = arith.constant dense<0.000000e+00> : vector<1x8x8xf32>
    %76 = tpu.matmul %75, %61, %cst_29 {dimension_numbers = #tpu.dot_dimension_numbers<[2], [1], [1], [2], [0, 0, 0, 1, 1, 2], [0], [0]>} : vector<1x8x8xf32>, vector<1x8x8xf32>, vector<1x8x8xf32> -> vector<1x8x8xf32>
    "tpu.trace_stop"() : () -> ()
    %77 = vector.shape_cast %76 : vector<1x8x8xf32> to vector<8x8xf32>
    %78 = vector.extract_strided_slice %36 {offsets = [8, 0], sizes = [8, 32], strides = [1, 1]} : vector<32x32xf32> to vector<8x32xf32>
    %cst_30 = arith.constant dense<0.000000e+00> : vector<8x32xf32>
    %79 = tpu.matmul %77, %78, %cst_30 {dimension_numbers = #tpu.dot_dimension_numbers<[1], [0], [0], [1], [0, 0, 1, 1], [], []>} : vector<8x8xf32>, vector<8x32xf32>, vector<8x32xf32> -> vector<8x32xf32>
    %80 = arith.addf %60, %79 : vector<8x32xf32>
    %81 = vector.extract_strided_slice %32 {offsets = [0, 0, 16], sizes = [1, 8, 8], strides = [1, 1, 1]} : vector<1x8x32xf32> to vector<1x8x8xf32>
    %82 = vector.extract_strided_slice %35 {offsets = [0, 0, 16], sizes = [1, 8, 8], strides = [1, 1, 1]} : vector<1x8x32xf32> to vector<1x8x8xf32>
    "tpu.trace_start"() <{level = 10 : i32, message = "bqd,bkd->bqk"}> : () -> ()
    %cst_31 = arith.constant dense<0.000000e+00> : vector<1x8x8xf32>
    %83 = tpu.matmul %82, %81, %cst_31 {dimension_numbers = #tpu.dot_dimension_numbers<[2], [2], [1], [1], [0, 0, 0, 1, 1, 1], [0], [0]>} : vector<1x8x8xf32>, vector<1x8x8xf32>, vector<1x8x8xf32> -> vector<1x8x8xf32>
    %cst_32 = arith.constant -1.000000e+30 : f32
    "tpu.trace_stop"() : () -> ()
    %84 = vector.broadcast %cst_32 : f32 to vector<1x8x8xf32>
    %85 = arith.select %31, %83, %84 : vector<1x8x8xi1>, vector<1x8x8xf32>
    %cst_33 = arith.constant dense<0xFF800000> : vector<1x8xf32>
    %86 = vector.multi_reduction <maximumf>, %85, %cst_33 [2] : vector<1x8x8xf32> to vector<1x8xf32>
    %87 = vector.shape_cast %86 : vector<1x8xf32> to vector<1x8x1xf32>
    %88 = vector.broadcast %87 : vector<1x8x1xf32> to vector<1x8x8xf32>
    %89 = arith.subf %85, %88 : vector<1x8x8xf32>
    %90 = math.exp %89 : vector<1x8x8xf32>
    %cst_34 = arith.constant dense<0.000000e+00> : vector<1x8xf32>
    %91 = vector.multi_reduction <add>, %90, %cst_34 [2] : vector<1x8x8xf32> to vector<1x8xf32>
    %92 = vector.shape_cast %91 : vector<1x8xf32> to vector<1x8x1xf32>
    %93 = tpu.reciprocal %92 {approx = true} : vector<1x8x1xf32> -> vector<1x8x1xf32>
    %94 = vector.broadcast %93 : vector<1x8x1xf32> to vector<1x8x8xf32>
    %95 = arith.mulf %90, %94 : vector<1x8x8xf32>
    "tpu.trace_start"() <{level = 10 : i32, message = "bqk,bkd->bqd"}> : () -> ()
    %cst_35 = arith.constant dense<0.000000e+00> : vector<1x8x8xf32>
    %96 = tpu.matmul %95, %81, %cst_35 {dimension_numbers = #tpu.dot_dimension_numbers<[2], [1], [1], [2], [0, 0, 0, 1, 1, 2], [0], [0]>} : vector<1x8x8xf32>, vector<1x8x8xf32>, vector<1x8x8xf32> -> vector<1x8x8xf32>
    "tpu.trace_stop"() : () -> ()
    %97 = vector.shape_cast %96 : vector<1x8x8xf32> to vector<8x8xf32>
    %98 = vector.extract_strided_slice %36 {offsets = [16, 0], sizes = [8, 32], strides = [1, 1]} : vector<32x32xf32> to vector<8x32xf32>
    %cst_36 = arith.constant dense<0.000000e+00> : vector<8x32xf32>
    %99 = tpu.matmul %97, %98, %cst_36 {dimension_numbers = #tpu.dot_dimension_numbers<[1], [0], [0], [1], [0, 0, 1, 1], [], []>} : vector<8x8xf32>, vector<8x32xf32>, vector<8x32xf32> -> vector<8x32xf32>
    %100 = arith.addf %80, %99 : vector<8x32xf32>
    %101 = vector.extract_strided_slice %32 {offsets = [0, 0, 24], sizes = [1, 8, 8], strides = [1, 1, 1]} : vector<1x8x32xf32> to vector<1x8x8xf32>
    %102 = vector.extract_strided_slice %35 {offsets = [0, 0, 24], sizes = [1, 8, 8], strides = [1, 1, 1]} : vector<1x8x32xf32> to vector<1x8x8xf32>
    "tpu.trace_start"() <{level = 10 : i32, message = "bqd,bkd->bqk"}> : () -> ()
    %cst_37 = arith.constant dense<0.000000e+00> : vector<1x8x8xf32>
    %103 = tpu.matmul %102, %101, %cst_37 {dimension_numbers = #tpu.dot_dimension_numbers<[2], [2], [1], [1], [0, 0, 0, 1, 1, 1], [0], [0]>} : vector<1x8x8xf32>, vector<1x8x8xf32>, vector<1x8x8xf32> -> vector<1x8x8xf32>
    %cst_38 = arith.constant -1.000000e+30 : f32
    "tpu.trace_stop"() : () -> ()
    %104 = vector.broadcast %cst_38 : f32 to vector<1x8x8xf32>
    %105 = arith.select %31, %103, %104 : vector<1x8x8xi1>, vector<1x8x8xf32>
    %cst_39 = arith.constant dense<0xFF800000> : vector<1x8xf32>
    %106 = vector.multi_reduction <maximumf>, %105, %cst_39 [2] : vector<1x8x8xf32> to vector<1x8xf32>
    %107 = vector.shape_cast %106 : vector<1x8xf32> to vector<1x8x1xf32>
    %108 = vector.broadcast %107 : vector<1x8x1xf32> to vector<1x8x8xf32>
    %109 = arith.subf %105, %108 : vector<1x8x8xf32>
    %110 = math.exp %109 : vector<1x8x8xf32>
    %cst_40 = arith.constant dense<0.000000e+00> : vector<1x8xf32>
    %111 = vector.multi_reduction <add>, %110, %cst_40 [2] : vector<1x8x8xf32> to vector<1x8xf32>
    %112 = vector.shape_cast %111 : vector<1x8xf32> to vector<1x8x1xf32>
    %113 = tpu.reciprocal %112 {approx = true} : vector<1x8x1xf32> -> vector<1x8x1xf32>
    %114 = vector.broadcast %113 : vector<1x8x1xf32> to vector<1x8x8xf32>
    %115 = arith.mulf %110, %114 : vector<1x8x8xf32>
    "tpu.trace_start"() <{level = 10 : i32, message = "bqk,bkd->bqd"}> : () -> ()
    %cst_41 = arith.constant dense<0.000000e+00> : vector<1x8x8xf32>
    %116 = tpu.matmul %115, %101, %cst_41 {dimension_numbers = #tpu.dot_dimension_numbers<[2], [1], [1], [2], [0, 0, 0, 1, 1, 2], [0], [0]>} : vector<1x8x8xf32>, vector<1x8x8xf32>, vector<1x8x8xf32> -> vector<1x8x8xf32>
    "tpu.trace_stop"() : () -> ()
    %117 = vector.shape_cast %116 : vector<1x8x8xf32> to vector<8x8xf32>
    %118 = vector.extract_strided_slice %36 {offsets = [24, 0], sizes = [8, 32], strides = [1, 1]} : vector<32x32xf32> to vector<8x32xf32>
    %cst_42 = arith.constant dense<0.000000e+00> : vector<8x32xf32>
    %119 = tpu.matmul %117, %118, %cst_42 {dimension_numbers = #tpu.dot_dimension_numbers<[1], [0], [0], [1], [0, 0, 1, 1], [], []>} : vector<8x8xf32>, vector<8x32xf32>, vector<8x32xf32> -> vector<8x32xf32>
    %120 = arith.addf %100, %119 : vector<8x32xf32>
    %121 = arith.addf %1, %120 : vector<8x32xf32>
    %c0_43 = arith.constant 0 : index
    %c0_44 = arith.constant 0 : index
    %122 = vector.load %arg7[%c0_43, %c0_44] : memref<1x32xf32, #tpu.memory_space<vmem>>, vector<1x32xf32>
    %c0_45 = arith.constant 0 : index
    %c0_46 = arith.constant 0 : index
    %123 = vector.load %arg8[%c0_45, %c0_46] : memref<1x32xf32, #tpu.memory_space<vmem>>, vector<1x32xf32>
    %cst_47 = arith.constant dense<0.000000e+00> : vector<8xf32>
    %124 = vector.multi_reduction <add>, %121, %cst_47 [1] : vector<8x32xf32> to vector<8xf32>
    %125 = vector.shape_cast %124 : vector<8xf32> to vector<8x1xf32>
    %cst_48 = arith.constant 3.200000e+01 : f32
    %126 = vector.broadcast %cst_48 : f32 to vector<8x1xf32>
    %127 = arith.divf %125, %126 : vector<8x1xf32>
    %128 = vector.broadcast %127 : vector<8x1xf32> to vector<8x32xf32>
    %129 = arith.subf %121, %128 : vector<8x32xf32>
    %130 = arith.mulf %129, %129 : vector<8x32xf32>
    %cst_49 = arith.constant dense<0.000000e+00> : vector<8xf32>
    %131 = vector.multi_reduction <add>, %130, %cst_49 [1] : vector<8x32xf32> to vector<8xf32>
    %132 = vector.shape_cast %131 : vector<8xf32> to vector<8x1xf32>
    %cst_50 = arith.constant 3.200000e+01 : f32
    %133 = vector.broadcast %cst_50 : f32 to vector<8x1xf32>
    %134 = arith.divf %132, %133 : vector<8x1xf32>
    %135 = vector.broadcast %127 : vector<8x1xf32> to vector<8x32xf32>
    %136 = arith.subf %121, %135 : vector<8x32xf32>
    %cst_51 = arith.constant 9.99999974E-6 : f32
    %137 = vector.broadcast %cst_51 : f32 to vector<8x1xf32>
    %138 = arith.addf %134, %137 : vector<8x1xf32>
    %139 = math.rsqrt %138 : vector<8x1xf32>
    %140 = vector.broadcast %139 : vector<8x1xf32> to vector<8x32xf32>
    %141 = arith.mulf %136, %140 : vector<8x32xf32>
    %142 = vector.broadcast %122 : vector<1x32xf32> to vector<8x32xf32>
    %143 = arith.mulf %141, %142 : vector<8x32xf32>
    %144 = vector.broadcast %123 : vector<1x32xf32> to vector<8x32xf32>
    %145 = arith.addf %143, %144 : vector<8x32xf32>
    %c0_52 = arith.constant 0 : index
    %c0_53 = arith.constant 0 : index
    %146 = vector.load %arg9[%c0_52, %c0_53] : memref<32x128xf32, #tpu.memory_space<vmem>>, vector<32x128xf32>
    %cst_54 = arith.constant dense<0.000000e+00> : vector<8x128xf32>
    %147 = tpu.matmul %145, %146, %cst_54 {dimension_numbers = #tpu.dot_dimension_numbers<[1], [0], [0], [1], [0, 0, 1, 1], [], []>} : vector<8x32xf32>, vector<32x128xf32>, vector<8x128xf32> -> vector<8x128xf32>
    %c0_55 = arith.constant 0 : index
    %c0_56 = arith.constant 0 : index
    %148 = vector.load %arg10[%c0_55, %c0_56] : memref<1x128xf32, #tpu.memory_space<vmem>>, vector<1x128xf32>
    %149 = vector.broadcast %148 : vector<1x128xf32> to vector<8x128xf32>
    %150 = arith.addf %147, %149 : vector<8x128xf32>
    %cst_57 = arith.constant 0.000000e+00 : f32
    %151 = vector.broadcast %cst_57 : f32 to vector<8x128xf32>
    %152 = arith.maximumf %150, %151 : vector<8x128xf32>
    %c0_58 = arith.constant 0 : index
    %c0_59 = arith.constant 0 : index
    %153 = vector.load %arg11[%c0_58, %c0_59] : memref<128x32xf32, #tpu.memory_space<vmem>>, vector<128x32xf32>
    %cst_60 = arith.constant dense<0.000000e+00> : vector<8x32xf32>
    %154 = tpu.matmul %152, %153, %cst_60 {dimension_numbers = #tpu.dot_dimension_numbers<[1], [0], [0], [1], [0, 0, 1, 1], [], []>} : vector<8x128xf32>, vector<128x32xf32>, vector<8x32xf32> -> vector<8x32xf32>
    %c0_61 = arith.constant 0 : index
    %c0_62 = arith.constant 0 : index
    %155 = vector.load %arg12[%c0_61, %c0_62] : memref<1x32xf32, #tpu.memory_space<vmem>>, vector<1x32xf32>
    %156 = vector.broadcast %155 : vector<1x32xf32> to vector<8x32xf32>
    %157 = arith.addf %154, %156 : vector<8x32xf32>
    %158 = arith.addf %121, %157 : vector<8x32xf32>
    %159 = vector.shape_cast %158 : vector<8x32xf32> to vector<1x8x32xf32>
    %c0_63 = arith.constant 0 : index
    %c0_64 = arith.constant 0 : index
    %c0_65 = arith.constant 0 : index
    %160 = vector.load %arg13[%c0_63, %c0_64, %c0_65] : memref<1x8x32xf32, #tpu.memory_space<vmem>>, vector<1x8x32xf32>
    tpu.vector_store %arg13[%c0_63, %c0_64, %c0_65], %159 {strides = array<i32>} : memref<1x8x32xf32, #tpu.memory_space<vmem>>, vector<1x8x32xf32>,
    return
  }
  func.func @transform_0(%arg0: i32) -> (i32, i32, i32) {
    %c0_i32 = arith.constant 0 : i32
    %c0_i32_0 = arith.constant 0 : i32
    %c0_i32_1 = arith.constant 0 : i32
    return %arg0, %c0_i32, %c0_i32_0 : i32, i32, i32
  }
  func.func @transform_1(%arg0: i32) -> (i32, i32) {
    %c0_i32 = arith.constant 0 : i32
    %c0_i32_0 = arith.constant 0 : i32
    %c0_i32_1 = arith.constant 0 : i32
    return %c0_i32, %c0_i32_0 : i32, i32
  }
  func.func @transform_2(%arg0: i32) -> (i32, i32) {
    %c0_i32 = arith.constant 0 : i32
    %c0_i32_0 = arith.constant 0 : i32
    %c0_i32_1 = arith.constant 0 : i32
    return %c0_i32, %c0_i32_0 : i32, i32
  }
  func.func @transform_3(%arg0: i32) -> (i32, i32) {
    %c0_i32 = arith.constant 0 : i32
    %c0_i32_0 = arith.constant 0 : i32
    %c0_i32_1 = arith.constant 0 : i32
    return %c0_i32, %c0_i32_0 : i32, i32
  }
  func.func @transform_4(%arg0: i32) -> (i32, i32) {
    %c0_i32 = arith.constant 0 : i32
    %c0_i32_0 = arith.constant 0 : i32
    %c0_i32_1 = arith.constant 0 : i32
    return %c0_i32, %c0_i32_0 : i32, i32
  }
  func.func @transform_5(%arg0: i32) -> (i32, i32) {
    %c0_i32 = arith.constant 0 : i32
    %c0_i32_0 = arith.constant 0 : i32
    %c0_i32_1 = arith.constant 0 : i32
    return %c0_i32, %c0_i32_0 : i32, i32
  }
  func.func @transform_6(%arg0: i32) -> (i32, i32) {
    %c0_i32 = arith.constant 0 : i32
    %c0_i32_0 = arith.constant 0 : i32
    %c0_i32_1 = arith.constant 0 : i32
    return %c0_i32, %c0_i32_0 : i32, i32
  }
  func.func @transform_7(%arg0: i32) -> (i32, i32) {
    %c0_i32 = arith.constant 0 : i32
    %c0_i32_0 = arith.constant 0 : i32
    %c0_i32_1 = arith.constant 0 : i32
    return %c0_i32, %c0_i32_0 : i32, i32
  }
  func.func @transform_8(%arg0: i32) -> (i32, i32) {
    %c0_i32 = arith.constant 0 : i32
    %c0_i32_0 = arith.constant 0 : i32
    %c0_i32_1 = arith.constant 0 : i32
    return %c0_i32, %c0_i32_0 : i32, i32
  }
  func.func @transform_9(%arg0: i32) -> (i32, i32) {
    %c0_i32 = arith.constant 0 : i32
    %c0_i32_0 = arith.constant 0 : i32
    %c0_i32_1 = arith.constant 0 : i32
    return %c0_i32, %c0_i32_0 : i32, i32
  }
  func.func @transform_10(%arg0: i32) -> (i32, i32) {
    %c0_i32 = arith.constant 0 : i32
    %c0_i32_0 = arith.constant 0 : i32
    %c0_i32_1 = arith.constant 0 : i32
    return %c0_i32, %c0_i32_0 : i32, i32
  }
  func.func @transform_11(%arg0: i32) -> (i32, i32) {
    %c0_i32 = arith.constant 0 : i32
    %c0_i32_0 = arith.constant 0 : i32
    %c0_i32_1 = arith.constant 0 : i32
    return %c0_i32, %c0_i32_0 : i32, i32
  }
  func.func @transform_12(%arg0: i32) -> (i32, i32, i32) {
    %c0_i32 = arith.constant 0 : i32
    %c0_i32_0 = arith.constant 0 : i32
    %c0_i32_1 = arith.constant 0 : i32
    return %arg0, %c0_i32, %c0_i32_0 : i32, i32, i32
  }
}

module attributes {stable_mosaic.version = 11 : i64} {
  func.func @block_kernel(%arg0: i32, %arg1: memref<1x8x32xf32, #tpu.memory_space<vmem>>, %arg2: memref<1x32xf32, #tpu.memory_space<vmem>>, %arg3: memref<1x32xf32, #tpu.memory_space<vmem>>, %arg4: memref<32x32xf32, #tpu.memory_space<vmem>>, %arg5: memref<32x32xf32, #tpu.memory_space<vmem>>, %arg6: memref<1x32xf32, #tpu.memory_space<vmem>>, %arg7: memref<1x32xf32, #tpu.memory_space<vmem>>, %arg8: memref<1x32xf32, #tpu.memory_space<vmem>>, %arg9: memref<32x128xf32, #tpu.memory_space<vmem>>, %arg10: memref<1x128xf32, #tpu.memory_space<vmem>>, %arg11: memref<128x32xf32, #tpu.memory_space<vmem>>, %arg12: memref<1x32xf32, #tpu.memory_space<vmem>>, %arg13: memref<1x8x32xf32, #tpu.memory_space<vmem>>) attributes {dimension_semantics = [#tpu.dimension_semantics<parallel>], iteration_bounds = array<i64: 2>, scalar_prefetch = 0 : i64, scratch_operands = 0 : i64, tpu.core_type = #tpu.core_type<tc>, window_params = [{transform_indices = @transform_0, window_bounds = array<i64: 1, 8, 32>}, {pipeline_mode = #tpu.pipeline_mode<synchronous>, transform_indices = @transform_1, window_bounds = array<i64: 1, 32>}, {pipeline_mode = #tpu.pipeline_mode<synchronous>, transform_indices = @transform_2, window_bounds = array<i64: 1, 32>}, {pipeline_mode = #tpu.pipeline_mode<synchronous>, transform_indices = @transform_3, window_bounds = array<i64: 32, 32>}, {pipeline_mode = #tpu.pipeline_mode<synchronous>, transform_indices = @transform_4, window_bounds = array<i64: 32, 32>}, {pipeline_mode = #tpu.pipeline_mode<synchronous>, transform_indices = @transform_5, window_bounds = array<i64: 1, 32>}, {pipeline_mode = #tpu.pipeline_mode<synchronous>, transform_indices = @transform_6, window_bounds = array<i64: 1, 32>}, {pipeline_mode = #tpu.pipeline_mode<synchronous>, transform_indices = @transform_7, window_bounds = array<i64: 1, 32>}, {pipeline_mode = #tpu.pipeline_mode<synchronous>, transform_indices = @transform_8, window_bounds = array<i64: 32, 128>}, {pipeline_mode = #tpu.pipeline_mode<synchronous>, transform_indices = @transform_9, window_bounds = array<i64: 1, 128>}, {pipeline_mode = #tpu.pipeline_mode<synchronous>, transform_indices = @transform_10, window_bounds = array<i64: 128, 32>}, {pipeline_mode = #tpu.pipeline_mode<synchronous>, transform_indices = @transform_11, window_bounds = array<i64: 1, 32>}, {transform_indices = @transform_12, window_bounds = array<i64: 1, 8, 32>}]} {
    %c0 = arith.constant 0 : index
    %c0_0 = arith.constant 0 : index
    %c0_1 = arith.constant 0 : index
    %0 = vector.load %arg1[%c0, %c0_0, %c0_1] : memref<1x8x32xf32, #tpu.memory_space<vmem>>, vector<1x8x32xf32>
    %1 = vector.shape_cast %0 : vector<1x8x32xf32> to vector<8x32xf32>
    %c0_2 = arith.constant 0 : index
    %c0_3 = arith.constant 0 : index
    %2 = vector.load %arg2[%c0_2, %c0_3] : memref<1x32xf32, #tpu.memory_space<vmem>>, vector<1x32xf32>
    %c0_4 = arith.constant 0 : index
    %c0_5 = arith.constant 0 : index
    %3 = vector.load %arg3[%c0_4, %c0_5] : memref<1x32xf32, #tpu.memory_space<vmem>>, vector<1x32xf32>
    %cst = arith.constant dense<0.000000e+00> : vector<8xf32>
    %4 = vector.multi_reduction <add>, %1, %cst [1] : vector<8x32xf32> to vector<8xf32>
    %5 = vector.shape_cast %4 : vector<8xf32> to vector<8x1xf32>
    %cst_6 = arith.constant 3.200000e+01 : f32
    %6 = vector.broadcast %cst_6 : f32 to vector<8x1xf32>
    %7 = arith.divf %5, %6 : vector<8x1xf32>
    %8 = vector.broadcast %7 : vector<8x1xf32> to vector<8x32xf32>
    %9 = arith.subf %1, %8 : vector<8x32xf32>
    %10 = arith.mulf %9, %9 : vector<8x32xf32>
    %cst_7 = arith.constant dense<0.000000e+00> : vector<8xf32>
    %11 = vector.multi_reduction <add>, %10, %cst_7 [1] : vector<8x32xf32> to vector<8xf32>
    %12 = vector.shape_cast %11 : vector<8xf32> to vector<8x1xf32>
    %cst_8 = arith.constant 3.200000e+01 : f32
    %13 = vector.broadcast %cst_8 : f32 to vector<8x1xf32>
    %14 = arith.divf %12, %13 : vector<8x1xf32>
    %15 = vector.broadcast %7 : vector<8x1xf32> to vector<8x32xf32>
    %16 = arith.subf %1, %15 : vector<8x32xf32>
    %cst_9 = arith.constant 9.99999974E-6 : f32
    %17 = vector.broadcast %cst_9 : f32 to vector<8x1xf32>
    %18 = arith.addf %14, %17 : vector<8x1xf32>
    %19 = math.rsqrt %18 : vector<8x1xf32>
    %20 = vector.broadcast %19 : vector<8x1xf32> to vector<8x32xf32>
    %21 = arith.mulf %16, %20 : vector<8x32xf32>
    %22 = vector.broadcast %2 : vector<1x32xf32> to vector<8x32xf32>
    %23 = arith.mulf %21, %22 : vector<8x32xf32>
    %24 = vector.broadcast %3 : vector<1x32xf32> to vector<8x32xf32>
    %25 = arith.addf %23, %24 : vector<8x32xf32>
    %c0_10 = arith.constant 0 : index
    %c0_11 = arith.constant 0 : index
    %26 = vector.load %arg4[%c0_10, %c0_11] : memref<32x32xf32, #tpu.memory_space<vmem>>, vector<32x32xf32>
    %cst_12 = arith.constant dense<0.000000e+00> : vector<8x32xf32>
    %27 = tpu.matmul %25, %26, %cst_12 {dimension_numbers = #tpu.dot_dimension_numbers<[1], [0], [0], [1], [0, 0, 1, 1], [], []>} : vector<8x32xf32>, vector<32x32xf32>, vector<8x32xf32> -> vector<8x32xf32>
    %28 = tpu.iota {dimensions = array<i32: 0>} : vector<8x8xi32>
    %29 = tpu.iota {dimensions = array<i32: 1>} : vector<8x8xi32>
    %30 = arith.cmpi sge, %28, %29 : vector<8x8xi32>
    %31 = vector.shape_cast %30 : vector<8x8xi1> to vector<1x8x8xi1>
    %32 = vector.shape_cast %27 : vector<8x32xf32> to vector<1x8x32xf32>
    %cst_13 = arith.constant 0.176776692 : f32
    %33 = vector.broadcast %cst_13 : f32 to vector<8x32xf32>
    %34 = arith.mulf %27, %33 : vector<8x32xf32>
    %35 = vector.shape_cast %34 : vector<8x32xf32> to vector<1x8x32xf32>
    %c0_14 = arith.constant 0 : index
    %c0_15 = arith.constant 0 : index
    %36 = vector.load %arg5[%c0_14, %c0_15] : memref<32x32xf32, #tpu.memory_space<vmem>>, vector<32x32xf32>
    %cst_16 = arith.constant 0.000000e+00 : f32
    %37 = vector.broadcast %cst_16 : f32 to vector<8x32xf32>
    %c0_17 = arith.constant 0 : index
    %c0_18 = arith.constant 0 : index
    %38 = vector.load %arg6[%c0_17, %c0_18] : memref<1x32xf32, #tpu.memory_space<vmem>>, vector<1x32xf32>
    %39 = vector.broadcast %38 : vector<1x32xf32> to vector<8x32xf32>
    %40 = arith.addf %37, %39 : vector<8x32xf32>
    %41 = vector.extract_strided_slice %32 {offsets = [0, 0, 0], sizes = [1, 8, 8], strides = [1, 1, 1]} : vector<1x8x32xf32> to vector<1x8x8xf32>
    %42 = vector.extract_strided_slice %35 {offsets = [0, 0, 0], sizes = [1, 8, 8], strides = [1, 1, 1]} : vector<1x8x32xf32> to vector<1x8x8xf32>
    "tpu.trace_start"() <{level = 10 : i32, message = "bqd,bkd->bqk"}> : () -> ()
    %cst_19 = arith.constant dense<0.000000e+00> : vector<1x8x8xf32>
    %43 = tpu.matmul %42, %41, %cst_19 {dimension_numbers = #tpu.dot_dimension_numbers<[2], [2], [1], [1], [0, 0, 0, 1, 1, 1], [0], [0]>} : vector<1x8x8xf32>, vector<1x8x8xf32>, vector<1x8x8xf32> -> vector<1x8x8xf32>
    %cst_20 = arith.constant -1.000000e+30 : f32
    "tpu.trace_stop"() : () -> ()
    %44 = vector.broadcast %cst_20 : f32 to vector<1x8x8xf32>
    %45 = arith.select %31, %43, %44 : vector<1x8x8xi1>, vector<1x8x8xf32>
    %cst_21 = arith.constant dense<0xFF800000> : vector<1x8xf32>
    %46 = vector.multi_reduction <maximumf>, %45, %cst_21 [2] : vector<1x8x8xf32> to vector<1x8xf32>
    %47 = vector.shape_cast %46 : vector<1x8xf32> to vector<1x8x1xf32>
    %48 = vector.broadcast %47 : vector<1x8x1xf32> to vector<1x8x8xf32>
    %49 = arith.subf %45, %48 : vector<1x8x8xf32>
    %50 = math.exp %49 : vector<1x8x8xf32>
    %cst_22 = arith.constant dense<0.000000e+00> : vector<1x8xf32>
    %51 = vector.multi_reduction <add>, %50, %cst_22 [2] : vector<1x8x8xf32> to vector<1x8xf32>
    %52 = vector.shape_cast %51 : vector<1x8xf32> to vector<1x8x1xf32>
    %53 = tpu.reciprocal %52 {approx = true} : vector<1x8x1xf32> -> vector<1x8x1xf32>
    %54 = vector.broadcast %53 : vector<1x8x1xf32> to vector<1x8x8xf32>
    %55 = arith.mulf %50, %54 : vector<1x8x8xf32>
    "tpu.trace_start"() <{level = 10 : i32, message = "bqk,bkd->bqd"}> : () -> ()
    %cst_23 = arith.constant dense<0.000000e+00> : vector<1x8x8xf32>
    %56 = tpu.matmul %55, %41, %cst_23 {dimension_numbers = #tpu.dot_dimension_numbers<[2], [1], [1], [2], [0, 0, 0, 1, 1, 2], [0], [0]>} : vector<1x8x8xf32>, vector<1x8x8xf32>, vector<1x8x8xf32> -> vector<1x8x8xf32>
    "tpu.trace_stop"() : () -> ()
    %57 = vector.shape_cast %56 : vector<1x8x8xf32> to vector<8x8xf32>
    %58 = vector.extract_strided_slice %36 {offsets = [0, 0], sizes = [8, 32], strides = [1, 1]} : vector<32x32xf32> to vector<8x32xf32>
    %cst_24 = arith.constant dense<0.000000e+00> : vector<8x32xf32>
    %59 = tpu.matmul %57, %58, %cst_24 {dimension_numbers = #tpu.dot_dimension_numbers<[1], [0], [0], [1], [0, 0, 1, 1], [], []>} : vector<8x8xf32>, vector<8x32xf32>, vector<8x32xf32> -> vector<8x32xf32>
    %60 = arith.addf %40, %59 : vector<8x32xf32>
    %61 = vector.extract_strided_slice %32 {offsets = [0, 0, 8], sizes = [1, 8, 8], strides = [1, 1, 1]} : vector<1x8x32xf32> to vector<1x8x8xf32>
    %62 = vector.extract_strided_slice %35 {offsets = [0, 0, 8], sizes = [1, 8, 8], strides = [1, 1, 1]} : vector<1x8x32xf32> to vector<1x8x8xf32>
    "tpu.trace_start"() <{level = 10 : i32, message = "bqd,bkd->bqk"}> : () -> ()
    %cst_25 = arith.constant dense<0.000000e+00> : vector<1x8x8xf32>
    %63 = tpu.matmul %62, %61, %cst_25 {dimension_numbers = #tpu.dot_dimension_numbers<[2], [2], [1], [1], [0, 0, 0, 1, 1, 1], [0], [0]>} : vector<1x8x8xf32>, vector<1x8x8xf32>, vector<1x8x8xf32> -> vector<1x8x8xf32>
    %cst_26 = arith.constant -1.000000e+30 : f32
    "tpu.trace_stop"() : () -> ()
    %64 = vector.broadcast %cst_26 : f32 to vector<1x8x8xf32>
    %65 = arith.select %31, %63, %64 : vector<1x8x8xi1>, vector<1x8x8xf32>
    %cst_27 = arith.constant dense<0xFF800000> : vector<1x8xf32>
    %66 = vector.multi_reduction <maximumf>, %65, %cst_27 [2] : vector<1x8x8xf32> to vector<1x8xf32>
    %67 = vector.shape_cast %66 : vector<1x8xf32> to vector<1x8x1xf32>
    %68 = vector.broadcast %67 : vector<1x8x1xf32> to vector<1x8x8xf32>
    %69 = arith.subf %65, %68 : vector<1x8x8xf32>
    %70 = math.exp %69 : vector<1x8x8xf32>
    %cst_28 = arith.constant dense<0.000000e+00> : vector<1x8xf32>
    %71 = vector.multi_reduction <add>, %70, %cst_28 [2] : vector<1x8x8xf32> to vector<1x8xf32>
    %72 = vector.shape_cast %71 : vector<1x8xf32> to vector<1x8x1xf32>
    %73 = tpu.reciprocal %72 {approx = true} : vector<1x8x1xf32> -> vector<1x8x1xf32>
    %74 = vector.broadcast %73 : vector<1x8x1xf32> to vector<1x8x8xf32>
    %75 = arith.mulf %70, %74 : vector<1x8x8xf32>
    "tpu.trace_start"() <{level = 10 : i32, message = "bqk,bkd->bqd"}> : () -> ()
    %cst_29 = arith.constant dense<0.000000e+00> : vector<1x8x8xf32>
    %76 = tpu.matmul %75, %61, %cst_29 {dimension_numbers = #tpu.dot_dimension_numbers<[2], [1], [1], [2], [0, 0, 0, 1, 1, 2], [0], [0]>} : vector<1x8x8xf32>, vector<1x8x8xf32>, vector<1x8x8xf32> -> vector<1x8x8xf32>
    "tpu.trace_stop"() : () -> ()
    %77 = vector.shape_cast %76 : vector<1x8x8xf32> to vector<8x8xf32>
    %78 = vector.extract_strided_slice %36 {offsets = [8, 0], sizes = [8, 32], strides = [1, 1]} : vector<32x32xf32> to vector<8x32xf32>
    %cst_30 = arith.constant dense<0.000000e+00> : vector<8x32xf32>
    %79 = tpu.matmul %77, %78, %cst_30 {dimension_numbers = #tpu.dot_dimension_numbers<[1], [0], [0], [1], [0, 0, 1, 1], [], []>} : vector<8x8xf32>, vector<8x32xf32>, vector<8x32xf32> -> vector<8x32xf32>
    %80 = arith.addf %60, %79 : vector<8x32xf32>
    %81 = vector.extract_strided_slice %32 {offsets = [0, 0, 16], sizes = [1, 8, 8], strides = [1, 1, 1]} : vector<1x8x32xf32> to vector<1x8x8xf32>
    %82 = vector.extract_strided_slice %35 {offsets = [0, 0, 16], sizes = [1, 8, 8], strides = [1, 1, 1]} : vector<1x8x32xf32> to vector<1x8x8xf32>
    "tpu.trace_start"() <{level = 10 : i32, message = "bqd,bkd->bqk"}> : () -> ()
    %cst_31 = arith.constant dense<0.000000e+00> : vector<1x8x8xf32>
    %83 = tpu.matmul %82, %81, %cst_31 {dimension_numbers = #tpu.dot_dimension_numbers<[2], [2], [1], [1], [0, 0, 0, 1, 1, 1], [0], [0]>} : vector<1x8x8xf32>, vector<1x8x8xf32>, vector<1x8x8xf32> -> vector<1x8x8xf32>
    %cst_32 = arith.constant -1.000000e+30 : f32
    "tpu.trace_stop"() : () -> ()
    %84 = vector.broadcast %cst_32 : f32 to vector<1x8x8xf32>
    %85 = arith.select %31, %83, %84 : vector<1x8x8xi1>, vector<1x8x8xf32>
    %cst_33 = arith.constant dense<0xFF800000> : vector<1x8xf32>
    %86 = vector.multi_reduction <maximumf>, %85, %cst_33 [2] : vector<1x8x8xf32> to vector<1x8xf32>
    %87 = vector.shape_cast %86 : vector<1x8xf32> to vector<1x8x1xf32>
    %88 = vector.broadcast %87 : vector<1x8x1xf32> to vector<1x8x8xf32>
    %89 = arith.subf %85, %88 : vector<1x8x8xf32>
    %90 = math.exp %89 : vector<1x8x8xf32>
    %cst_34 = arith.constant dense<0.000000e+00> : vector<1x8xf32>
    %91 = vector.multi_reduction <add>, %90, %cst_34 [2] : vector<1x8x8xf32> to vector<1x8xf32>
    %92 = vector.shape_cast %91 : vector<1x8xf32> to vector<1x8x1xf32>
    %93 = tpu.reciprocal %92 {approx = true} : vector<1x8x1xf32> -> vector<1x8x1xf32>
    %94 = vector.broadcast %93 : vector<1x8x1xf32> to vector<1x8x8xf32>
    %95 = arith.mulf %90, %94 : vector<1x8x8xf32>
    "tpu.trace_start"() <{level = 10 : i32, message = "bqk,bkd->bqd"}> : () -> ()
    %cst_35 = arith.constant dense<0.000000e+00> : vector<1x8x8xf32>
    %96 = tpu.matmul %95, %81, %cst_35 {dimension_numbers = #tpu.dot_dimension_numbers<[2], [1], [1], [2], [0, 0, 0, 1, 1, 2], [0], [0]>} : vector<1x8x8xf32>, vector<1x8x8xf32>, vector<1x8x8xf32> -> vector<1x8x8xf32>
    "tpu.trace_stop"() : () -> ()
    %97 = vector.shape_cast %96 : vector<1x8x8xf32> to vector<8x8xf32>
    %98 = vector.extract_strided_slice %36 {offsets = [16, 0], sizes = [8, 32], strides = [1, 1]} : vector<32x32xf32> to vector<8x32xf32>
    %cst_36 = arith.constant dense<0.000000e+00> : vector<8x32xf32>
    %99 = tpu.matmul %97, %98, %cst_36 {dimension_numbers = #tpu.dot_dimension_numbers<[1], [0], [0], [1], [0, 0, 1, 1], [], []>} : vector<8x8xf32>, vector<8x32xf32>, vector<8x32xf32> -> vector<8x32xf32>
    %100 = arith.addf %80, %99 : vector<8x32xf32>
    %101 = vector.extract_strided_slice %32 {offsets = [0, 0, 24], sizes = [1, 8, 8], strides = [1, 1, 1]} : vector<1x8x32xf32> to vector<1x8x8xf32>
    %102 = vector.extract_strided_slice %35 {offsets = [0, 0, 24], sizes = [1, 8, 8], strides = [1, 1, 1]} : vector<1x8x32xf32> to vector<1x8x8xf32>
    "tpu.trace_start"() <{level = 10 : i32, message = "bqd,bkd->bqk"}> : () -> ()
    %cst_37 = arith.constant dense<0.000000e+00> : vector<1x8x8xf32>
    %103 = tpu.matmul %102, %101, %cst_37 {dimension_numbers = #tpu.dot_dimension_numbers<[2], [2], [1], [1], [0, 0, 0, 1, 1, 1], [0], [0]>} : vector<1x8x8xf32>, vector<1x8x8xf32>, vector<1x8x8xf32> -> vector<1x8x8xf32>
    %cst_38 = arith.constant -1.000000e+30 : f32
    "tpu.trace_stop"() : () -> ()
    %104 = vector.broadcast %cst_38 : f32 to vector<1x8x8xf32>
    %105 = arith.select %31, %103, %104 : vector<1x8x8xi1>, vector<1x8x8xf32>
    %cst_39 = arith.constant dense<0xFF800000> : vector<1x8xf32>
    %106 = vector.multi_reduction <maximumf>, %105, %cst_39 [2] : vector<1x8x8xf32> to vector<1x8xf32>
    %107 = vector.shape_cast %106 : vector<1x8xf32> to vector<1x8x1xf32>
    %108 = vector.broadcast %107 : vector<1x8x1xf32> to vector<1x8x8xf32>
    %109 = arith.subf %105, %108 : vector<1x8x8xf32>
    %110 = math.exp %109 : vector<1x8x8xf32>
    %cst_40 = arith.constant dense<0.000000e+00> : vector<1x8xf32>
    %111 = vector.multi_reduction <add>, %110, %cst_40 [2] : vector<1x8x8xf32> to vector<1x8xf32>
    %112 = vector.shape_cast %111 : vector<1x8xf32> to vector<1x8x1xf32>
    %113 = tpu.reciprocal %112 {approx = true} : vector<1x8x1xf32> -> vector<1x8x1xf32>
    %114 = vector.broadcast %113 : vector<1x8x1xf32> to vector<1x8x8xf32>
    %115 = arith.mulf %110, %114 : vector<1x8x8xf32>
    "tpu.trace_start"() <{level = 10 : i32, message = "bqk,bkd->bqd"}> : () -> ()
    %cst_41 = arith.constant dense<0.000000e+00> : vector<1x8x8xf32>
    %116 = tpu.matmul %115, %101, %cst_41 {dimension_numbers = #tpu.dot_dimension_numbers<[2], [1], [1], [2], [0, 0, 0, 1, 1, 2], [0], [0]>} : vector<1x8x8xf32>, vector<1x8x8xf32>, vector<1x8x8xf32> -> vector<1x8x8xf32>
    "tpu.trace_stop"() : () -> ()
    %117 = vector.shape_cast %116 : vector<1x8x8xf32> to vector<8x8xf32>
    %118 = vector.extract_strided_slice %36 {offsets = [24, 0], sizes = [8, 32], strides = [1, 1]} : vector<32x32xf32> to vector<8x32xf32>
    %cst_42 = arith.constant dense<0.000000e+00> : vector<8x32xf32>
    %119 = tpu.matmul %117, %118, %cst_42 {dimension_numbers = #tpu.dot_dimension_numbers<[1], [0], [0], [1], [0, 0, 1, 1], [], []>} : vector<8x8xf32>, vector<8x32xf32>, vector<8x32xf32> -> vector<8x32xf32>
    %120 = arith.addf %100, %119 : vector<8x32xf32>
    %121 = arith.addf %1, %120 : vector<8x32xf32>
    %c0_43 = arith.constant 0 : index
    %c0_44 = arith.constant 0 : index
    %122 = vector.load %arg7[%c0_43, %c0_44] : memref<1x32xf32, #tpu.memory_space<vmem>>, vector<1x32xf32>
    %c0_45 = arith.constant 0 : index
    %c0_46 = arith.constant 0 : index
    %123 = vector.load %arg8[%c0_45, %c0_46] : memref<1x32xf32, #tpu.memory_space<vmem>>, vector<1x32xf32>
    %cst_47 = arith.constant dense<0.000000e+00> : vector<8xf32>
    %124 = vector.multi_reduction <add>, %121, %cst_47 [1] : vector<8x32xf32> to vector<8xf32>
    %125 = vector.shape_cast %124 : vector<8xf32> to vector<8x1xf32>
    %cst_48 = arith.constant 3.200000e+01 : f32
    %126 = vector.broadcast %cst_48 : f32 to vector<8x1xf32>
    %127 = arith.divf %125, %126 : vector<8x1xf32>
    %128 = vector.broadcast %127 : vector<8x1xf32> to vector<8x32xf32>
    %129 = arith.subf %121, %128 : vector<8x32xf32>
    %130 = arith.mulf %129, %129 : vector<8x32xf32>
    %cst_49 = arith.constant dense<0.000000e+00> : vector<8xf32>
    %131 = vector.multi_reduction <add>, %130, %cst_49 [1] : vector<8x32xf32> to vector<8xf32>
    %132 = vector.shape_cast %131 : vector<8xf32> to vector<8x1xf32>
    %cst_50 = arith.constant 3.200000e+01 : f32
    %133 = vector.broadcast %cst_50 : f32 to vector<8x1xf32>
    %134 = arith.divf %132, %133 : vector<8x1xf32>
    %135 = vector.broadcast %127 : vector<8x1xf32> to vector<8x32xf32>
    %136 = arith.subf %121, %135 : vector<8x32xf32>
    %cst_51 = arith.constant 9.99999974E-6 : f32
    %137 = vector.broadcast %cst_51 : f32 to vector<8x1xf32>
    %138 = arith.addf %134, %137 : vector<8x1xf32>
    %139 = math.rsqrt %138 : vector<8x1xf32>
    %140 = vector.broadcast %139 : vector<8x1xf32> to vector<8x32xf32>
    %141 = arith.mulf %136, %140 : vector<8x32xf32>
    %142 = vector.broadcast %122 : vector<1x32xf32> to vector<8x32xf32>
    %143 = arith.mulf %141, %142 : vector<8x32xf32>
    %144 = vector.broadcast %123 : vector<1x32xf32> to vector<8x32xf32>
    %145 = arith.addf %143, %144 : vector<8x32xf32>
    %c0_52 = arith.constant 0 : index
    %c0_53 = arith.constant 0 : index
    %146 = vector.load %arg9[%c0_52, %c0_53] : memref<32x128xf32, #tpu.memory_space<vmem>>, vector<32x128xf32>
    %cst_54 = arith.constant dense<0.000000e+00> : vector<8x128xf32>
    %147 = tpu.matmul %145, %146, %cst_54 {dimension_numbers = #tpu.dot_dimension_numbers<[1], [0], [0], [1], [0, 0, 1, 1], [], []>} : vector<8x32xf32>, vector<32x128xf32>, vector<8x128xf32> -> vector<8x128xf32>
    %c0_55 = arith.constant 0 : index
    %c0_56 = arith.constant 0 : index
    %148 = vector.load %arg10[%c0_55, %c0_56] : memref<1x128xf32, #tpu.memory_space<vmem>>, vector<1x128xf32>
    %149 = vector.broadcast %148 : vector<1x128xf32> to vector<8x128xf32>
    %150 = arith.addf %147, %149 : vector<8x128xf32>
    %cst_57 = arith.constant 0.000000e+00 : f32
    %151 = vector.broadcast %cst_57 : f32 to vector<8x128xf32>
    %152 = arith.maximumf %150, %151 : vector<8x128xf32>
    %c0_58 = arith.constant 0 : index
    %c0_59 = arith.constant 0 : index
    %153 = vector.load %arg11[%c0_58, %c0_59] : memref<128x32xf32, #tpu.memory_space<vmem>>, vector<128x32xf32>
    %cst_60 = arith.constant dense<0.000000e+00> : vector<8x32xf32>
    %154 = tpu.matmul %152, %153, %cst_60 {dimension_numbers = #tpu.dot_dimension_numbers<[1], [0], [0], [1], [0, 0, 1, 1], [], []>} : vector<8x128xf32>, vector<128x32xf32>, vector<8x32xf32> -> vector<8x32xf32>
    %c0_61 = arith.constant 0 : index
    %c0_62 = arith.constant 0 : index
    %155 = vector.load %arg12[%c0_61, %c0_62] : memref<1x32xf32, #tpu.memory_space<vmem>>, vector<1x32xf32>
    %156 = vector.broadcast %155 : vector<1x32xf32> to vector<8x32xf32>
    %157 = arith.addf %154, %156 : vector<8x32xf32>
    %158 = arith.addf %121, %157 : vector<8x32xf32>
    %159 = vector.shape_cast %158 : vector<8x32xf32> to vector<1x8x32xf32>
    %c0_63 = arith.constant 0 : index
    %c0_64 = arith.constant 0 : index
    %c0_65 = arith.constant 0 : index
    %160 = vector.load %arg13[%c0_63, %c0_64, %c0_65] : memref<1x8x32xf32, #tpu.memory_space<vmem>>, vector<1x8x32xf32>
    tpu.vector_store %arg13[%c0_63, %c0_64, %c0_65], %159 {strides = array<i32>} : memref<1x8x32xf32, #tpu.memory_space<vmem>>, vector<1x8x32xf32>,
    return
  }
  func.func @transform_0(%arg0: i32) -> (i32, i32, i32) {
    %c0_i32 = arith.constant 0 : i32
    %c0_i32_0 = arith.constant 0 : i32
    %c0_i32_1 = arith.constant 0 : i32
    return %arg0, %c0_i32, %c0_i32_0 : i32, i32, i32
  }
  func.func @transform_1(%arg0: i32) -> (i32, i32) {
    %c0_i32 = arith.constant 0 : i32
    %c0_i32_0 = arith.constant 0 : i32
    %c0_i32_1 = arith.constant 0 : i32
    return %c0_i32, %c0_i32_0 : i32, i32
  }
  func.func @transform_2(%arg0: i32) -> (i32, i32) {
    %c0_i32 = arith.constant 0 : i32
    %c0_i32_0 = arith.constant 0 : i32
    %c0_i32_1 = arith.constant 0 : i32
    return %c0_i32, %c0_i32_0 : i32, i32
  }
  func.func @transform_3(%arg0: i32) -> (i32, i32) {
    %c0_i32 = arith.constant 0 : i32
    %c0_i32_0 = arith.constant 0 : i32
    %c0_i32_1 = arith.constant 0 : i32
    return %c0_i32, %c0_i32_0 : i32, i32
  }
  func.func @transform_4(%arg0: i32) -> (i32, i32) {
    %c0_i32 = arith.constant 0 : i32
    %c0_i32_0 = arith.constant 0 : i32
    %c0_i32_1 = arith.constant 0 : i32
    return %c0_i32, %c0_i32_0 : i32, i32
  }
  func.func @transform_5(%arg0: i32) -> (i32, i32) {
    %c0_i32 = arith.constant 0 : i32
    %c0_i32_0 = arith.constant 0 : i32
    %c0_i32_1 = arith.constant 0 : i32
    return %c0_i32, %c0_i32_0 : i32, i32
  }
  func.func @transform_6(%arg0: i32) -> (i32, i32) {
    %c0_i32 = arith.constant 0 : i32
    %c0_i32_0 = arith.constant 0 : i32
    %c0_i32_1 = arith.constant 0 : i32
    return %c0_i32, %c0_i32_0 : i32, i32
  }
  func.func @transform_7(%arg0: i32) -> (i32, i32) {
    %c0_i32 = arith.constant 0 : i32
    %c0_i32_0 = arith.constant 0 : i32
    %c0_i32_1 = arith.constant 0 : i32
    return %c0_i32, %c0_i32_0 : i32, i32
  }
  func.func @transform_8(%arg0: i32) -> (i32, i32) {
    %c0_i32 = arith.constant 0 : i32
    %c0_i32_0 = arith.constant 0 : i32
    %c0_i32_1 = arith.constant 0 : i32
    return %c0_i32, %c0_i32_0 : i32, i32
  }
  func.func @transform_9(%arg0: i32) -> (i32, i32) {
    %c0_i32 = arith.constant 0 : i32
    %c0_i32_0 = arith.constant 0 : i32
    %c0_i32_1 = arith.constant 0 : i32
    return %c0_i32, %c0_i32_0 : i32, i32
  }
  func.func @transform_10(%arg0: i32) -> (i32, i32) {
    %c0_i32 = arith.constant 0 : i32
    %c0_i32_0 = arith.constant 0 : i32
    %c0_i32_1 = arith.constant 0 : i32
    return %c0_i32, %c0_i32_0 : i32, i32
  }
  func.func @transform_11(%arg0: i32) -> (i32, i32) {
    %c0_i32 = arith.constant 0 : i32
    %c0_i32_0 = arith.constant 0 : i32
    %c0_i32_1 = arith.constant 0 : i32
    return %c0_i32, %c0_i32_0 : i32, i32
  }
  func.func @transform_12(%arg0: i32) -> (i32, i32, i32) {
    %c0_i32 = arith.constant 0 : i32
    %c0_i32_0 = arith.constant 0 : i32
    %c0_i32_1 = arith.constant 0 : i32
    return %arg0, %c0_i32, %c0_i32_0 : i32, i32, i32
  }
}

</mosaic_0001>

<llo_original>
// kernel: tpu_custom_call.1
$region0: #{tpu_custom_call.1}
  #allocation0 [shape = 'u32[]', space=smem, size = 0x4, offset = 0x4, fixed_abs, tag = 'smem constant byte address 0x4 - core index']
  #allocation1 [shape = 'u32[144,128]{1,0:T(1,128)}', space=vmem, size = 0x12000, scoped, tag = 'internal scratch']
  %s0 = inlined_call_operand.vmem [shape: f32[2,8,32], index: 0, kind: input, shape index: {}]
  %s1 = inlined_call_operand.vmem [shape: f32[1,32], index: 1, kind: input, shape index: {}]
  %s2 = inlined_call_operand.vmem [shape: f32[1,32], index: 2, kind: input, shape index: {}]
  %s3 = inlined_call_operand.vmem [shape: f32[32,32], index: 3, kind: input, shape index: {}]
  %s4 = inlined_call_operand.vmem [shape: f32[32,32], index: 4, kind: input, shape index: {}]
  %s5 = inlined_call_operand.vmem [shape: f32[1,32], index: 5, kind: input, shape index: {}]
  %s6 = inlined_call_operand.vmem [shape: f32[1,32], index: 6, kind: input, shape index: {}]
  %s7 = inlined_call_operand.vmem [shape: f32[1,32], index: 7, kind: input, shape index: {}]
  %s8 = inlined_call_operand.vmem [shape: f32[32,128], index: 8, kind: input, shape index: {}]
  %s9 = inlined_call_operand.vmem [shape: f32[1,128], index: 9, kind: input, shape index: {}]
  %s10 = inlined_call_operand.vmem [shape: f32[128,32], index: 10, kind: input, shape index: {}]
  %s11 = inlined_call_operand.vmem [shape: f32[1,32], index: 11, kind: input, shape index: {}]
  %s12 = inlined_call_operand.hbm [shape: f32[2,8,32], index: 12, kind: output, shape index: {}]
  %s13 = sld [smem:[#allocation0]]
  $region81: #{tpu_custom_call.1} parent=0
    _
  %s15 = ssub.s32 1, %s13
  %s16 = scalar_select 0, %s15, %s13
  $region1: #{tpu_custom_call.1} parent=0
    #allocation2 [shape = 'u8[8192]{0}', space=vmem, size = 0x2000, scoped, tag = 'output window, operand 0']
    #allocation3 [shape = 's32[2]{0}', space=sflag, size = 0x8, scoped, tag = 'scoped memory for tpu_custom_call.1']
    %17 = vsyncpa [#allocation3], 0
    %s18 = scalar_lea.sflag [#allocation3], 1
    %19 = vsyncpa %s18, 0
    loop: start=0, step=1, limit=4
    $region2: #{tpu_custom_call.1} parent=1 // loop_pre_header
      _
    $region3: #{tpu_custom_call.1} parent=1 // loop_header
      %s21 = sphi 0, %s25
      %p22 = scmp.ge.s32.totalorder %s21, 4
      %s31 = sphi 0, %s33
      %s34 = sphi 0, %s31
      %s35 = sphi 0, %s34
      %s51 = sphi 0, %s35
      %s55 = sphi 0, %s55
      %s57 = sphi 0, %s55
      %s58 = sphi 0, %s57
      %s72 = sphi 0, %s58
      %s76 = sphi 0, %s76
      %s78 = sphi 0, %s76
      %s79 = sphi 0, %s78
      %s93 = sphi 0, %s79
      %s97 = sphi 0, %s97
      %s99 = sphi 0, %s97
      %s100 = sphi 0, %s99
      %s114 = sphi 0, %s100
      %s118 = sphi 0, %s118
      %s120 = sphi 0, %s118
      %s121 = sphi 0, %s120
      %s135 = sphi 0, %s121
      %s139 = sphi 0, %s139
      %s141 = sphi 0, %s139
      %s142 = sphi 0, %s141
      %s156 = sphi 0, %s142
      %s160 = sphi 0, %s160
      %s162 = sphi 0, %s160
      %s163 = sphi 0, %s162
      %s177 = sphi 0, %s163
      %s181 = sphi 0, %s181
      %s183 = sphi 0, %s181
      %s184 = sphi 0, %s183
      %s198 = sphi 0, %s184
      %s202 = sphi 0, %s202
      %s204 = sphi 0, %s202
      %s205 = sphi 0, %s204
      %s219 = sphi 0, %s205
      %s223 = sphi 0, %s223
      %s225 = sphi 0, %s223
      %s226 = sphi 0, %s225
      %s240 = sphi 0, %s226
      %s244 = sphi 0, %s244
      %s246 = sphi 0, %s244
      %s247 = sphi 0, %s246
      %s261 = sphi 0, %s247
      %s265 = sphi 0, %s265
      %s267 = sphi 0, %s265
      %s268 = sphi 0, %s267
      %s282 = sphi 0, %s268
      %s288 = sphi 0, %s290
      %s291 = sphi 0, %s288
      %s292 = sphi 0, %s291
      %s308 = sphi 0, %s292
    $region4: #{tpu_custom_call.1} parent=1 // loop_header_branch
      %24 = sbr.rel (%p22) target = $region8
    $region5: #{tpu_custom_call.1} parent=1 // loop_body
      %s26 = ssub.s32 %s21, 1
      %s27 = ssub.s32 %s21, 2
      %s28 = sadd.s32 %s21, 1
      %s29 = ssub.s32 %s21, %s28
      %p30 = scmp.eq.s32.totalorder %s29, 0
      %s32 = sadd.s32 %s31, 1
      %s33 = scalar_select %p30, %s31, %s32
      %p36 = pneg %p30
      %p37 = scmp.eq.s32.totalorder %s21, 1
      %p38 = por %p36, %p37
      %p39 = scmp.ne.s32.totalorder %s31, %s34
      %p40 = scmp.eq.s32.totalorder %s21, 0
      %p41 = por %p39, %p40
      %p42 = scmp.ne.s32.totalorder %s31, %s34
      %p43 = scmp.eq.s32.totalorder %s26, 1
      %p44 = por %p42, %p43
      %p45 = scmp.ne.s32.totalorder %s34, %s35
      %p46 = scmp.eq.s32.totalorder %s26, 0
      %p47 = por %p45, %p46
      %p48 = scmp.ne.s32.totalorder %s34, %s35
      %p49 = scmp.eq.s32.totalorder %s27, 1
      %p50 = por %p48, %p49
      %p52 = scmp.ne.s32.totalorder %s35, %s51
      %p53 = scmp.eq.s32.totalorder %s27, 0
      %p54 = por %p52, %p53
      %s56 = sadd.s32 %s55, 1
      %p59 = scmp.eq.s32.totalorder %s21, 1
      %p60 = scmp.ne.s32.totalorder %s55, %s57
      %p61 = scmp.eq.s32.totalorder %s21, 0
      %p62 = por %p60, %p61
      %p63 = scmp.ne.s32.totalorder %s55, %s57
      %p64 = scmp.eq.s32.totalorder %s26, 1
      %p65 = por %p63, %p64
      %p66 = scmp.ne.s32.totalorder %s57, %s58
      %p67 = scmp.eq.s32.totalorder %s26, 0
      %p68 = por %p66, %p67
      %p69 = scmp.ne.s32.totalorder %s57, %s58
      %p70 = scmp.eq.s32.totalorder %s27, 1
      %p71 = por %p69, %p70
      %p73 = scmp.ne.s32.totalorder %s58, %s72
      %p74 = scmp.eq.s32.totalorder %s27, 0
      %p75 = por %p73, %p74
      %s77 = sadd.s32 %s76, 1
      %p80 = scmp.eq.s32.totalorder %s21, 1
      %p81 = scmp.ne.s32.totalorder %s76, %s78
      %p82 = scmp.eq.s32.totalorder %s21, 0
      %p83 = por %p81, %p82
      %p84 = scmp.ne.s32.totalorder %s76, %s78
      %p85 = scmp.eq.s32.totalorder %s26, 1
      %p86 = por %p84, %p85
      %p87 = scmp.ne.s32.totalorder %s78, %s79
      %p88 = scmp.eq.s32.totalorder %s26, 0
      %p89 = por %p87, %p88
      %p90 = scmp.ne.s32.totalorder %s78, %s79
      %p91 = scmp.eq.s32.totalorder %s27, 1
      %p92 = por %p90, %p91
      %p94 = scmp.ne.s32.totalorder %s79, %s93
      %p95 = scmp.eq.s32.totalorder %s27, 0
      %p96 = por %p94, %p95
      %s98 = sadd.s32 %s97, 1
      %p101 = scmp.eq.s32.totalorder %s21, 1
      %p102 = scmp.ne.s32.totalorder %s97, %s99
      %p103 = scmp.eq.s32.totalorder %s21, 0
      %p104 = por %p102, %p103
      %p105 = scmp.ne.s32.totalorder %s97, %s99
      %p106 = scmp.eq.s32.totalorder %s26, 1
      %p107 = por %p105, %p106
      %p108 = scmp.ne.s32.totalorder %s99, %s100
      %p109 = scmp.eq.s32.totalorder %s26, 0
      %p110 = por %p108, %p109
      %p111 = scmp.ne.s32.totalorder %s99, %s100
      %p112 = scmp.eq.s32.totalorder %s27, 1
      %p113 = por %p111, %p112
      %p115 = scmp.ne.s32.totalorder %s100, %s114
      %p116 = scmp.eq.s32.totalorder %s27, 0
      %p117 = por %p115, %p116
      %s119 = sadd.s32 %s118, 1
      %p122 = scmp.eq.s32.totalorder %s21, 1
      %p123 = scmp.ne.s32.totalorder %s118, %s120
      %p124 = scmp.eq.s32.totalorder %s21, 0
      %p125 = por %p123, %p124
      %p126 = scmp.ne.s32.totalorder %s118, %s120
      %p127 = scmp.eq.s32.totalorder %s26, 1
      %p128 = por %p126, %p127
      %p129 = scmp.ne.s32.totalorder %s120, %s121
      %p130 = scmp.eq.s32.totalorder %s26, 0
      %p131 = por %p129, %p130
      %p132 = scmp.ne.s32.totalorder %s120, %s121
      %p133 = scmp.eq.s32.totalorder %s27, 1
      %p134 = por %p132, %p133
      %p136 = scmp.ne.s32.totalorder %s121, %s135
      %p137 = scmp.eq.s32.totalorder %s27, 0
      %p138 = por %p136, %p137
      %s140 = sadd.s32 %s139, 1
      %p143 = scmp.eq.s32.totalorder %s21, 1
      %p144 = scmp.ne.s32.totalorder %s139, %s141
      %p145 = scmp.eq.s32.totalorder %s21, 0
      %p146 = por %p144, %p145
      %p147 = scmp.ne.s32.totalorder %s139, %s141
      %p148 = scmp.eq.s32.totalorder %s26, 1
      %p149 = por %p147, %p148
      %p150 = scmp.ne.s32.totalorder %s141, %s142
      %p151 = scmp.eq.s32.totalorder %s26, 0
      %p152 = por %p150, %p151
      %p153 = scmp.ne.s32.totalorder %s141, %s142
      %p154 = scmp.eq.s32.totalorder %s27, 1
      %p155 = por %p153, %p154
      %p157 = scmp.ne.s32.totalorder %s142, %s156
      %p158 = scmp.eq.s32.totalorder %s27, 0
      %p159 = por %p157, %p158
      %s161 = sadd.s32 %s160, 1
      %p164 = scmp.eq.s32.totalorder %s21, 1
      %p165 = scmp.ne.s32.totalorder %s160, %s162
      %p166 = scmp.eq.s32.totalorder %s21, 0
      %p167 = por %p165, %p166
      %p168 = scmp.ne.s32.totalorder %s160, %s162
      %p169 = scmp.eq.s32.totalorder %s26, 1
      %p170 = por %p168, %p169
      %p171 = scmp.ne.s32.totalorder %s162, %s163
      %p172 = scmp.eq.s32.totalorder %s26, 0
      %p173 = por %p171, %p172
      %p174 = scmp.ne.s32.totalorder %s162, %s163
      %p175 = scmp.eq.s32.totalorder %s27, 1
      %p176 = por %p174, %p175
      %p178 = scmp.ne.s32.totalorder %s163, %s177
      %p179 = scmp.eq.s32.totalorder %s27, 0
      %p180 = por %p178, %p179
      %s182 = sadd.s32 %s181, 1
      %p185 = scmp.eq.s32.totalorder %s21, 1
      %p186 = scmp.ne.s32.totalorder %s181, %s183
      %p187 = scmp.eq.s32.totalorder %s21, 0
      %p188 = por %p186, %p187
      %p189 = scmp.ne.s32.totalorder %s181, %s183
      %p190 = scmp.eq.s32.totalorder %s26, 1
      %p191 = por %p189, %p190
      %p192 = scmp.ne.s32.totalorder %s183, %s184
      %p193 = scmp.eq.s32.totalorder %s26, 0
      %p194 = por %p192, %p193
      %p195 = scmp.ne.s32.totalorder %s183, %s184
      %p196 = scmp.eq.s32.totalorder %s27, 1
      %p197 = por %p195, %p196
      %p199 = scmp.ne.s32.totalorder %s184, %s198
      %p200 = scmp.eq.s32.totalorder %s27, 0
      %p201 = por %p199, %p200
      %s203 = sadd.s32 %s202, 1
      %p206 = scmp.eq.s32.totalorder %s21, 1
      %p207 = scmp.ne.s32.totalorder %s202, %s204
      %p208 = scmp.eq.s32.totalorder %s21, 0
      %p209 = por %p207, %p208
      %p210 = scmp.ne.s32.totalorder %s202, %s204
      %p211 = scmp.eq.s32.totalorder %s26, 1
      %p212 = por %p210, %p211
      %p213 = scmp.ne.s32.totalorder %s204, %s205
      %p214 = scmp.eq.s32.totalorder %s26, 0
      %p215 = por %p213, %p214
      %p216 = scmp.ne.s32.totalorder %s204, %s205
      %p217 = scmp.eq.s32.totalorder %s27, 1
      %p218 = por %p216, %p217
      %p220 = scmp.ne.s32.totalorder %s205, %s219
      %p221 = scmp.eq.s32.totalorder %s27, 0
      %p222 = por %p220, %p221
      %s224 = sadd.s32 %s223, 1
      %p227 = scmp.eq.s32.totalorder %s21, 1
      %p228 = scmp.ne.s32.totalorder %s223, %s225
      %p229 = scmp.eq.s32.totalorder %s21, 0
      %p230 = por %p228, %p229
      %p231 = scmp.ne.s32.totalorder %s223, %s225
      %p232 = scmp.eq.s32.totalorder %s26, 1
      %p233 = por %p231, %p232
      %p234 = scmp.ne.s32.totalorder %s225, %s226
      %p235 = scmp.eq.s32.totalorder %s26, 0
      %p236 = por %p234, %p235
      %p237 = scmp.ne.s32.totalorder %s225, %s226
      %p238 = scmp.eq.s32.totalorder %s27, 1
      %p239 = por %p237, %p238
      %p241 = scmp.ne.s32.totalorder %s226, %s240
      %p242 = scmp.eq.s32.totalorder %s27, 0
      %p243 = por %p241, %p242
      %s245 = sadd.s32 %s244, 1
      %p248 = scmp.eq.s32.totalorder %s21, 1
      %p249 = scmp.ne.s32.totalorder %s244, %s246
      %p250 = scmp.eq.s32.totalorder %s21, 0
      %p251 = por %p249, %p250
      %p252 = scmp.ne.s32.totalorder %s244, %s246
      %p253 = scmp.eq.s32.totalorder %s26, 1
      %p254 = por %p252, %p253
      %p255 = scmp.ne.s32.totalorder %s246, %s247
      %p256 = scmp.eq.s32.totalorder %s26, 0
      %p257 = por %p255, %p256
      %p258 = scmp.ne.s32.totalorder %s246, %s247
      %p259 = scmp.eq.s32.totalorder %s27, 1
      %p260 = por %p258, %p259
      %p262 = scmp.ne.s32.totalorder %s247, %s261
      %p263 = scmp.eq.s32.totalorder %s27, 0
      %p264 = por %p262, %p263
      %s266 = sadd.s32 %s265, 1
      %p269 = scmp.eq.s32.totalorder %s21, 1
      %p270 = scmp.ne.s32.totalorder %s265, %s267
      %p271 = scmp.eq.s32.totalorder %s21, 0
      %p272 = por %p270, %p271
      %p273 = scmp.ne.s32.totalorder %s265, %s267
      %p274 = scmp.eq.s32.totalorder %s26, 1
      %p275 = por %p273, %p274
      %p276 = scmp.ne.s32.totalorder %s267, %s268
      %p277 = scmp.eq.s32.totalorder %s26, 0
      %p278 = por %p276, %p277
      %p279 = scmp.ne.s32.totalorder %s267, %s268
      %p280 = scmp.eq.s32.totalorder %s27, 1
      %p281 = por %p279, %p280
      %p283 = scmp.ne.s32.totalorder %s268, %s282
      %p284 = scmp.eq.s32.totalorder %s27, 0
      %p285 = por %p283, %p284
      %s286 = ssub.s32 %s21, %s28
      %p287 = scmp.eq.s32.totalorder %s286, 0
      %s289 = sadd.s32 %s288, 1
      %s290 = scalar_select %p287, %s288, %s289
      %p293 = pneg %p287
      %p294 = scmp.eq.s32.totalorder %s21, 1
      %p295 = por %p293, %p294
      %p296 = scmp.ne.s32.totalorder %s288, %s291
      %p297 = scmp.eq.s32.totalorder %s21, 0
      %p298 = por %p296, %p297
      %p299 = scmp.ne.s32.totalorder %s288, %s291
      %p300 = scmp.eq.s32.totalorder %s26, 1
      %p301 = por %p299, %p300
      %p302 = scmp.ne.s32.totalorder %s291, %s292
      %p303 = scmp.eq.s32.totalorder %s26, 0
      %p304 = por %p302, %p303
      %p305 = scmp.ne.s32.totalorder %s291, %s292
      %p306 = scmp.eq.s32.totalorder %s27, 1
      %p307 = por %p305, %p306
      %p309 = scmp.ne.s32.totalorder %s292, %s308
      %p310 = scmp.eq.s32.totalorder %s27, 0
      %p311 = por %p309, %p310
      %p312 = scmp.le.s32.totalorder 1, %s21
      %p313 = scmp.lt.s32.totalorder %s21, 3
      %p314 = pnand %p312, %p313
      %p315 = pneg %p314
      // Predicated region
      $region9: #{tpu_custom_call.1} parent=5 // pred_check
        _
      $region10: #{tpu_custom_call.1} parent=5 // pred_check_branch
        %317 = sbr.rel (%p314) target = $region12
      $region11: #{tpu_custom_call.1} parent=5 // pred_region
        %s318 = ssub.s32 %s21, 1
        // Predicated region
        $region13: #{tpu_custom_call.1} parent=11 // pred_check
          %p319 = pneg %p68
        $region14: #{tpu_custom_call.1} parent=11 // pred_check_branch
          %321 = sbr.rel (%p319) target = $region16
        $region15: #{tpu_custom_call.1} parent=11 // pred_region
          _
        $region16: #{tpu_custom_call.1} parent=11 // pred_fallthru
          _
        // Predicated region
        $region17: #{tpu_custom_call.1} parent=11 // pred_check
          %p322 = pneg %p89
        $region18: #{tpu_custom_call.1} parent=11 // pred_check_branch
          %324 = sbr.rel (%p322) target = $region20
        $region19: #{tpu_custom_call.1} parent=11 // pred_region
          _
        $region20: #{tpu_custom_call.1} parent=11 // pred_fallthru
          _
        // Predicated region
        $region21: #{tpu_custom_call.1} parent=11 // pred_check
          %p325 = pneg %p110
        $region22: #{tpu_custom_call.1} parent=11 // pred_check_branch
          %327 = sbr.rel (%p325) target = $region24
        $region23: #{tpu_custom_call.1} parent=11 // pred_region
          _
        $region24: #{tpu_custom_call.1} parent=11 // pred_fallthru
          _
        // Predicated region
        $region25: #{tpu_custom_call.1} parent=11 // pred_check
          %p328 = pneg %p131
        $region26: #{tpu_custom_call.1} parent=11 // pred_check_branch
          %330 = sbr.rel (%p328) target = $region28
        $region27: #{tpu_custom_call.1} parent=11 // pred_region
          _
        $region28: #{tpu_custom_call.1} parent=11 // pred_fallthru
          _
        // Predicated region
        $region29: #{tpu_custom_call.1} parent=11 // pred_check
          %p331 = pneg %p152
        $region30: #{tpu_custom_call.1} parent=11 // pred_check_branch
          %333 = sbr.rel (%p331) target = $region32
        $region31: #{tpu_custom_call.1} parent=11 // pred_region
          _
        $region32: #{tpu_custom_call.1} parent=11 // pred_fallthru
          _
        // Predicated region
        $region33: #{tpu_custom_call.1} parent=11 // pred_check
          %p334 = pneg %p173
        $region34: #{tpu_custom_call.1} parent=11 // pred_check_branch
          %336 = sbr.rel (%p334) target = $region36
        $region35: #{tpu_custom_call.1} parent=11 // pred_region
          _
        $region36: #{tpu_custom_call.1} parent=11 // pred_fallthru
          _
        // Predicated region
        $region37: #{tpu_custom_call.1} parent=11 // pred_check
          %p337 = pneg %p194
        $region38: #{tpu_custom_call.1} parent=11 // pred_check_branch
          %339 = sbr.rel (%p337) target = $region40
        $region39: #{tpu_custom_call.1} parent=11 // pred_region
          _
        $region40: #{tpu_custom_call.1} parent=11 // pred_fallthru
          _
        // Predicated region
        $region41: #{tpu_custom_call.1} parent=11 // pred_check
          %p340 = pneg %p215
        $region42: #{tpu_custom_call.1} parent=11 // pred_check_branch
          %342 = sbr.rel (%p340) target = $region44
        $region43: #{tpu_custom_call.1} parent=11 // pred_region
          _
        $region44: #{tpu_custom_call.1} parent=11 // pred_fallthru
          _
        // Predicated region
        $region45: #{tpu_custom_call.1} parent=11 // pred_check
          %p343 = pneg %p236
        $region46: #{tpu_custom_call.1} parent=11 // pred_check_branch
          %345 = sbr.rel (%p343) target = $region48
        $region47: #{tpu_custom_call.1} parent=11 // pred_region
          _
        $region48: #{tpu_custom_call.1} parent=11 // pred_fallthru
          _
        // Predicated region
        $region49: #{tpu_custom_call.1} parent=11 // pred_check
          %p346 = pneg %p257
        $region50: #{tpu_custom_call.1} parent=11 // pred_check_branch
          %348 = sbr.rel (%p346) target = $region52
        $region51: #{tpu_custom_call.1} parent=11 // pred_region
          _
        $region52: #{tpu_custom_call.1} parent=11 // pred_fallthru
          _
        // Predicated region
        $region53: #{tpu_custom_call.1} parent=11 // pred_check
          %p349 = pneg %p278
        $region54: #{tpu_custom_call.1} parent=11 // pred_check_branch
          %351 = sbr.rel (%p349) target = $region56
        $region55: #{tpu_custom_call.1} parent=11 // pred_region
          _
        $region56: #{tpu_custom_call.1} parent=11 // pred_fallthru
          _
      $region12: #{tpu_custom_call.1} parent=5 // pred_fallthru
        _
      %p352 = scmp.lt.s32.totalorder %s21, 2
      // Predicated region
      $region57: #{tpu_custom_call.1} parent=5 // pred_check
        %p353 = pneg %p352
      $region58: #{tpu_custom_call.1} parent=5 // pred_check_branch
        %355 = sbr.rel (%p353) target = $region60
      $region59: #{tpu_custom_call.1} parent=5 // pred_region
        // Predicated region
        $region61: #{tpu_custom_call.1} parent=59 // pred_check
          %p356 = pneg %p41
        $region62: #{tpu_custom_call.1} parent=59 // pred_check_branch
          %358 = sbr.rel (%p356) target = $region64
        $region63: #{tpu_custom_call.1} parent=59 // pred_region
          %p359 = scmp.lt.s32.totalorder %s21, 1
          %s360 = scalar_select %p359, %s21, 1
          %s361 = smul.addr %s360, 8
          %s362 = scalar_lea.vmem %s0, %s361
        $region64: #{tpu_custom_call.1} parent=59 // pred_fallthru
          _
      $region60: #{tpu_custom_call.1} parent=5 // pred_fallthru
        _
      %p363 = scmp.le.s32.totalorder 1, %s21
      %p364 = scmp.lt.s32.totalorder %s21, 3
      %p365 = pnand %p363, %p364
      %p366 = pneg %p365
      // Predicated region
      $region65: #{tpu_custom_call.1} parent=5 // pred_check
        _
      $region66: #{tpu_custom_call.1} parent=5 // pred_check_branch
        %368 = sbr.rel (%p365) target = $region68
      $region67: #{tpu_custom_call.1} parent=5 // pred_region
        %s369 = ssub.s32 %s21, 1
        %p370 = scmp.lt.s32.totalorder %s26, 1
        %s371 = scalar_select %p370, %s26, 1
        %s372 = smul.addr %s371, 8
        %s373 = scalar_lea.vmem %s0, %s372
        %p374 = pneg %p47
        %p375 = pneg %p44
        %p376 = pneg %p68
        %p377 = pneg %p65
        %p378 = pneg %p89
        %p379 = pneg %p86
        %p380 = pneg %p110
        %p381 = pneg %p107
        %p382 = pneg %p131
        %p383 = pneg %p128
        %p384 = pneg %p152
        %p385 = pneg %p149
        %p386 = pneg %p173
        %p387 = pneg %p170
        %p388 = pneg %p194
        %p389 = pneg %p191
        %p390 = pneg %p215
        %p391 = pneg %p212
        %p392 = pneg %p236
        %p393 = pneg %p233
        %p394 = pneg %p257
        %p395 = pneg %p254
        %p396 = pneg %p278
        %p397 = pneg %p275
        %p398 = pneg %p304
        %p399 = pneg %p301
        %s400 = sand.u32 %s291, 1
        %s401 = scalar_lea.sflag [#allocation3], %s400
        %s402 = sand.u32 %s291, 1
        %s403 = smul.addr %s402, 8
        %s404 = scalar_lea.vmem [#allocation2], %s403
        %p405 = scmp.lt.s32.totalorder %s26, 1
        %s406 = scalar_select %p405, %s26, 1
        %s407 = smul.addr %s406, 8
        %s408 = scalar_lea.vmem %s0, %s407
        %v409 = vld [vmem:[%s408] sm:$0xff]
        %v410 = vld [vmem:[%s1] sm:$0x1]
        %v411 = vld [vmem:[%s2] sm:$0x1]
        %vm412 = vcmask 261120
        %v413 = vsel %vm412, %v409, 0.0
        %414 = vadd.xlane.f32.xlu0 %v413
        %v415 = vpop.xlane.xlu0 %414
        %v416 = vrcp.pop 32.0
        %v417 = vmul.f32 %v415, %v416
        %v418 = vsub.f32 %v409, %v417
        %v419 = vmul.f32 %v418, %v418
        %v420 = vsel %vm412, %v419, 0.0
        %421 = vadd.xlane.f32.xlu0 %v420
        %v422 = vpop.xlane.xlu0 %421
        %v423 = vmul.f32 %v422, %v416
        %v424 = vadd.f32 %v423, 1e-05
        %v425 = vrsqrt.pop %v424
        %v426 = vmul.f32 %v418, %v425
        %v428 = vlaneseq
        %v429 = vshrl.u32 %v428, 7
        %v430 = vsub.s32 0, %v429
        %v431 = vrot.slane %v410, %v430
        %v433 = vmul.f32 %v426, %v431
        %v435 = vlaneseq
        %v436 = vshrl.u32 %v435, 7
        %v437 = vsub.s32 0, %v436
        %v438 = vrot.slane %v411, %v437
        %v440 = vadd.f32 %v433, %v438
        %v441 = vld [vmem:[%s3] sm:$0xff]
        %v442 = vld [vmem:[%s3 + $0x8] sm:$0xff]
        %v443 = vld [vmem:[%s3 + $0x10] sm:$0xff]
        %v444 = vld [vmem:[%s3 + $0x18] sm:$0xff]
        %v446 = vsel %vm412, %v440, 0
        %448 = vmatprep.subr.mxu0 0.0
        %449 = vmatpush1.msra.mxu0 0.0
        %450 = vmatprep.subr.mxu0 0.0
        %451 = vmatpush1.msra.mxu0 0.0
        %452 = vmatprep.subr.mxu0 0.0
        %453 = vmatpush1.msra.mxu0 0.0
        %454 = vmatprep.subr.mxu0 0.0
        %455 = vmatpush1.msra.mxu0 0.0
        %456 = vmatprep.subr.mxu0 0.0
        %457 = vmatpush1.msra.mxu0 0.0
        %458 = vmatprep.subr.mxu0 0.0
        %459 = vmatpush1.msra.mxu0 0.0
        %460 = vmatprep.subr.mxu0 0.0
        %461 = vmatpush1.msra.mxu0 0.0
        %462 = vmatprep.subr.mxu0 0.0
        %463 = vmatpush1.msra.mxu0 0.0
        %464 = vmatprep.subr.mxu0 0.0
        %465 = vmatpush1.msra.mxu0 0.0
        %466 = vmatprep.subr.mxu0 0.0
        %467 = vmatpush1.msra.mxu0 0.0
        %468 = vmatprep.subr.mxu0 0.0
        %469 = vmatpush1.msra.mxu0 0.0
        %470 = vmatprep.subr.mxu0 0.0
        %471 = vmatpush1.msra.mxu0 0.0
        %472 = vmatprep.subr.mxu0 0.0
        %473 = vmatpush1.msra.mxu0 %v444
        %474 = vmatprep.subr.mxu0 0.0
        %475 = vmatpush1.msra.mxu0 %v443
        %476 = vmatprep.subr.mxu0 0.0
        %477 = vmatpush1.msra.mxu0 %v442
        %478 = vmatprep.subr.mxu0 0.0
        %479 = vmatpush1.msra.mxu0 %v441
        %480 = vmatprep.subr.mxu0 0.0
        %481 = vmatpush2.msra.mxu0 0.0
        %482 = vmatprep.subr.mxu0 0.0
        %483 = vmatpush2.msra.mxu0 0.0
        %484 = vmatprep.subr.mxu0 0.0
        %485 = vmatpush2.msra.mxu0 0.0
        %486 = vmatprep.subr.mxu0 0.0
        %487 = vmatpush2.msra.mxu0 0.0
        %488 = vmatprep.subr.mxu0 0.0
        %489 = vmatpush2.msra.mxu0 0.0
        %490 = vmatprep.subr.mxu0 0.0
        %491 = vmatpush2.msra.mxu0 0.0
        %492 = vmatprep.subr.mxu0 0.0
        %493 = vmatpush2.msra.mxu0 0.0
        %494 = vmatprep.subr.mxu0 0.0
        %495 = vmatpush2.msra.mxu0 0.0
        %496 = vmatprep.subr.mxu0 0.0
        %497 = vmatpush2.msra.mxu0 0.0
        %498 = vmatprep.subr.mxu0 0.0
        %499 = vmatpush2.msra.mxu0 0.0
        %500 = vmatprep.subr.mxu0 0.0
        %501 = vmatpush2.msra.mxu0 0.0
        %502 = vmatprep.subr.mxu0 0.0
        %503 = vmatpush2.msra.mxu0 0.0
        %504 = vmatprep.subr.mxu0 0.0
        %505 = vmatpush2.msra.mxu0 0.0
        %506 = vmatprep.subr.mxu0 0.0
        %507 = vmatpush2.msra.mxu0 0.0
        %508 = vmatprep.subr.mxu0 0.0
        %509 = vmatpush2.msra.mxu0 0.0
        %510 = vmatprep.subr.mxu0 0.0
        %511 = vmatpush2.msra.mxu0 0.0
        %512 = vmatprep.mubr.f32.mxu0 0.0
        %513 = vmatmul.mubr.f32.gmra.mxu0 %v446
        %v514 = vpop.f32.mrf.mxu0
        %v515 = vadd.f32 0.0, %v514
        %v516 = vpop.f32.mrf.mxu0
        %517 = vdwg.mxu0
        %v518 = vlaneseq
        %v519 = vshrl.u32 %v518, 7
        %v520 = vlaneseq
        %v521 = vand.u32 %v520, 127
        %vm522 = vcmp.ge.s32.totalorder %v519, %v521
        %v523 = vmul.f32 %v515, 0.17677669
        %v524 = vld [vmem:[%s4] sm:$0xff]
        %v525 = vld [vmem:[%s4 + $0x8] sm:$0xff]
        %v526 = vld [vmem:[%s4 + $0x10] sm:$0xff]
        %v527 = vld [vmem:[%s4 + $0x18] sm:$0xff]
        %v528 = vld [vmem:[%s5] sm:$0x1]
        %v530 = vlaneseq
        %v531 = vshrl.u32 %v530, 7
        %v532 = vsub.s32 0, %v531
        %v533 = vrot.slane %v528, %v532
        %v535 = vadd.f32 %v533, 0.0
        %vm536 = vcmask 64512
        %v538 = vsel %vm536, %v523, 0
        %v541 = vsel %vm536, %v515, 0
        %543 = vmatprep.subr.mxu0 0.0
        %544 = vmatpush1.xpose.msra.mxu0 0.0
        %545 = vmatprep.subr.mxu0 0.0
        %546 = vmatpush1.xpose.msra.mxu0 0.0
        %547 = vmatprep.subr.mxu0 0.0
        %548 = vmatpush1.xpose.msra.mxu0 0.0
        %549 = vmatprep.subr.mxu0 0.0
        %550 = vmatpush1.xpose.msra.mxu0 0.0
        %551 = vmatprep.subr.mxu0 0.0
        %552 = vmatpush1.xpose.msra.mxu0 0.0
        %553 = vmatprep.subr.mxu0 0.0
        %554 = vmatpush1.xpose.msra.mxu0 0.0
        %555 = vmatprep.subr.mxu0 0.0
        %556 = vmatpush1.xpose.msra.mxu0 0.0
        %557 = vmatprep.subr.mxu0 0.0
        %558 = vmatpush1.xpose.msra.mxu0 0.0
        %559 = vmatprep.subr.mxu0 0.0
        %560 = vmatpush1.xpose.msra.mxu0 0.0
        %561 = vmatprep.subr.mxu0 0.0
        %562 = vmatpush1.xpose.msra.mxu0 0.0
        %563 = vmatprep.subr.mxu0 0.0
        %564 = vmatpush1.xpose.msra.mxu0 0.0
        %565 = vmatprep.subr.mxu0 0.0
        %566 = vmatpush1.xpose.msra.mxu0 0.0
        %567 = vmatprep.subr.mxu0 0.0
        %568 = vmatpush1.xpose.msra.mxu0 0.0
        %569 = vmatprep.subr.mxu0 0.0
        %570 = vmatpush1.xpose.msra.mxu0 0.0
        %571 = vmatprep.subr.mxu0 0.0
        %572 = vmatpush1.xpose.msra.mxu0 0.0
        %573 = vmatprep.subr.mxu0 0.0
        %574 = vmatpush1.xpose.msra.mxu0 %v541
        %575 = vmatprep.subr.mxu0 0.0
        %576 = vmatpush2.xpose.msra.mxu0 0.0
        %577 = vmatprep.subr.mxu0 0.0
        %578 = vmatpush2.xpose.msra.mxu0 0.0
        %579 = vmatprep.subr.mxu0 0.0
        %580 = vmatpush2.xpose.msra.mxu0 0.0
        %581 = vmatprep.subr.mxu0 0.0
        %582 = vmatpush2.xpose.msra.mxu0 0.0
        %583 = vmatprep.subr.mxu0 0.0
        %584 = vmatpush2.xpose.msra.mxu0 0.0
        %585 = vmatprep.subr.mxu0 0.0
        %586 = vmatpush2.xpose.msra.mxu0 0.0
        %587 = vmatprep.subr.mxu0 0.0
        %588 = vmatpush2.xpose.msra.mxu0 0.0
        %589 = vmatprep.subr.mxu0 0.0
        %590 = vmatpush2.xpose.msra.mxu0 0.0
        %591 = vmatprep.subr.mxu0 0.0
        %592 = vmatpush2.xpose.msra.mxu0 0.0
        %593 = vmatprep.subr.mxu0 0.0
        %594 = vmatpush2.xpose.msra.mxu0 0.0
        %595 = vmatprep.subr.mxu0 0.0
        %596 = vmatpush2.xpose.msra.mxu0 0.0
        %597 = vmatprep.subr.mxu0 0.0
        %598 = vmatpush2.xpose.msra.mxu0 0.0
        %599 = vmatprep.subr.mxu0 0.0
        %600 = vmatpush2.xpose.msra.mxu0 0.0
        %601 = vmatprep.subr.mxu0 0.0
        %602 = vmatpush2.xpose.msra.mxu0 0.0
        %603 = vmatprep.subr.mxu0 0.0
        %604 = vmatpush2.xpose.msra.mxu0 0.0
        %605 = vmatprep.subr.mxu0 0.0
        %606 = vmatpush2.xpose.msra.mxu0 0.0
        %607 = vmatprep.mubr.f32.mxu0 0.0
        %608 = vmatmul.mubr.f32.gmra.mxu0 %v538
        %v609 = vpop.f32.mrf.mxu0
        %v610 = vadd.f32 0.0, %v609
        %v611 = vpop.f32.mrf.mxu0
        %612 = vdwg.mxu0
        %v613 = vsel %vm522, %v610, -1e+30
        %v614 = vsel %vm536, %v613, -inf
        %615 = vmax.xlane.f32.xlu0 %v614
        %v616 = vpop.xlane.xlu0 %615
        %v617 = vsub.f32 %v613, %v616
        %v618 = vmul.f32 %v617, 1.442695
        %v619 = vpow.pop %v618
        %v620 = vsel %vm536, %v619, 0.0
        %621 = vadd.xlane.f32.xlu0 %v620
        %v622 = vpop.xlane.xlu0 %621
        %v623 = vrcp.pop %v622
        %v624 = vmul.f32 %v619, %v623
        %v626 = vsel %vm536, %v624, 0
        %628 = vmatprep.subr.mxu0 0.0
        %629 = vmatpush1.msra.mxu0 0.0
        %630 = vmatprep.subr.mxu0 0.0
        %631 = vmatpush1.msra.mxu0 0.0
        %632 = vmatprep.subr.mxu0 0.0
        %633 = vmatpush1.msra.mxu0 0.0
        %634 = vmatprep.subr.mxu0 0.0
        %635 = vmatpush1.msra.mxu0 0.0
        %636 = vmatprep.subr.mxu0 0.0
        %637 = vmatpush1.msra.mxu0 0.0
        %638 = vmatprep.subr.mxu0 0.0
        %639 = vmatpush1.msra.mxu0 0.0
        %640 = vmatprep.subr.mxu0 0.0
        %641 = vmatpush1.msra.mxu0 0.0
        %642 = vmatprep.subr.mxu0 0.0
        %643 = vmatpush1.msra.mxu0 0.0
        %644 = vmatprep.subr.mxu0 0.0
        %645 = vmatpush1.msra.mxu0 0.0
        %646 = vmatprep.subr.mxu0 0.0
        %647 = vmatpush1.msra.mxu0 0.0
        %648 = vmatprep.subr.mxu0 0.0
        %649 = vmatpush1.msra.mxu0 0.0
        %650 = vmatprep.subr.mxu0 0.0
        %651 = vmatpush1.msra.mxu0 0.0
        %652 = vmatprep.subr.mxu0 0.0
        %653 = vmatpush1.msra.mxu0 0.0
        %654 = vmatprep.subr.mxu0 0.0
        %655 = vmatpush1.msra.mxu0 0.0
        %656 = vmatprep.subr.mxu0 0.0
        %657 = vmatpush1.msra.mxu0 0.0
        %658 = vmatprep.subr.mxu0 0.0
        %659 = vmatpush1.msra.mxu0 %v515
        %660 = vmatprep.subr.mxu0 0.0
        %661 = vmatpush2.msra.mxu0 0.0
        %662 = vmatprep.subr.mxu0 0.0
        %663 = vmatpush2.msra.mxu0 0.0
        %664 = vmatprep.subr.mxu0 0.0
        %665 = vmatpush2.msra.mxu0 0.0
        %666 = vmatprep.subr.mxu0 0.0
        %667 = vmatpush2.msra.mxu0 0.0
        %668 = vmatprep.subr.mxu0 0.0
        %669 = vmatpush2.msra.mxu0 0.0
        %670 = vmatprep.subr.mxu0 0.0
        %671 = vmatpush2.msra.mxu0 0.0
        %672 = vmatprep.subr.mxu0 0.0
        %673 = vmatpush2.msra.mxu0 0.0
        %674 = vmatprep.subr.mxu0 0.0
        %675 = vmatpush2.msra.mxu0 0.0
        %676 = vmatprep.subr.mxu0 0.0
        %677 = vmatpush2.msra.mxu0 0.0
        %678 = vmatprep.subr.mxu0 0.0
        %679 = vmatpush2.msra.mxu0 0.0
        %680 = vmatprep.subr.mxu0 0.0
        %681 = vmatpush2.msra.mxu0 0.0
        %682 = vmatprep.subr.mxu0 0.0
        %683 = vmatpush2.msra.mxu0 0.0
        %684 = vmatprep.subr.mxu0 0.0
        %685 = vmatpush2.msra.mxu0 0.0
        %686 = vmatprep.subr.mxu0 0.0
        %687 = vmatpush2.msra.mxu0 0.0
        %688 = vmatprep.subr.mxu0 0.0
        %689 = vmatpush2.msra.mxu0 0.0
        %690 = vmatprep.subr.mxu0 0.0
        %691 = vmatpush2.msra.mxu0 0.0
        %692 = vmatprep.mubr.f32.mxu0 0.0
        %693 = vmatmul.mubr.f32.gmra.mxu0 %v626
        %v694 = vpop.f32.mrf.mxu0
        %v695 = vadd.f32 0.0, %v694
        %v696 = vpop.f32.mrf.mxu0
        %697 = vdwg.mxu0
        %v699 = vsel %vm536, %v695, 0
        %701 = vmatprep.subr.mxu0 0.0
        %702 = vmatpush1.msra.mxu0 0.0
        %703 = vmatprep.subr.mxu0 0.0
        %704 = vmatpush1.msra.mxu0 0.0
        %705 = vmatprep.subr.mxu0 0.0
        %706 = vmatpush1.msra.mxu0 0.0
        %707 = vmatprep.subr.mxu0 0.0
        %708 = vmatpush1.msra.mxu0 0.0
        %709 = vmatprep.subr.mxu0 0.0
        %710 = vmatpush1.msra.mxu0 0.0
        %711 = vmatprep.subr.mxu0 0.0
        %712 = vmatpush1.msra.mxu0 0.0
        %713 = vmatprep.subr.mxu0 0.0
        %714 = vmatpush1.msra.mxu0 0.0
        %715 = vmatprep.subr.mxu0 0.0
        %716 = vmatpush1.msra.mxu0 0.0
        %717 = vmatprep.subr.mxu0 0.0
        %718 = vmatpush1.msra.mxu0 0.0
        %719 = vmatprep.subr.mxu0 0.0
        %720 = vmatpush1.msra.mxu0 0.0
        %721 = vmatprep.subr.mxu0 0.0
        %722 = vmatpush1.msra.mxu0 0.0
        %723 = vmatprep.subr.mxu0 0.0
        %724 = vmatpush1.msra.mxu0 0.0
        %725 = vmatprep.subr.mxu0 0.0
        %726 = vmatpush1.msra.mxu0 0.0
        %727 = vmatprep.subr.mxu0 0.0
        %728 = vmatpush1.msra.mxu0 0.0
        %729 = vmatprep.subr.mxu0 0.0
        %730 = vmatpush1.msra.mxu0 0.0
        %731 = vmatprep.subr.mxu0 0.0
        %732 = vmatpush1.msra.mxu0 %v524
        %733 = vmatprep.subr.mxu0 0.0
        %734 = vmatpush2.msra.mxu0 0.0
        %735 = vmatprep.subr.mxu0 0.0
        %736 = vmatpush2.msra.mxu0 0.0
        %737 = vmatprep.subr.mxu0 0.0
        %738 = vmatpush2.msra.mxu0 0.0
        %739 = vmatprep.subr.mxu0 0.0
        %740 = vmatpush2.msra.mxu0 0.0
        %741 = vmatprep.subr.mxu0 0.0
        %742 = vmatpush2.msra.mxu0 0.0
        %743 = vmatprep.subr.mxu0 0.0
        %744 = vmatpush2.msra.mxu0 0.0
        %745 = vmatprep.subr.mxu0 0.0
        %746 = vmatpush2.msra.mxu0 0.0
        %747 = vmatprep.subr.mxu0 0.0
        %748 = vmatpush2.msra.mxu0 0.0
        %749 = vmatprep.subr.mxu0 0.0
        %750 = vmatpush2.msra.mxu0 0.0
        %751 = vmatprep.subr.mxu0 0.0
        %752 = vmatpush2.msra.mxu0 0.0
        %753 = vmatprep.subr.mxu0 0.0
        %754 = vmatpush2.msra.mxu0 0.0
        %755 = vmatprep.subr.mxu0 0.0
        %756 = vmatpush2.msra.mxu0 0.0
        %757 = vmatprep.subr.mxu0 0.0
        %758 = vmatpush2.msra.mxu0 0.0
        %759 = vmatprep.subr.mxu0 0.0
        %760 = vmatpush2.msra.mxu0 0.0
        %761 = vmatprep.subr.mxu0 0.0
        %762 = vmatpush2.msra.mxu0 0.0
        %763 = vmatprep.subr.mxu0 0.0
        %764 = vmatpush2.msra.mxu0 0.0
        %765 = vmatprep.mubr.f32.mxu0 0.0
        %766 = vmatmul.mubr.f32.gmra.mxu0 %v699
        %v767 = vpop.f32.mrf.mxu0
        %v768 = vadd.f32 0.0, %v767
        %v769 = vpop.f32.mrf.mxu0
        %770 = vdwg.mxu0
        %v771 = vadd.f32 %v535, %v768
        %772 = vrot.lane.b32.xlu0 %v523, 120
        %v773 = vpop.permute.xlu0 %772
        %774 = vrot.lane.b32.xlu0 %v515, 120
        %v775 = vpop.permute.xlu0 %774
        %v776 = vsel %vm536, %v773, 0
        %v778 = vsel %vm536, %v775, 0
        %780 = vmatprep.subr.mxu0 0.0
        %781 = vmatpush1.xpose.msra.mxu0 0.0
        %782 = vmatprep.subr.mxu0 0.0
        %783 = vmatpush1.xpose.msra.mxu0 0.0
        %784 = vmatprep.subr.mxu0 0.0
        %785 = vmatpush1.xpose.msra.mxu0 0.0
        %786 = vmatprep.subr.mxu0 0.0
        %787 = vmatpush1.xpose.msra.mxu0 0.0
        %788 = vmatprep.subr.mxu0 0.0
        %789 = vmatpush1.xpose.msra.mxu0 0.0
        %790 = vmatprep.subr.mxu0 0.0
        %791 = vmatpush1.xpose.msra.mxu0 0.0
        %792 = vmatprep.subr.mxu0 0.0
        %793 = vmatpush1.xpose.msra.mxu0 0.0
        %794 = vmatprep.subr.mxu0 0.0
        %795 = vmatpush1.xpose.msra.mxu0 0.0
        %796 = vmatprep.subr.mxu0 0.0
        %797 = vmatpush1.xpose.msra.mxu0 0.0
        %798 = vmatprep.subr.mxu0 0.0
        %799 = vmatpush1.xpose.msra.mxu0 0.0
        %800 = vmatprep.subr.mxu0 0.0
        %801 = vmatpush1.xpose.msra.mxu0 0.0
        %802 = vmatprep.subr.mxu0 0.0
        %803 = vmatpush1.xpose.msra.mxu0 0.0
        %804 = vmatprep.subr.mxu0 0.0
        %805 = vmatpush1.xpose.msra.mxu0 0.0
        %806 = vmatprep.subr.mxu0 0.0
        %807 = vmatpush1.xpose.msra.mxu0 0.0
        %808 = vmatprep.subr.mxu0 0.0
        %809 = vmatpush1.xpose.msra.mxu0 0.0
        %810 = vmatprep.subr.mxu0 0.0
        %811 = vmatpush1.xpose.msra.mxu0 %v778
        %812 = vmatprep.subr.mxu0 0.0
        %813 = vmatpush2.xpose.msra.mxu0 0.0
        %814 = vmatprep.subr.mxu0 0.0
        %815 = vmatpush2.xpose.msra.mxu0 0.0
        %816 = vmatprep.subr.mxu0 0.0
        %817 = vmatpush2.xpose.msra.mxu0 0.0
        %818 = vmatprep.subr.mxu0 0.0
        %819 = vmatpush2.xpose.msra.mxu0 0.0
        %820 = vmatprep.subr.mxu0 0.0
        %821 = vmatpush2.xpose.msra.mxu0 0.0
        %822 = vmatprep.subr.mxu0 0.0
        %823 = vmatpush2.xpose.msra.mxu0 0.0
        %824 = vmatprep.subr.mxu0 0.0
        %825 = vmatpush2.xpose.msra.mxu0 0.0
        %826 = vmatprep.subr.mxu0 0.0
        %827 = vmatpush2.xpose.msra.mxu0 0.0
        %828 = vmatprep.subr.mxu0 0.0
        %829 = vmatpush2.xpose.msra.mxu0 0.0
        %830 = vmatprep.subr.mxu0 0.0
        %831 = vmatpush2.xpose.msra.mxu0 0.0
        %832 = vmatprep.subr.mxu0 0.0
        %833 = vmatpush2.xpose.msra.mxu0 0.0
        %834 = vmatprep.subr.mxu0 0.0
        %835 = vmatpush2.xpose.msra.mxu0 0.0
        %836 = vmatprep.subr.mxu0 0.0
        %837 = vmatpush2.xpose.msra.mxu0 0.0
        %838 = vmatprep.subr.mxu0 0.0
        %839 = vmatpush2.xpose.msra.mxu0 0.0
        %840 = vmatprep.subr.mxu0 0.0
        %841 = vmatpush2.xpose.msra.mxu0 0.0
        %842 = vmatprep.subr.mxu0 0.0
        %843 = vmatpush2.xpose.msra.mxu0 0.0
        %844 = vmatprep.mubr.f32.mxu0 0.0
        %845 = vmatmul.mubr.f32.gmra.mxu0 %v776
        %v846 = vpop.f32.mrf.mxu0
        %v847 = vadd.f32 0.0, %v846
        %v848 = vpop.f32.mrf.mxu0
        %849 = vdwg.mxu0
        %v850 = vsel %vm522, %v847, -1e+30
        %v851 = vsel %vm536, %v850, -inf
        %852 = vmax.xlane.f32.xlu0 %v851
        %v853 = vpop.xlane.xlu0 %852
        %v854 = vsub.f32 %v850, %v853
        %v855 = vmul.f32 %v854, 1.442695
        %v856 = vpow.pop %v855
        %v857 = vsel %vm536, %v856, 0.0
        %858 = vadd.xlane.f32.xlu0 %v857
        %v859 = vpop.xlane.xlu0 %858
        %v860 = vrcp.pop %v859
        %v861 = vmul.f32 %v856, %v860
        %v864 = vsel %vm536, %v861, 0
        %866 = vmatprep.subr.mxu0 0.0
        %867 = vmatpush1.msra.mxu0 0.0
        %868 = vmatprep.subr.mxu0 0.0
        %869 = vmatpush1.msra.mxu0 0.0
        %870 = vmatprep.subr.mxu0 0.0
        %871 = vmatpush1.msra.mxu0 0.0
        %872 = vmatprep.subr.mxu0 0.0
        %873 = vmatpush1.msra.mxu0 0.0
        %874 = vmatprep.subr.mxu0 0.0
        %875 = vmatpush1.msra.mxu0 0.0
        %876 = vmatprep.subr.mxu0 0.0
        %877 = vmatpush1.msra.mxu0 0.0
        %878 = vmatprep.subr.mxu0 0.0
        %879 = vmatpush1.msra.mxu0 0.0
        %880 = vmatprep.subr.mxu0 0.0
        %881 = vmatpush1.msra.mxu0 0.0
        %882 = vmatprep.subr.mxu0 0.0
        %883 = vmatpush1.msra.mxu0 0.0
        %884 = vmatprep.subr.mxu0 0.0
        %885 = vmatpush1.msra.mxu0 0.0
        %886 = vmatprep.subr.mxu0 0.0
        %887 = vmatpush1.msra.mxu0 0.0
        %888 = vmatprep.subr.mxu0 0.0
        %889 = vmatpush1.msra.mxu0 0.0
        %890 = vmatprep.subr.mxu0 0.0
        %891 = vmatpush1.msra.mxu0 0.0
        %892 = vmatprep.subr.mxu0 0.0
        %893 = vmatpush1.msra.mxu0 0.0
        %894 = vmatprep.subr.mxu0 0.0
        %895 = vmatpush1.msra.mxu0 0.0
        %896 = vmatprep.subr.mxu0 0.0
        %897 = vmatpush1.msra.mxu0 %v775
        %898 = vmatprep.subr.mxu0 0.0
        %899 = vmatpush2.msra.mxu0 0.0
        %900 = vmatprep.subr.mxu0 0.0
        %901 = vmatpush2.msra.mxu0 0.0
        %902 = vmatprep.subr.mxu0 0.0
        %903 = vmatpush2.msra.mxu0 0.0
        %904 = vmatprep.subr.mxu0 0.0
        %905 = vmatpush2.msra.mxu0 0.0
        %906 = vmatprep.subr.mxu0 0.0
        %907 = vmatpush2.msra.mxu0 0.0
        %908 = vmatprep.subr.mxu0 0.0
        %909 = vmatpush2.msra.mxu0 0.0
        %910 = vmatprep.subr.mxu0 0.0
        %911 = vmatpush2.msra.mxu0 0.0
        %912 = vmatprep.subr.mxu0 0.0
        %913 = vmatpush2.msra.mxu0 0.0
        %914 = vmatprep.subr.mxu0 0.0
        %915 = vmatpush2.msra.mxu0 0.0
        %916 = vmatprep.subr.mxu0 0.0
        %917 = vmatpush2.msra.mxu0 0.0
        %918 = vmatprep.subr.mxu0 0.0
        %919 = vmatpush2.msra.mxu0 0.0
        %920 = vmatprep.subr.mxu0 0.0
        %921 = vmatpush2.msra.mxu0 0.0
        %922 = vmatprep.subr.mxu0 0.0
        %923 = vmatpush2.msra.mxu0 0.0
        %924 = vmatprep.subr.mxu0 0.0
        %925 = vmatpush2.msra.mxu0 0.0
        %926 = vmatprep.subr.mxu0 0.0
        %927 = vmatpush2.msra.mxu0 0.0
        %928 = vmatprep.subr.mxu0 0.0
        %929 = vmatpush2.msra.mxu0 0.0
        %930 = vmatprep.mubr.f32.mxu0 0.0
        %931 = vmatmul.mubr.f32.gmra.mxu0 %v864
        %v932 = vpop.f32.mrf.mxu0
        %v933 = vadd.f32 0.0, %v932
        %v934 = vpop.f32.mrf.mxu0
        %935 = vdwg.mxu0
        %v937 = vsel %vm536, %v933, 0
        %939 = vmatprep.subr.mxu0 0.0
        %940 = vmatpush1.msra.mxu0 0.0
        %941 = vmatprep.subr.mxu0 0.0
        %942 = vmatpush1.msra.mxu0 0.0
        %943 = vmatprep.subr.mxu0 0.0
        %944 = vmatpush1.msra.mxu0 0.0
        %945 = vmatprep.subr.mxu0 0.0
        %946 = vmatpush1.msra.mxu0 0.0
        %947 = vmatprep.subr.mxu0 0.0
        %948 = vmatpush1.msra.mxu0 0.0
        %949 = vmatprep.subr.mxu0 0.0
        %950 = vmatpush1.msra.mxu0 0.0
        %951 = vmatprep.subr.mxu0 0.0
        %952 = vmatpush1.msra.mxu0 0.0
        %953 = vmatprep.subr.mxu0 0.0
        %954 = vmatpush1.msra.mxu0 0.0
        %955 = vmatprep.subr.mxu0 0.0
        %956 = vmatpush1.msra.mxu0 0.0
        %957 = vmatprep.subr.mxu0 0.0
        %958 = vmatpush1.msra.mxu0 0.0
        %959 = vmatprep.subr.mxu0 0.0
        %960 = vmatpush1.msra.mxu0 0.0
        %961 = vmatprep.subr.mxu0 0.0
        %962 = vmatpush1.msra.mxu0 0.0
        %963 = vmatprep.subr.mxu0 0.0
        %964 = vmatpush1.msra.mxu0 0.0
        %965 = vmatprep.subr.mxu0 0.0
        %966 = vmatpush1.msra.mxu0 0.0
        %967 = vmatprep.subr.mxu0 0.0
        %968 = vmatpush1.msra.mxu0 0.0
        %969 = vmatprep.subr.mxu0 0.0
        %970 = vmatpush1.msra.mxu0 %v525
        %971 = vmatprep.subr.mxu0 0.0
        %972 = vmatpush2.msra.mxu0 0.0
        %973 = vmatprep.subr.mxu0 0.0
        %974 = vmatpush2.msra.mxu0 0.0
        %975 = vmatprep.subr.mxu0 0.0
        %976 = vmatpush2.msra.mxu0 0.0
        %977 = vmatprep.subr.mxu0 0.0
        %978 = vmatpush2.msra.mxu0 0.0
        %979 = vmatprep.subr.mxu0 0.0
        %980 = vmatpush2.msra.mxu0 0.0
        %981 = vmatprep.subr.mxu0 0.0
        %982 = vmatpush2.msra.mxu0 0.0
        %983 = vmatprep.subr.mxu0 0.0
        %984 = vmatpush2.msra.mxu0 0.0
        %985 = vmatprep.subr.mxu0 0.0
        %986 = vmatpush2.msra.mxu0 0.0
        %987 = vmatprep.subr.mxu0 0.0
        %988 = vmatpush2.msra.mxu0 0.0
        %989 = vmatprep.subr.mxu0 0.0
        %990 = vmatpush2.msra.mxu0 0.0
        %991 = vmatprep.subr.mxu0 0.0
        %992 = vmatpush2.msra.mxu0 0.0
        %993 = vmatprep.subr.mxu0 0.0
        %994 = vmatpush2.msra.mxu0 0.0
        %995 = vmatprep.subr.mxu0 0.0
        %996 = vmatpush2.msra.mxu0 0.0
        %997 = vmatprep.subr.mxu0 0.0
        %998 = vmatpush2.msra.mxu0 0.0
        %999 = vmatprep.subr.mxu0 0.0
        %1000 = vmatpush2.msra.mxu0 0.0
        %1001 = vmatprep.subr.mxu0 0.0
        %1002 = vmatpush2.msra.mxu0 0.0
        %1003 = vmatprep.mubr.f32.mxu0 0.0
        %1004 = vmatmul.mubr.f32.gmra.mxu0 %v937
        %v1005 = vpop.f32.mrf.mxu0
        %v1006 = vadd.f32 0.0, %v1005
        %v1007 = vpop.f32.mrf.mxu0
        %1008 = vdwg.mxu0
        %v1009 = vadd.f32 %v771, %v1006
        %1010 = vrot.lane.b32.xlu0 %v523, 112
        %v1011 = vpop.permute.xlu0 %1010
        %1012 = vrot.lane.b32.xlu0 %v515, 112
        %v1013 = vpop.permute.xlu0 %1012
        %v1014 = vsel %vm536, %v1011, 0
        %v1016 = vsel %vm536, %v1013, 0
        %1018 = vmatprep.subr.mxu0 0.0
        %1019 = vmatpush1.xpose.msra.mxu0 0.0
        %1020 = vmatprep.subr.mxu0 0.0
        %1021 = vmatpush1.xpose.msra.mxu0 0.0
        %1022 = vmatprep.subr.mxu0 0.0
        %1023 = vmatpush1.xpose.msra.mxu0 0.0
        %1024 = vmatprep.subr.mxu0 0.0
        %1025 = vmatpush1.xpose.msra.mxu0 0.0
        %1026 = vmatprep.subr.mxu0 0.0
        %1027 = vmatpush1.xpose.msra.mxu0 0.0
        %1028 = vmatprep.subr.mxu0 0.0
        %1029 = vmatpush1.xpose.msra.mxu0 0.0
        %1030 = vmatprep.subr.mxu0 0.0
        %1031 = vmatpush1.xpose.msra.mxu0 0.0
        %1032 = vmatprep.subr.mxu0 0.0
        %1033 = vmatpush1.xpose.msra.mxu0 0.0
        %1034 = vmatprep.subr.mxu0 0.0
        %1035 = vmatpush1.xpose.msra.mxu0 0.0
        %1036 = vmatprep.subr.mxu0 0.0
        %1037 = vmatpush1.xpose.msra.mxu0 0.0
        %1038 = vmatprep.subr.mxu0 0.0
        %1039 = vmatpush1.xpose.msra.mxu0 0.0
        %1040 = vmatprep.subr.mxu0 0.0
        %1041 = vmatpush1.xpose.msra.mxu0 0.0
        %1042 = vmatprep.subr.mxu0 0.0
        %1043 = vmatpush1.xpose.msra.mxu0 0.0
        %1044 = vmatprep.subr.mxu0 0.0
        %1045 = vmatpush1.xpose.msra.mxu0 0.0
        %1046 = vmatprep.subr.mxu0 0.0
        %1047 = vmatpush1.xpose.msra.mxu0 0.0
        %1048 = vmatprep.subr.mxu0 0.0
        %1049 = vmatpush1.xpose.msra.mxu0 %v1016
        %1050 = vmatprep.subr.mxu0 0.0
        %1051 = vmatpush2.xpose.msra.mxu0 0.0
        %1052 = vmatprep.subr.mxu0 0.0
        %1053 = vmatpush2.xpose.msra.mxu0 0.0
        %1054 = vmatprep.subr.mxu0 0.0
        %1055 = vmatpush2.xpose.msra.mxu0 0.0
        %1056 = vmatprep.subr.mxu0 0.0
        %1057 = vmatpush2.xpose.msra.mxu0 0.0
        %1058 = vmatprep.subr.mxu0 0.0
        %1059 = vmatpush2.xpose.msra.mxu0 0.0
        %1060 = vmatprep.subr.mxu0 0.0
        %1061 = vmatpush2.xpose.msra.mxu0 0.0
        %1062 = vmatprep.subr.mxu0 0.0
        %1063 = vmatpush2.xpose.msra.mxu0 0.0
        %1064 = vmatprep.subr.mxu0 0.0
        %1065 = vmatpush2.xpose.msra.mxu0 0.0
        %1066 = vmatprep.subr.mxu0 0.0
        %1067 = vmatpush2.xpose.msra.mxu0 0.0
        %1068 = vmatprep.subr.mxu0 0.0
        %1069 = vmatpush2.xpose.msra.mxu0 0.0
        %1070 = vmatprep.subr.mxu0 0.0
        %1071 = vmatpush2.xpose.msra.mxu0 0.0
        %1072 = vmatprep.subr.mxu0 0.0
        %1073 = vmatpush2.xpose.msra.mxu0 0.0
        %1074 = vmatprep.subr.mxu0 0.0
        %1075 = vmatpush2.xpose.msra.mxu0 0.0
        %1076 = vmatprep.subr.mxu0 0.0
        %1077 = vmatpush2.xpose.msra.mxu0 0.0
        %1078 = vmatprep.subr.mxu0 0.0
        %1079 = vmatpush2.xpose.msra.mxu0 0.0
        %1080 = vmatprep.subr.mxu0 0.0
        %1081 = vmatpush2.xpose.msra.mxu0 0.0
        %1082 = vmatprep.mubr.f32.mxu0 0.0
        %1083 = vmatmul.mubr.f32.gmra.mxu0 %v1014
        %v1084 = vpop.f32.mrf.mxu0
        %v1085 = vadd.f32 0.0, %v1084
        %v1086 = vpop.f32.mrf.mxu0
        %1087 = vdwg.mxu0
        %v1088 = vsel %vm522, %v1085, -1e+30
        %v1089 = vsel %vm536, %v1088, -inf
        %1090 = vmax.xlane.f32.xlu0 %v1089
        %v1091 = vpop.xlane.xlu0 %1090
        %v1092 = vsub.f32 %v1088, %v1091
        %v1093 = vmul.f32 %v1092, 1.442695
        %v1094 = vpow.pop %v1093
        %v1095 = vsel %vm536, %v1094, 0.0
        %1096 = vadd.xlane.f32.xlu0 %v1095
        %v1097 = vpop.xlane.xlu0 %1096
        %v1098 = vrcp.pop %v1097
        %v1099 = vmul.f32 %v1094, %v1098
        %v1102 = vsel %vm536, %v1099, 0
        %1104 = vmatprep.subr.mxu0 0.0
        %1105 = vmatpush1.msra.mxu0 0.0
        %1106 = vmatprep.subr.mxu0 0.0
        %1107 = vmatpush1.msra.mxu0 0.0
        %1108 = vmatprep.subr.mxu0 0.0
        %1109 = vmatpush1.msra.mxu0 0.0
        %1110 = vmatprep.subr.mxu0 0.0
        %1111 = vmatpush1.msra.mxu0 0.0
        %1112 = vmatprep.subr.mxu0 0.0
        %1113 = vmatpush1.msra.mxu0 0.0
        %1114 = vmatprep.subr.mxu0 0.0
        %1115 = vmatpush1.msra.mxu0 0.0
        %1116 = vmatprep.subr.mxu0 0.0
        %1117 = vmatpush1.msra.mxu0 0.0
        %1118 = vmatprep.subr.mxu0 0.0
        %1119 = vmatpush1.msra.mxu0 0.0
        %1120 = vmatprep.subr.mxu0 0.0
        %1121 = vmatpush1.msra.mxu0 0.0
        %1122 = vmatprep.subr.mxu0 0.0
        %1123 = vmatpush1.msra.mxu0 0.0
        %1124 = vmatprep.subr.mxu0 0.0
        %1125 = vmatpush1.msra.mxu0 0.0
        %1126 = vmatprep.subr.mxu0 0.0
        %1127 = vmatpush1.msra.mxu0 0.0
        %1128 = vmatprep.subr.mxu0 0.0
        %1129 = vmatpush1.msra.mxu0 0.0
        %1130 = vmatprep.subr.mxu0 0.0
        %1131 = vmatpush1.msra.mxu0 0.0
        %1132 = vmatprep.subr.mxu0 0.0
        %1133 = vmatpush1.msra.mxu0 0.0
        %1134 = vmatprep.subr.mxu0 0.0
        %1135 = vmatpush1.msra.mxu0 %v1013
        %1136 = vmatprep.subr.mxu0 0.0
        %1137 = vmatpush2.msra.mxu0 0.0
        %1138 = vmatprep.subr.mxu0 0.0
        %1139 = vmatpush2.msra.mxu0 0.0
        %1140 = vmatprep.subr.mxu0 0.0
        %1141 = vmatpush2.msra.mxu0 0.0
        %1142 = vmatprep.subr.mxu0 0.0
        %1143 = vmatpush2.msra.mxu0 0.0
        %1144 = vmatprep.subr.mxu0 0.0
        %1145 = vmatpush2.msra.mxu0 0.0
        %1146 = vmatprep.subr.mxu0 0.0
        %1147 = vmatpush2.msra.mxu0 0.0
        %1148 = vmatprep.subr.mxu0 0.0
        %1149 = vmatpush2.msra.mxu0 0.0
        %1150 = vmatprep.subr.mxu0 0.0
        %1151 = vmatpush2.msra.mxu0 0.0
        %1152 = vmatprep.subr.mxu0 0.0
        %1153 = vmatpush2.msra.mxu0 0.0
        %1154 = vmatprep.subr.mxu0 0.0
        %1155 = vmatpush2.msra.mxu0 0.0
        %1156 = vmatprep.subr.mxu0 0.0
        %1157 = vmatpush2.msra.mxu0 0.0
        %1158 = vmatprep.subr.mxu0 0.0
        %1159 = vmatpush2.msra.mxu0 0.0
        %1160 = vmatprep.subr.mxu0 0.0
        %1161 = vmatpush2.msra.mxu0 0.0
        %1162 = vmatprep.subr.mxu0 0.0
        %1163 = vmatpush2.msra.mxu0 0.0
        %1164 = vmatprep.subr.mxu0 0.0
        %1165 = vmatpush2.msra.mxu0 0.0
        %1166 = vmatprep.subr.mxu0 0.0
        %1167 = vmatpush2.msra.mxu0 0.0
        %1168 = vmatprep.mubr.f32.mxu0 0.0
        %1169 = vmatmul.mubr.f32.gmra.mxu0 %v1102
        %v1170 = vpop.f32.mrf.mxu0
        %v1171 = vadd.f32 0.0, %v1170
        %v1172 = vpop.f32.mrf.mxu0
        %1173 = vdwg.mxu0
        %v1175 = vsel %vm536, %v1171, 0
        %1177 = vmatprep.subr.mxu0 0.0
        %1178 = vmatpush1.msra.mxu0 0.0
        %1179 = vmatprep.subr.mxu0 0.0
        %1180 = vmatpush1.msra.mxu0 0.0
        %1181 = vmatprep.subr.mxu0 0.0
        %1182 = vmatpush1.msra.mxu0 0.0
        %1183 = vmatprep.subr.mxu0 0.0
        %1184 = vmatpush1.msra.mxu0 0.0
        %1185 = vmatprep.subr.mxu0 0.0
        %1186 = vmatpush1.msra.mxu0 0.0
        %1187 = vmatprep.subr.mxu0 0.0
        %1188 = vmatpush1.msra.mxu0 0.0
        %1189 = vmatprep.subr.mxu0 0.0
        %1190 = vmatpush1.msra.mxu0 0.0
        %1191 = vmatprep.subr.mxu0 0.0
        %1192 = vmatpush1.msra.mxu0 0.0
        %1193 = vmatprep.subr.mxu0 0.0
        %1194 = vmatpush1.msra.mxu0 0.0
        %1195 = vmatprep.subr.mxu0 0.0
        %1196 = vmatpush1.msra.mxu0 0.0
        %1197 = vmatprep.subr.mxu0 0.0
        %1198 = vmatpush1.msra.mxu0 0.0
        %1199 = vmatprep.subr.mxu0 0.0
        %1200 = vmatpush1.msra.mxu0 0.0
        %1201 = vmatprep.subr.mxu0 0.0
        %1202 = vmatpush1.msra.mxu0 0.0
        %1203 = vmatprep.subr.mxu0 0.0
        %1204 = vmatpush1.msra.mxu0 0.0
        %1205 = vmatprep.subr.mxu0 0.0
        %1206 = vmatpush1.msra.mxu0 0.0
        %1207 = vmatprep.subr.mxu0 0.0
        %1208 = vmatpush1.msra.mxu0 %v526
        %1209 = vmatprep.subr.mxu0 0.0
        %1210 = vmatpush2.msra.mxu0 0.0
        %1211 = vmatprep.subr.mxu0 0.0
        %1212 = vmatpush2.msra.mxu0 0.0
        %1213 = vmatprep.subr.mxu0 0.0
        %1214 = vmatpush2.msra.mxu0 0.0
        %1215 = vmatprep.subr.mxu0 0.0
        %1216 = vmatpush2.msra.mxu0 0.0
        %1217 = vmatprep.subr.mxu0 0.0
        %1218 = vmatpush2.msra.mxu0 0.0
        %1219 = vmatprep.subr.mxu0 0.0
        %1220 = vmatpush2.msra.mxu0 0.0
        %1221 = vmatprep.subr.mxu0 0.0
        %1222 = vmatpush2.msra.mxu0 0.0
        %1223 = vmatprep.subr.mxu0 0.0
        %1224 = vmatpush2.msra.mxu0 0.0
        %1225 = vmatprep.subr.mxu0 0.0
        %1226 = vmatpush2.msra.mxu0 0.0
        %1227 = vmatprep.subr.mxu0 0.0
        %1228 = vmatpush2.msra.mxu0 0.0
        %1229 = vmatprep.subr.mxu0 0.0
        %1230 = vmatpush2.msra.mxu0 0.0
        %1231 = vmatprep.subr.mxu0 0.0
        %1232 = vmatpush2.msra.mxu0 0.0
        %1233 = vmatprep.subr.mxu0 0.0
        %1234 = vmatpush2.msra.mxu0 0.0
        %1235 = vmatprep.subr.mxu0 0.0
        %1236 = vmatpush2.msra.mxu0 0.0
        %1237 = vmatprep.subr.mxu0 0.0
        %1238 = vmatpush2.msra.mxu0 0.0
        %1239 = vmatprep.subr.mxu0 0.0
        %1240 = vmatpush2.msra.mxu0 0.0
        %1241 = vmatprep.mubr.f32.mxu0 0.0
        %1242 = vmatmul.mubr.f32.gmra.mxu0 %v1175
        %v1243 = vpop.f32.mrf.mxu0
        %v1244 = vadd.f32 0.0, %v1243
        %v1245 = vpop.f32.mrf.mxu0
        %1246 = vdwg.mxu0
        %v1247 = vadd.f32 %v1009, %v1244
        %1248 = vrot.lane.b32.xlu0 %v523, 104
        %v1249 = vpop.permute.xlu0 %1248
        %1250 = vrot.lane.b32.xlu0 %v515, 104
        %v1251 = vpop.permute.xlu0 %1250
        %v1252 = vsel %vm536, %v1249, 0
        %v1254 = vsel %vm536, %v1251, 0
        %1256 = vmatprep.subr.mxu0 0.0
        %1257 = vmatpush1.xpose.msra.mxu0 0.0
        %1258 = vmatprep.subr.mxu0 0.0
        %1259 = vmatpush1.xpose.msra.mxu0 0.0
        %1260 = vmatprep.subr.mxu0 0.0
        %1261 = vmatpush1.xpose.msra.mxu0 0.0
        %1262 = vmatprep.subr.mxu0 0.0
        %1263 = vmatpush1.xpose.msra.mxu0 0.0
        %1264 = vmatprep.subr.mxu0 0.0
        %1265 = vmatpush1.xpose.msra.mxu0 0.0
        %1266 = vmatprep.subr.mxu0 0.0
        %1267 = vmatpush1.xpose.msra.mxu0 0.0
        %1268 = vmatprep.subr.mxu0 0.0
        %1269 = vmatpush1.xpose.msra.mxu0 0.0
        %1270 = vmatprep.subr.mxu0 0.0
        %1271 = vmatpush1.xpose.msra.mxu0 0.0
        %1272 = vmatprep.subr.mxu0 0.0
        %1273 = vmatpush1.xpose.msra.mxu0 0.0
        %1274 = vmatprep.subr.mxu0 0.0
        %1275 = vmatpush1.xpose.msra.mxu0 0.0
        %1276 = vmatprep.subr.mxu0 0.0
        %1277 = vmatpush1.xpose.msra.mxu0 0.0
        %1278 = vmatprep.subr.mxu0 0.0
        %1279 = vmatpush1.xpose.msra.mxu0 0.0
        %1280 = vmatprep.subr.mxu0 0.0
        %1281 = vmatpush1.xpose.msra.mxu0 0.0
        %1282 = vmatprep.subr.mxu0 0.0
        %1283 = vmatpush1.xpose.msra.mxu0 0.0
        %1284 = vmatprep.subr.mxu0 0.0
        %1285 = vmatpush1.xpose.msra.mxu0 0.0
        %1286 = vmatprep.subr.mxu0 0.0
        %1287 = vmatpush1.xpose.msra.mxu0 %v1254
        %1288 = vmatprep.subr.mxu0 0.0
        %1289 = vmatpush2.xpose.msra.mxu0 0.0
        %1290 = vmatprep.subr.mxu0 0.0
        %1291 = vmatpush2.xpose.msra.mxu0 0.0
        %1292 = vmatprep.subr.mxu0 0.0
        %1293 = vmatpush2.xpose.msra.mxu0 0.0
        %1294 = vmatprep.subr.mxu0 0.0
        %1295 = vmatpush2.xpose.msra.mxu0 0.0
        %1296 = vmatprep.subr.mxu0 0.0
        %1297 = vmatpush2.xpose.msra.mxu0 0.0
        %1298 = vmatprep.subr.mxu0 0.0
        %1299 = vmatpush2.xpose.msra.mxu0 0.0
        %1300 = vmatprep.subr.mxu0 0.0
        %1301 = vmatpush2.xpose.msra.mxu0 0.0
        %1302 = vmatprep.subr.mxu0 0.0
        %1303 = vmatpush2.xpose.msra.mxu0 0.0
        %1304 = vmatprep.subr.mxu0 0.0
        %1305 = vmatpush2.xpose.msra.mxu0 0.0
        %1306 = vmatprep.subr.mxu0 0.0
        %1307 = vmatpush2.xpose.msra.mxu0 0.0
        %1308 = vmatprep.subr.mxu0 0.0
        %1309 = vmatpush2.xpose.msra.mxu0 0.0
        %1310 = vmatprep.subr.mxu0 0.0
        %1311 = vmatpush2.xpose.msra.mxu0 0.0
        %1312 = vmatprep.subr.mxu0 0.0
        %1313 = vmatpush2.xpose.msra.mxu0 0.0
        %1314 = vmatprep.subr.mxu0 0.0
        %1315 = vmatpush2.xpose.msra.mxu0 0.0
        %1316 = vmatprep.subr.mxu0 0.0
        %1317 = vmatpush2.xpose.msra.mxu0 0.0
        %1318 = vmatprep.subr.mxu0 0.0
        %1319 = vmatpush2.xpose.msra.mxu0 0.0
        %1320 = vmatprep.mubr.f32.mxu0 0.0
        %1321 = vmatmul.mubr.f32.gmra.mxu0 %v1252
        %v1322 = vpop.f32.mrf.mxu0
        %v1323 = vadd.f32 0.0, %v1322
        %v1324 = vpop.f32.mrf.mxu0
        %1325 = vdwg.mxu0
        %v1326 = vsel %vm522, %v1323, -1e+30
        %v1327 = vsel %vm536, %v1326, -inf
        %1328 = vmax.xlane.f32.xlu0 %v1327
        %v1329 = vpop.xlane.xlu0 %1328
        %v1330 = vsub.f32 %v1326, %v1329
        %v1331 = vmul.f32 %v1330, 1.442695
        %v1332 = vpow.pop %v1331
        %v1333 = vsel %vm536, %v1332, 0.0
        %1334 = vadd.xlane.f32.xlu0 %v1333
        %v1335 = vpop.xlane.xlu0 %1334
        %v1336 = vrcp.pop %v1335
        %v1337 = vmul.f32 %v1332, %v1336
        %v1340 = vsel %vm536, %v1337, 0
        %1342 = vmatprep.subr.mxu0 0.0
        %1343 = vmatpush1.msra.mxu0 0.0
        %1344 = vmatprep.subr.mxu0 0.0
        %1345 = vmatpush1.msra.mxu0 0.0
        %1346 = vmatprep.subr.mxu0 0.0
        %1347 = vmatpush1.msra.mxu0 0.0
        %1348 = vmatprep.subr.mxu0 0.0
        %1349 = vmatpush1.msra.mxu0 0.0
        %1350 = vmatprep.subr.mxu0 0.0
        %1351 = vmatpush1.msra.mxu0 0.0
        %1352 = vmatprep.subr.mxu0 0.0
        %1353 = vmatpush1.msra.mxu0 0.0
        %1354 = vmatprep.subr.mxu0 0.0
        %1355 = vmatpush1.msra.mxu0 0.0
        %1356 = vmatprep.subr.mxu0 0.0
        %1357 = vmatpush1.msra.mxu0 0.0
        %1358 = vmatprep.subr.mxu0 0.0
        %1359 = vmatpush1.msra.mxu0 0.0
        %1360 = vmatprep.subr.mxu0 0.0
        %1361 = vmatpush1.msra.mxu0 0.0
        %1362 = vmatprep.subr.mxu0 0.0
        %1363 = vmatpush1.msra.mxu0 0.0
        %1364 = vmatprep.subr.mxu0 0.0
        %1365 = vmatpush1.msra.mxu0 0.0
        %1366 = vmatprep.subr.mxu0 0.0
        %1367 = vmatpush1.msra.mxu0 0.0
        %1368 = vmatprep.subr.mxu0 0.0
        %1369 = vmatpush1.msra.mxu0 0.0
        %1370 = vmatprep.subr.mxu0 0.0
        %1371 = vmatpush1.msra.mxu0 0.0
        %1372 = vmatprep.subr.mxu0 0.0
        %1373 = vmatpush1.msra.mxu0 %v1251
        %1374 = vmatprep.subr.mxu0 0.0
        %1375 = vmatpush2.msra.mxu0 0.0
        %1376 = vmatprep.subr.mxu0 0.0
        %1377 = vmatpush2.msra.mxu0 0.0
        %1378 = vmatprep.subr.mxu0 0.0
        %1379 = vmatpush2.msra.mxu0 0.0
        %1380 = vmatprep.subr.mxu0 0.0
        %1381 = vmatpush2.msra.mxu0 0.0
        %1382 = vmatprep.subr.mxu0 0.0
        %1383 = vmatpush2.msra.mxu0 0.0
        %1384 = vmatprep.subr.mxu0 0.0
        %1385 = vmatpush2.msra.mxu0 0.0
        %1386 = vmatprep.subr.mxu0 0.0
        %1387 = vmatpush2.msra.mxu0 0.0
        %1388 = vmatprep.subr.mxu0 0.0
        %1389 = vmatpush2.msra.mxu0 0.0
        %1390 = vmatprep.subr.mxu0 0.0
        %1391 = vmatpush2.msra.mxu0 0.0
        %1392 = vmatprep.subr.mxu0 0.0
        %1393 = vmatpush2.msra.mxu0 0.0
        %1394 = vmatprep.subr.mxu0 0.0
        %1395 = vmatpush2.msra.mxu0 0.0
        %1396 = vmatprep.subr.mxu0 0.0
        %1397 = vmatpush2.msra.mxu0 0.0
        %1398 = vmatprep.subr.mxu0 0.0
        %1399 = vmatpush2.msra.mxu0 0.0
        %1400 = vmatprep.subr.mxu0 0.0
        %1401 = vmatpush2.msra.mxu0 0.0
        %1402 = vmatprep.subr.mxu0 0.0
        %1403 = vmatpush2.msra.mxu0 0.0
        %1404 = vmatprep.subr.mxu0 0.0
        %1405 = vmatpush2.msra.mxu0 0.0
        %1406 = vmatprep.mubr.f32.mxu0 0.0
        %1407 = vmatmul.mubr.f32.gmra.mxu0 %v1340
        %v1408 = vpop.f32.mrf.mxu0
        %v1409 = vadd.f32 0.0, %v1408
        %v1410 = vpop.f32.mrf.mxu0
        %1411 = vdwg.mxu0
        %v1413 = vsel %vm536, %v1409, 0
        %1415 = vmatprep.subr.mxu0 0.0
        %1416 = vmatpush1.msra.mxu0 0.0
        %1417 = vmatprep.subr.mxu0 0.0
        %1418 = vmatpush1.msra.mxu0 0.0
        %1419 = vmatprep.subr.mxu0 0.0
        %1420 = vmatpush1.msra.mxu0 0.0
        %1421 = vmatprep.subr.mxu0 0.0
        %1422 = vmatpush1.msra.mxu0 0.0
        %1423 = vmatprep.subr.mxu0 0.0
        %1424 = vmatpush1.msra.mxu0 0.0
        %1425 = vmatprep.subr.mxu0 0.0
        %1426 = vmatpush1.msra.mxu0 0.0
        %1427 = vmatprep.subr.mxu0 0.0
        %1428 = vmatpush1.msra.mxu0 0.0
        %1429 = vmatprep.subr.mxu0 0.0
        %1430 = vmatpush1.msra.mxu0 0.0
        %1431 = vmatprep.subr.mxu0 0.0
        %1432 = vmatpush1.msra.mxu0 0.0
        %1433 = vmatprep.subr.mxu0 0.0
        %1434 = vmatpush1.msra.mxu0 0.0
        %1435 = vmatprep.subr.mxu0 0.0
        %1436 = vmatpush1.msra.mxu0 0.0
        %1437 = vmatprep.subr.mxu0 0.0
        %1438 = vmatpush1.msra.mxu0 0.0
        %1439 = vmatprep.subr.mxu0 0.0
        %1440 = vmatpush1.msra.mxu0 0.0
        %1441 = vmatprep.subr.mxu0 0.0
        %1442 = vmatpush1.msra.mxu0 0.0
        %1443 = vmatprep.subr.mxu0 0.0
        %1444 = vmatpush1.msra.mxu0 0.0
        %1445 = vmatprep.subr.mxu0 0.0
        %1446 = vmatpush1.msra.mxu0 %v527
        %1447 = vmatprep.subr.mxu0 0.0
        %1448 = vmatpush2.msra.mxu0 0.0
        %1449 = vmatprep.subr.mxu0 0.0
        %1450 = vmatpush2.msra.mxu0 0.0
        %1451 = vmatprep.subr.mxu0 0.0
        %1452 = vmatpush2.msra.mxu0 0.0
        %1453 = vmatprep.subr.mxu0 0.0
        %1454 = vmatpush2.msra.mxu0 0.0
        %1455 = vmatprep.subr.mxu0 0.0
        %1456 = vmatpush2.msra.mxu0 0.0
        %1457 = vmatprep.subr.mxu0 0.0
        %1458 = vmatpush2.msra.mxu0 0.0
        %1459 = vmatprep.subr.mxu0 0.0
        %1460 = vmatpush2.msra.mxu0 0.0
        %1461 = vmatprep.subr.mxu0 0.0
        %1462 = vmatpush2.msra.mxu0 0.0
        %1463 = vmatprep.subr.mxu0 0.0
        %1464 = vmatpush2.msra.mxu0 0.0
        %1465 = vmatprep.subr.mxu0 0.0
        %1466 = vmatpush2.msra.mxu0 0.0
        %1467 = vmatprep.subr.mxu0 0.0
        %1468 = vmatpush2.msra.mxu0 0.0
        %1469 = vmatprep.subr.mxu0 0.0
        %1470 = vmatpush2.msra.mxu0 0.0
        %1471 = vmatprep.subr.mxu0 0.0
        %1472 = vmatpush2.msra.mxu0 0.0
        %1473 = vmatprep.subr.mxu0 0.0
        %1474 = vmatpush2.msra.mxu0 0.0
        %1475 = vmatprep.subr.mxu0 0.0
        %1476 = vmatpush2.msra.mxu0 0.0
        %1477 = vmatprep.subr.mxu0 0.0
        %1478 = vmatpush2.msra.mxu0 0.0
        %1479 = vmatprep.mubr.f32.mxu0 0.0
        %1480 = vmatmul.mubr.f32.gmra.mxu0 %v1413
        %v1481 = vpop.f32.mrf.mxu0
        %v1482 = vadd.f32 0.0, %v1481
        %v1483 = vpop.f32.mrf.mxu0
        %1484 = vdwg.mxu0
        %v1485 = vadd.f32 %v1247, %v1482
        %v1486 = vadd.f32 %v409, %v1485
        %v1487 = vld [vmem:[%s6] sm:$0x1]
        %v1488 = vld [vmem:[%s7] sm:$0x1]
        %v1489 = vsel %vm412, %v1486, 0.0
        %1490 = vadd.xlane.f32.xlu0 %v1489
        %v1491 = vpop.xlane.xlu0 %1490
        %v1492 = vmul.f32 %v1491, %v416
        %v1493 = vsub.f32 %v1486, %v1492
        %v1494 = vmul.f32 %v1493, %v1493
        %v1495 = vsel %vm412, %v1494, 0.0
        %1496 = vadd.xlane.f32.xlu0 %v1495
        %v1497 = vpop.xlane.xlu0 %1496
        %v1498 = vmul.f32 %v1497, %v416
        %v1499 = vadd.f32 %v1498, 1e-05
        %v1500 = vrsqrt.pop %v1499
        %v1501 = vmul.f32 %v1493, %v1500
        %v1503 = vlaneseq
        %v1504 = vshrl.u32 %v1503, 7
        %v1505 = vsub.s32 0, %v1504
        %v1506 = vrot.slane %v1487, %v1505
        %v1508 = vmul.f32 %v1501, %v1506
        %v1510 = vlaneseq
        %v1511 = vshrl.u32 %v1510, 7
        %v1512 = vsub.s32 0, %v1511
        %v1513 = vrot.slane %v1488, %v1512
        %v1515 = vadd.f32 %v1508, %v1513
        %v1516 = vld [vmem:[%s8] sm:$0xff]
        %v1517 = vld [vmem:[%s8 + $0x8] sm:$0xff]
        %v1518 = vld [vmem:[%s8 + $0x10] sm:$0xff]
        %v1519 = vld [vmem:[%s8 + $0x18] sm:$0xff]
        %v1520 = vld [vmem:[%s9] sm:$0x1]
        %v1522 = vlaneseq
        %v1523 = vshrl.u32 %v1522, 7
        %v1524 = vsub.s32 0, %v1523
        %v1525 = vrot.slane %v1520, %v1524
        %v1528 = vsel %vm412, %v1515, 0
        %1530 = vmatprep.subr.mxu0 0.0
        %1531 = vmatpush1.msra.mxu0 0.0
        %1532 = vmatprep.subr.mxu0 0.0
        %1533 = vmatpush1.msra.mxu0 0.0
        %1534 = vmatprep.subr.mxu0 0.0
        %1535 = vmatpush1.msra.mxu0 0.0
        %1536 = vmatprep.subr.mxu0 0.0
        %1537 = vmatpush1.msra.mxu0 0.0
        %1538 = vmatprep.subr.mxu0 0.0
        %1539 = vmatpush1.msra.mxu0 0.0
        %1540 = vmatprep.subr.mxu0 0.0
        %1541 = vmatpush1.msra.mxu0 0.0
        %1542 = vmatprep.subr.mxu0 0.0
        %1543 = vmatpush1.msra.mxu0 0.0
        %1544 = vmatprep.subr.mxu0 0.0
        %1545 = vmatpush1.msra.mxu0 0.0
        %1546 = vmatprep.subr.mxu0 0.0
        %1547 = vmatpush1.msra.mxu0 0.0
        %1548 = vmatprep.subr.mxu0 0.0
        %1549 = vmatpush1.msra.mxu0 0.0
        %1550 = vmatprep.subr.mxu0 0.0
        %1551 = vmatpush1.msra.mxu0 0.0
        %1552 = vmatprep.subr.mxu0 0.0
        %1553 = vmatpush1.msra.mxu0 0.0
        %1554 = vmatprep.subr.mxu0 0.0
        %1555 = vmatpush1.msra.mxu0 %v1519
        %1556 = vmatprep.subr.mxu0 0.0
        %1557 = vmatpush1.msra.mxu0 %v1518
        %1558 = vmatprep.subr.mxu0 0.0
        %1559 = vmatpush1.msra.mxu0 %v1517
        %1560 = vmatprep.subr.mxu0 0.0
        %1561 = vmatpush1.msra.mxu0 %v1516
        %1562 = vmatprep.subr.mxu0 0.0
        %1563 = vmatpush2.msra.mxu0 0.0
        %1564 = vmatprep.subr.mxu0 0.0
        %1565 = vmatpush2.msra.mxu0 0.0
        %1566 = vmatprep.subr.mxu0 0.0
        %1567 = vmatpush2.msra.mxu0 0.0
        %1568 = vmatprep.subr.mxu0 0.0
        %1569 = vmatpush2.msra.mxu0 0.0
        %1570 = vmatprep.subr.mxu0 0.0
        %1571 = vmatpush2.msra.mxu0 0.0
        %1572 = vmatprep.subr.mxu0 0.0
        %1573 = vmatpush2.msra.mxu0 0.0
        %1574 = vmatprep.subr.mxu0 0.0
        %1575 = vmatpush2.msra.mxu0 0.0
        %1576 = vmatprep.subr.mxu0 0.0
        %1577 = vmatpush2.msra.mxu0 0.0
        %1578 = vmatprep.subr.mxu0 0.0
        %1579 = vmatpush2.msra.mxu0 0.0
        %1580 = vmatprep.subr.mxu0 0.0
        %1581 = vmatpush2.msra.mxu0 0.0
        %1582 = vmatprep.subr.mxu0 0.0
        %1583 = vmatpush2.msra.mxu0 0.0
        %1584 = vmatprep.subr.mxu0 0.0
        %1585 = vmatpush2.msra.mxu0 0.0
        %1586 = vmatprep.subr.mxu0 0.0
        %1587 = vmatpush2.msra.mxu0 0.0
        %1588 = vmatprep.subr.mxu0 0.0
        %1589 = vmatpush2.msra.mxu0 0.0
        %1590 = vmatprep.subr.mxu0 0.0
        %1591 = vmatpush2.msra.mxu0 0.0
        %1592 = vmatprep.subr.mxu0 0.0
        %1593 = vmatpush2.msra.mxu0 0.0
        %1594 = vmatprep.mubr.f32.mxu0 0.0
        %1595 = vmatmul.mubr.f32.gmra.mxu0 %v1528
        %v1596 = vpop.f32.mrf.mxu0
        %v1597 = vadd.f32 %v1525, %v1596
        %v1598 = vpop.f32.mrf.mxu0
        %1599 = vdwg.mxu0
        %v1600 = vmax.f32 %v1597, 0.0
        %v1601 = vld [vmem:[%s10] sm:$0xff]
        %v1602 = vld [vmem:[%s10 + $0x8] sm:$0xff]
        %v1603 = vld [vmem:[%s10 + $0x10] sm:$0xff]
        %v1604 = vld [vmem:[%s10 + $0x18] sm:$0xff]
        %v1605 = vld [vmem:[%s10 + $0x20] sm:$0xff]
        %v1606 = vld [vmem:[%s10 + $0x28] sm:$0xff]
        %v1607 = vld [vmem:[%s10 + $0x30] sm:$0xff]
        %v1608 = vld [vmem:[%s10 + $0x38] sm:$0xff]
        %v1609 = vld [vmem:[%s10 + $0x40] sm:$0xff]
        %v1610 = vld [vmem:[%s10 + $0x48] sm:$0xff]
        %v1611 = vld [vmem:[%s10 + $0x50] sm:$0xff]
        %v1612 = vld [vmem:[%s10 + $0x58] sm:$0xff]
        %v1613 = vld [vmem:[%s10 + $0x60] sm:$0xff]
        %v1614 = vld [vmem:[%s10 + $0x68] sm:$0xff]
        %v1615 = vld [vmem:[%s10 + $0x70] sm:$0xff]
        %v1616 = vld [vmem:[%s10 + $0x78] sm:$0xff]
        %v1617 = vld [vmem:[%s11] sm:$0x1]
        %v1619 = vlaneseq
        %v1620 = vshrl.u32 %v1619, 7
        %v1621 = vsub.s32 0, %v1620
        %v1622 = vrot.slane %v1617, %v1621
        %1624 = vmatprep.subr.mxu0 0.0
        %1625 = vmatpush1.msra.mxu0 %v1616
        %1626 = vmatprep.subr.mxu0 0.0
        %1627 = vmatpush1.msra.mxu0 %v1615
        %1628 = vmatprep.subr.mxu0 0.0
        %1629 = vmatpush1.msra.mxu0 %v1614
        %1630 = vmatprep.subr.mxu0 0.0
        %1631 = vmatpush1.msra.mxu0 %v1613
        %1632 = vmatprep.subr.mxu0 0.0
        %1633 = vmatpush1.msra.mxu0 %v1612
        %1634 = vmatprep.subr.mxu0 0.0
        %1635 = vmatpush1.msra.mxu0 %v1611
        %1636 = vmatprep.subr.mxu0 0.0
        %1637 = vmatpush1.msra.mxu0 %v1610
        %1638 = vmatprep.subr.mxu0 0.0
        %1639 = vmatpush1.msra.mxu0 %v1609
        %1640 = vmatprep.subr.mxu0 0.0
        %1641 = vmatpush1.msra.mxu0 %v1608
        %1642 = vmatprep.subr.mxu0 0.0
        %1643 = vmatpush1.msra.mxu0 %v1607
        %1644 = vmatprep.subr.mxu0 0.0
        %1645 = vmatpush1.msra.mxu0 %v1606
        %1646 = vmatprep.subr.mxu0 0.0
        %1647 = vmatpush1.msra.mxu0 %v1605
        %1648 = vmatprep.subr.mxu0 0.0
        %1649 = vmatpush1.msra.mxu0 %v1604
        %1650 = vmatprep.subr.mxu0 0.0
        %1651 = vmatpush1.msra.mxu0 %v1603
        %1652 = vmatprep.subr.mxu0 0.0
        %1653 = vmatpush1.msra.mxu0 %v1602
        %1654 = vmatprep.subr.mxu0 0.0
        %1655 = vmatpush1.msra.mxu0 %v1601
        %1656 = vmatprep.subr.mxu0 0.0
        %1657 = vmatpush2.msra.mxu0 0.0
        %1658 = vmatprep.subr.mxu0 0.0
        %1659 = vmatpush2.msra.mxu0 0.0
        %1660 = vmatprep.subr.mxu0 0.0
        %1661 = vmatpush2.msra.mxu0 0.0
        %1662 = vmatprep.subr.mxu0 0.0
        %1663 = vmatpush2.msra.mxu0 0.0
        %1664 = vmatprep.subr.mxu0 0.0
        %1665 = vmatpush2.msra.mxu0 0.0
        %1666 = vmatprep.subr.mxu0 0.0
        %1667 = vmatpush2.msra.mxu0 0.0
        %1668 = vmatprep.subr.mxu0 0.0
        %1669 = vmatpush2.msra.mxu0 0.0
        %1670 = vmatprep.subr.mxu0 0.0
        %1671 = vmatpush2.msra.mxu0 0.0
        %1672 = vmatprep.subr.mxu0 0.0
        %1673 = vmatpush2.msra.mxu0 0.0
        %1674 = vmatprep.subr.mxu0 0.0
        %1675 = vmatpush2.msra.mxu0 0.0
        %1676 = vmatprep.subr.mxu0 0.0
        %1677 = vmatpush2.msra.mxu0 0.0
        %1678 = vmatprep.subr.mxu0 0.0
        %1679 = vmatpush2.msra.mxu0 0.0
        %1680 = vmatprep.subr.mxu0 0.0
        %1681 = vmatpush2.msra.mxu0 0.0
        %1682 = vmatprep.subr.mxu0 0.0
        %1683 = vmatpush2.msra.mxu0 0.0
        %1684 = vmatprep.subr.mxu0 0.0
        %1685 = vmatpush2.msra.mxu0 0.0
        %1686 = vmatprep.subr.mxu0 0.0
        %1687 = vmatpush2.msra.mxu0 0.0
        %1688 = vmatprep.mubr.f32.mxu0 0.0
        %1689 = vmatmul.mubr.f32.gmra.mxu0 %v1600
        %v1690 = vpop.f32.mrf.mxu0
        %v1691 = vadd.f32 %v1622, %v1690
        %v1692 = vpop.f32.mrf.mxu0
        %1693 = vdwg.mxu0
        %v1694 = vadd.f32 %v1486, %v1691
        %1695 = vst.msk [vmem:[%s404] sm:$0xff] %vm412, %v1694
        %s1696 = sand.u32 %s291, 1
        %s1697 = scalar_lea.sflag [#allocation3], %s1696
        %s1698 = sand.u32 %s291, 1
        %s1699 = smul.addr %s1698, 8
        %s1700 = scalar_lea.vmem [#allocation2], %s1699
        // Predicated region
        $region69: #{tpu_custom_call.1} parent=67 // pred_check
          %p1701 = pneg %p301
        $region70: #{tpu_custom_call.1} parent=67 // pred_check_branch
          %1703 = sbr.rel (%p1701) target = $region72
        $region71: #{tpu_custom_call.1} parent=67 // pred_region
          %s1705 = ssub.s32 128, 128
          %1706 = vsyncadd %s1697, %s1705
          %s1707 = smul.addr %s26, 128
          %s1708 = scalar_lea.hbm %s12, %s1707
          %s1710 = sshll.u32 %s1700, 4
          %s1711 = int_to_ptr.vmem [resolvable:$true] %s1710
          %1713 = dma.vmem_to_hbm [thread:$0]  %s1711, 128, %s1708, %s1697
        $region72: #{tpu_custom_call.1} parent=67 // pred_fallthru
          _
      $region68: #{tpu_custom_call.1} parent=5 // pred_fallthru
        _
      %p1714 = scmp.le.s32.totalorder 2, %s21
      // Predicated region
      $region73: #{tpu_custom_call.1} parent=5 // pred_check
        %p1715 = pneg %p1714
      $region74: #{tpu_custom_call.1} parent=5 // pred_check_branch
        %1717 = sbr.rel (%p1715) target = $region76
      $region75: #{tpu_custom_call.1} parent=5 // pred_region
        %s1718 = ssub.s32 %s21, 2
        // Predicated region
        $region77: #{tpu_custom_call.1} parent=75 // pred_check
          %p1719 = pneg %p307
        $region78: #{tpu_custom_call.1} parent=75 // pred_check_branch
          %1721 = sbr.rel (%p1719) target = $region80
        $region79: #{tpu_custom_call.1} parent=75 // pred_region
          %s1722 = sand.u32 %s292, 1
          %s1723 = scalar_lea.sflag [#allocation3], %s1722
          %s1724 = sand.u32 %s292, 1
          %s1725 = smul.addr %s1724, 8
          %s1726 = scalar_lea.vmem [#allocation2], %s1725
          %1727 = dma.done %s1723, 128
        $region80: #{tpu_custom_call.1} parent=75 // pred_fallthru
          _
      $region76: #{tpu_custom_call.1} parent=5 // pred_fallthru
        _
    $region6: #{tpu_custom_call.1} parent=1 // loop_footer
      %s25 = sadd.s32 1, %s21
    $region7: #{tpu_custom_call.1} parent=1 // loop_footer_branch
      %20 = sbr.rel target = $region3
    $region8: #{tpu_custom_call.1} parent=1 // loop_exit
      _
    %1728 = vsyncpa [#allocation3], 1
    %s1729 = scalar_lea.sflag [#allocation3], 1
    %1730 = vsyncpa %s1729, 1

// kernel: tpu_custom_call.1
$region0: #{tpu_custom_call.1}
  #allocation0 [shape = 'u32[]', space=smem, size = 0x4, offset = 0x4, fixed_abs, tag = 'smem constant byte address 0x4 - core index']
  #allocation1 [shape = 'u32[144,128]{1,0:T(1,128)}', space=vmem, size = 0x12000, scoped, tag = 'internal scratch']
  %s0 = inlined_call_operand.vmem [shape: f32[2,8,32], index: 0, kind: input, shape index: {}]
  %s1 = inlined_call_operand.vmem [shape: f32[1,32], index: 1, kind: input, shape index: {}]
  %s2 = inlined_call_operand.vmem [shape: f32[1,32], index: 2, kind: input, shape index: {}]
  %s3 = inlined_call_operand.vmem [shape: f32[32,32], index: 3, kind: input, shape index: {}]
  %s4 = inlined_call_operand.vmem [shape: f32[32,32], index: 4, kind: input, shape index: {}]
  %s5 = inlined_call_operand.vmem [shape: f32[1,32], index: 5, kind: input, shape index: {}]
  %s6 = inlined_call_operand.vmem [shape: f32[1,32], index: 6, kind: input, shape index: {}]
  %s7 = inlined_call_operand.vmem [shape: f32[1,32], index: 7, kind: input, shape index: {}]
  %s8 = inlined_call_operand.vmem [shape: f32[32,128], index: 8, kind: input, shape index: {}]
  %s9 = inlined_call_operand.vmem [shape: f32[1,128], index: 9, kind: input, shape index: {}]
  %s10 = inlined_call_operand.vmem [shape: f32[128,32], index: 10, kind: input, shape index: {}]
  %s11 = inlined_call_operand.vmem [shape: f32[1,32], index: 11, kind: input, shape index: {}]
  %s12 = inlined_call_operand.hbm [shape: f32[2,8,32], index: 12, kind: output, shape index: {}]
  %s13 = sld [smem:[#allocation0]]
  $region81: #{tpu_custom_call.1} parent=0
    _
  %s15 = ssub.s32 1, %s13
  %s16 = scalar_select 0, %s15, %s13
  $region1: #{tpu_custom_call.1} parent=0
    #allocation2 [shape = 'u8[8192]{0}', space=vmem, size = 0x2000, scoped, tag = 'output window, operand 0']
    #allocation3 [shape = 's32[2]{0}', space=sflag, size = 0x8, scoped, tag = 'scoped memory for tpu_custom_call.1']
    %17 = vsyncpa [#allocation3], 0
    %s18 = scalar_lea.sflag [#allocation3], 1
    %19 = vsyncpa %s18, 0
    loop: start=0, step=1, limit=4
    $region2: #{tpu_custom_call.1} parent=1 // loop_pre_header
      _
    $region3: #{tpu_custom_call.1} parent=1 // loop_header
      %s21 = sphi 0, %s25
      %p22 = scmp.ge.s32.totalorder %s21, 4
      %s31 = sphi 0, %s33
      %s34 = sphi 0, %s31
      %s35 = sphi 0, %s34
      %s51 = sphi 0, %s35
      %s55 = sphi 0, %s55
      %s57 = sphi 0, %s55
      %s58 = sphi 0, %s57
      %s72 = sphi 0, %s58
      %s76 = sphi 0, %s76
      %s78 = sphi 0, %s76
      %s79 = sphi 0, %s78
      %s93 = sphi 0, %s79
      %s97 = sphi 0, %s97
      %s99 = sphi 0, %s97
      %s100 = sphi 0, %s99
      %s114 = sphi 0, %s100
      %s118 = sphi 0, %s118
      %s120 = sphi 0, %s118
      %s121 = sphi 0, %s120
      %s135 = sphi 0, %s121
      %s139 = sphi 0, %s139
      %s141 = sphi 0, %s139
      %s142 = sphi 0, %s141
      %s156 = sphi 0, %s142
      %s160 = sphi 0, %s160
      %s162 = sphi 0, %s160
      %s163 = sphi 0, %s162
      %s177 = sphi 0, %s163
      %s181 = sphi 0, %s181
      %s183 = sphi 0, %s181
      %s184 = sphi 0, %s183
      %s198 = sphi 0, %s184
      %s202 = sphi 0, %s202
      %s204 = sphi 0, %s202
      %s205 = sphi 0, %s204
      %s219 = sphi 0, %s205
      %s223 = sphi 0, %s223
      %s225 = sphi 0, %s223
      %s226 = sphi 0, %s225
      %s240 = sphi 0, %s226
      %s244 = sphi 0, %s244
      %s246 = sphi 0, %s244
      %s247 = sphi 0, %s246
      %s261 = sphi 0, %s247
      %s265 = sphi 0, %s265
      %s267 = sphi 0, %s265
      %s268 = sphi 0, %s267
      %s282 = sphi 0, %s268
      %s288 = sphi 0, %s290
      %s291 = sphi 0, %s288
      %s292 = sphi 0, %s291
      %s308 = sphi 0, %s292
    $region4: #{tpu_custom_call.1} parent=1 // loop_header_branch
      %24 = sbr.rel (%p22) target = $region8
    $region5: #{tpu_custom_call.1} parent=1 // loop_body
      %s26 = ssub.s32 %s21, 1
      %s27 = ssub.s32 %s21, 2
      %s28 = sadd.s32 %s21, 1
      %s29 = ssub.s32 %s21, %s28
      %p30 = scmp.eq.s32.totalorder %s29, 0
      %s32 = sadd.s32 %s31, 1
      %s33 = scalar_select %p30, %s31, %s32
      %p36 = pneg %p30
      %p37 = scmp.eq.s32.totalorder %s21, 1
      %p38 = por %p36, %p37
      %p39 = scmp.ne.s32.totalorder %s31, %s34
      %p40 = scmp.eq.s32.totalorder %s21, 0
      %p41 = por %p39, %p40
      %p42 = scmp.ne.s32.totalorder %s31, %s34
      %p43 = scmp.eq.s32.totalorder %s26, 1
      %p44 = por %p42, %p43
      %p45 = scmp.ne.s32.totalorder %s34, %s35
      %p46 = scmp.eq.s32.totalorder %s26, 0
      %p47 = por %p45, %p46
      %p48 = scmp.ne.s32.totalorder %s34, %s35
      %p49 = scmp.eq.s32.totalorder %s27, 1
      %p50 = por %p48, %p49
      %p52 = scmp.ne.s32.totalorder %s35, %s51
      %p53 = scmp.eq.s32.totalorder %s27, 0
      %p54 = por %p52, %p53
      %s56 = sadd.s32 %s55, 1
      %p59 = scmp.eq.s32.totalorder %s21, 1
      %p60 = scmp.ne.s32.totalorder %s55, %s57
      %p61 = scmp.eq.s32.totalorder %s21, 0
      %p62 = por %p60, %p61
      %p63 = scmp.ne.s32.totalorder %s55, %s57
      %p64 = scmp.eq.s32.totalorder %s26, 1
      %p65 = por %p63, %p64
      %p66 = scmp.ne.s32.totalorder %s57, %s58
      %p67 = scmp.eq.s32.totalorder %s26, 0
      %p68 = por %p66, %p67
      %p69 = scmp.ne.s32.totalorder %s57, %s58
      %p70 = scmp.eq.s32.totalorder %s27, 1
      %p71 = por %p69, %p70
      %p73 = scmp.ne.s32.totalorder %s58, %s72
      %p74 = scmp.eq.s32.totalorder %s27, 0
      %p75 = por %p73, %p74
      %s77 = sadd.s32 %s76, 1
      %p80 = scmp.eq.s32.totalorder %s21, 1
      %p81 = scmp.ne.s32.totalorder %s76, %s78
      %p82 = scmp.eq.s32.totalorder %s21, 0
      %p83 = por %p81, %p82
      %p84 = scmp.ne.s32.totalorder %s76, %s78
      %p85 = scmp.eq.s32.totalorder %s26, 1
      %p86 = por %p84, %p85
      %p87 = scmp.ne.s32.totalorder %s78, %s79
      %p88 = scmp.eq.s32.totalorder %s26, 0
      %p89 = por %p87, %p88
      %p90 = scmp.ne.s32.totalorder %s78, %s79
      %p91 = scmp.eq.s32.totalorder %s27, 1
      %p92 = por %p90, %p91
      %p94 = scmp.ne.s32.totalorder %s79, %s93
      %p95 = scmp.eq.s32.totalorder %s27, 0
      %p96 = por %p94, %p95
      %s98 = sadd.s32 %s97, 1
      %p101 = scmp.eq.s32.totalorder %s21, 1
      %p102 = scmp.ne.s32.totalorder %s97, %s99
      %p103 = scmp.eq.s32.totalorder %s21, 0
      %p104 = por %p102, %p103
      %p105 = scmp.ne.s32.totalorder %s97, %s99
      %p106 = scmp.eq.s32.totalorder %s26, 1
      %p107 = por %p105, %p106
      %p108 = scmp.ne.s32.totalorder %s99, %s100
      %p109 = scmp.eq.s32.totalorder %s26, 0
      %p110 = por %p108, %p109
      %p111 = scmp.ne.s32.totalorder %s99, %s100
      %p112 = scmp.eq.s32.totalorder %s27, 1
      %p113 = por %p111, %p112
      %p115 = scmp.ne.s32.totalorder %s100, %s114
      %p116 = scmp.eq.s32.totalorder %s27, 0
      %p117 = por %p115, %p116
      %s119 = sadd.s32 %s118, 1
      %p122 = scmp.eq.s32.totalorder %s21, 1
      %p123 = scmp.ne.s32.totalorder %s118, %s120
      %p124 = scmp.eq.s32.totalorder %s21, 0
      %p125 = por %p123, %p124
      %p126 = scmp.ne.s32.totalorder %s118, %s120
      %p127 = scmp.eq.s32.totalorder %s26, 1
      %p128 = por %p126, %p127
      %p129 = scmp.ne.s32.totalorder %s120, %s121
      %p130 = scmp.eq.s32.totalorder %s26, 0
      %p131 = por %p129, %p130
      %p132 = scmp.ne.s32.totalorder %s120, %s121
      %p133 = scmp.eq.s32.totalorder %s27, 1
      %p134 = por %p132, %p133
      %p136 = scmp.ne.s32.totalorder %s121, %s135
      %p137 = scmp.eq.s32.totalorder %s27, 0
      %p138 = por %p136, %p137
      %s140 = sadd.s32 %s139, 1
      %p143 = scmp.eq.s32.totalorder %s21, 1
      %p144 = scmp.ne.s32.totalorder %s139, %s141
      %p145 = scmp.eq.s32.totalorder %s21, 0
      %p146 = por %p144, %p145
      %p147 = scmp.ne.s32.totalorder %s139, %s141
      %p148 = scmp.eq.s32.totalorder %s26, 1
      %p149 = por %p147, %p148
      %p150 = scmp.ne.s32.totalorder %s141, %s142
      %p151 = scmp.eq.s32.totalorder %s26, 0
      %p152 = por %p150, %p151
      %p153 = scmp.ne.s32.totalorder %s141, %s142
      %p154 = scmp.eq.s32.totalorder %s27, 1
      %p155 = por %p153, %p154
      %p157 = scmp.ne.s32.totalorder %s142, %s156
      %p158 = scmp.eq.s32.totalorder %s27, 0
      %p159 = por %p157, %p158
      %s161 = sadd.s32 %s160, 1
      %p164 = scmp.eq.s32.totalorder %s21, 1
      %p165 = scmp.ne.s32.totalorder %s160, %s162
      %p166 = scmp.eq.s32.totalorder %s21, 0
      %p167 = por %p165, %p166
      %p168 = scmp.ne.s32.totalorder %s160, %s162
      %p169 = scmp.eq.s32.totalorder %s26, 1
      %p170 = por %p168, %p169
      %p171 = scmp.ne.s32.totalorder %s162, %s163
      %p172 = scmp.eq.s32.totalorder %s26, 0
      %p173 = por %p171, %p172
      %p174 = scmp.ne.s32.totalorder %s162, %s163
      %p175 = scmp.eq.s32.totalorder %s27, 1
      %p176 = por %p174, %p175
      %p178 = scmp.ne.s32.totalorder %s163, %s177
      %p179 = scmp.eq.s32.totalorder %s27, 0
      %p180 = por %p178, %p179
      %s182 = sadd.s32 %s181, 1
      %p185 = scmp.eq.s32.totalorder %s21, 1
      %p186 = scmp.ne.s32.totalorder %s181, %s183
      %p187 = scmp.eq.s32.totalorder %s21, 0
      %p188 = por %p186, %p187
      %p189 = scmp.ne.s32.totalorder %s181, %s183
      %p190 = scmp.eq.s32.totalorder %s26, 1
      %p191 = por %p189, %p190
      %p192 = scmp.ne.s32.totalorder %s183, %s184
      %p193 = scmp.eq.s32.totalorder %s26, 0
      %p194 = por %p192, %p193
      %p195 = scmp.ne.s32.totalorder %s183, %s184
      %p196 = scmp.eq.s32.totalorder %s27, 1
      %p197 = por %p195, %p196
      %p199 = scmp.ne.s32.totalorder %s184, %s198
      %p200 = scmp.eq.s32.totalorder %s27, 0
      %p201 = por %p199, %p200
      %s203 = sadd.s32 %s202, 1
      %p206 = scmp.eq.s32.totalorder %s21, 1
      %p207 = scmp.ne.s32.totalorder %s202, %s204
      %p208 = scmp.eq.s32.totalorder %s21, 0
      %p209 = por %p207, %p208
      %p210 = scmp.ne.s32.totalorder %s202, %s204
      %p211 = scmp.eq.s32.totalorder %s26, 1
      %p212 = por %p210, %p211
      %p213 = scmp.ne.s32.totalorder %s204, %s205
      %p214 = scmp.eq.s32.totalorder %s26, 0
      %p215 = por %p213, %p214
      %p216 = scmp.ne.s32.totalorder %s204, %s205
      %p217 = scmp.eq.s32.totalorder %s27, 1
      %p218 = por %p216, %p217
      %p220 = scmp.ne.s32.totalorder %s205, %s219
      %p221 = scmp.eq.s32.totalorder %s27, 0
      %p222 = por %p220, %p221
      %s224 = sadd.s32 %s223, 1
      %p227 = scmp.eq.s32.totalorder %s21, 1
      %p228 = scmp.ne.s32.totalorder %s223, %s225
      %p229 = scmp.eq.s32.totalorder %s21, 0
      %p230 = por %p228, %p229
      %p231 = scmp.ne.s32.totalorder %s223, %s225
      %p232 = scmp.eq.s32.totalorder %s26, 1
      %p233 = por %p231, %p232
      %p234 = scmp.ne.s32.totalorder %s225, %s226
      %p235 = scmp.eq.s32.totalorder %s26, 0
      %p236 = por %p234, %p235
      %p237 = scmp.ne.s32.totalorder %s225, %s226
      %p238 = scmp.eq.s32.totalorder %s27, 1
      %p239 = por %p237, %p238
      %p241 = scmp.ne.s32.totalorder %s226, %s240
      %p242 = scmp.eq.s32.totalorder %s27, 0
      %p243 = por %p241, %p242
      %s245 = sadd.s32 %s244, 1
      %p248 = scmp.eq.s32.totalorder %s21, 1
      %p249 = scmp.ne.s32.totalorder %s244, %s246
      %p250 = scmp.eq.s32.totalorder %s21, 0
      %p251 = por %p249, %p250
      %p252 = scmp.ne.s32.totalorder %s244, %s246
      %p253 = scmp.eq.s32.totalorder %s26, 1
      %p254 = por %p252, %p253
      %p255 = scmp.ne.s32.totalorder %s246, %s247
      %p256 = scmp.eq.s32.totalorder %s26, 0
      %p257 = por %p255, %p256
      %p258 = scmp.ne.s32.totalorder %s246, %s247
      %p259 = scmp.eq.s32.totalorder %s27, 1
      %p260 = por %p258, %p259
      %p262 = scmp.ne.s32.totalorder %s247, %s261
      %p263 = scmp.eq.s32.totalorder %s27, 0
      %p264 = por %p262, %p263
      %s266 = sadd.s32 %s265, 1
      %p269 = scmp.eq.s32.totalorder %s21, 1
      %p270 = scmp.ne.s32.totalorder %s265, %s267
      %p271 = scmp.eq.s32.totalorder %s21, 0
      %p272 = por %p270, %p271
      %p273 = scmp.ne.s32.totalorder %s265, %s267
      %p274 = scmp.eq.s32.totalorder %s26, 1
      %p275 = por %p273, %p274
      %p276 = scmp.ne.s32.totalorder %s267, %s268
      %p277 = scmp.eq.s32.totalorder %s26, 0
      %p278 = por %p276, %p277
      %p279 = scmp.ne.s32.totalorder %s267, %s268
      %p280 = scmp.eq.s32.totalorder %s27, 1
      %p281 = por %p279, %p280
      %p283 = scmp.ne.s32.totalorder %s268, %s282
      %p284 = scmp.eq.s32.totalorder %s27, 0
      %p285 = por %p283, %p284
      %s286 = ssub.s32 %s21, %s28
      %p287 = scmp.eq.s32.totalorder %s286, 0
      %s289 = sadd.s32 %s288, 1
      %s290 = scalar_select %p287, %s288, %s289
      %p293 = pneg %p287
      %p294 = scmp.eq.s32.totalorder %s21, 1
      %p295 = por %p293, %p294
      %p296 = scmp.ne.s32.totalorder %s288, %s291
      %p297 = scmp.eq.s32.totalorder %s21, 0
      %p298 = por %p296, %p297
      %p299 = scmp.ne.s32.totalorder %s288, %s291
      %p300 = scmp.eq.s32.totalorder %s26, 1
      %p301 = por %p299, %p300
      %p302 = scmp.ne.s32.totalorder %s291, %s292
      %p303 = scmp.eq.s32.totalorder %s26, 0
      %p304 = por %p302, %p303
      %p305 = scmp.ne.s32.totalorder %s291, %s292
      %p306 = scmp.eq.s32.totalorder %s27, 1
      %p307 = por %p305, %p306
      %p309 = scmp.ne.s32.totalorder %s292, %s308
      %p310 = scmp.eq.s32.totalorder %s27, 0
      %p311 = por %p309, %p310
      %p312 = scmp.le.s32.totalorder 1, %s21
      %p313 = scmp.lt.s32.totalorder %s21, 3
      %p314 = pnand %p312, %p313
      %p315 = pneg %p314
      // Predicated region
      $region9: #{tpu_custom_call.1} parent=5 // pred_check
        _
      $region10: #{tpu_custom_call.1} parent=5 // pred_check_branch
        %317 = sbr.rel (%p314) target = $region12
      $region11: #{tpu_custom_call.1} parent=5 // pred_region
        %s318 = ssub.s32 %s21, 1
        // Predicated region
        $region13: #{tpu_custom_call.1} parent=11 // pred_check
          %p319 = pneg %p68
        $region14: #{tpu_custom_call.1} parent=11 // pred_check_branch
          %321 = sbr.rel (%p319) target = $region16
        $region15: #{tpu_custom_call.1} parent=11 // pred_region
          _
        $region16: #{tpu_custom_call.1} parent=11 // pred_fallthru
          _
        // Predicated region
        $region17: #{tpu_custom_call.1} parent=11 // pred_check
          %p322 = pneg %p89
        $region18: #{tpu_custom_call.1} parent=11 // pred_check_branch
          %324 = sbr.rel (%p322) target = $region20
        $region19: #{tpu_custom_call.1} parent=11 // pred_region
          _
        $region20: #{tpu_custom_call.1} parent=11 // pred_fallthru
          _
        // Predicated region
        $region21: #{tpu_custom_call.1} parent=11 // pred_check
          %p325 = pneg %p110
        $region22: #{tpu_custom_call.1} parent=11 // pred_check_branch
          %327 = sbr.rel (%p325) target = $region24
        $region23: #{tpu_custom_call.1} parent=11 // pred_region
          _
        $region24: #{tpu_custom_call.1} parent=11 // pred_fallthru
          _
        // Predicated region
        $region25: #{tpu_custom_call.1} parent=11 // pred_check
          %p328 = pneg %p131
        $region26: #{tpu_custom_call.1} parent=11 // pred_check_branch
          %330 = sbr.rel (%p328) target = $region28
        $region27: #{tpu_custom_call.1} parent=11 // pred_region
          _
        $region28: #{tpu_custom_call.1} parent=11 // pred_fallthru
          _
        // Predicated region
        $region29: #{tpu_custom_call.1} parent=11 // pred_check
          %p331 = pneg %p152
        $region30: #{tpu_custom_call.1} parent=11 // pred_check_branch
          %333 = sbr.rel (%p331) target = $region32
        $region31: #{tpu_custom_call.1} parent=11 // pred_region
          _
        $region32: #{tpu_custom_call.1} parent=11 // pred_fallthru
          _
        // Predicated region
        $region33: #{tpu_custom_call.1} parent=11 // pred_check
          %p334 = pneg %p173
        $region34: #{tpu_custom_call.1} parent=11 // pred_check_branch
          %336 = sbr.rel (%p334) target = $region36
        $region35: #{tpu_custom_call.1} parent=11 // pred_region
          _
        $region36: #{tpu_custom_call.1} parent=11 // pred_fallthru
          _
        // Predicated region
        $region37: #{tpu_custom_call.1} parent=11 // pred_check
          %p337 = pneg %p194
        $region38: #{tpu_custom_call.1} parent=11 // pred_check_branch
          %339 = sbr.rel (%p337) target = $region40
        $region39: #{tpu_custom_call.1} parent=11 // pred_region
          _
        $region40: #{tpu_custom_call.1} parent=11 // pred_fallthru
          _
        // Predicated region
        $region41: #{tpu_custom_call.1} parent=11 // pred_check
          %p340 = pneg %p215
        $region42: #{tpu_custom_call.1} parent=11 // pred_check_branch
          %342 = sbr.rel (%p340) target = $region44
        $region43: #{tpu_custom_call.1} parent=11 // pred_region
          _
        $region44: #{tpu_custom_call.1} parent=11 // pred_fallthru
          _
        // Predicated region
        $region45: #{tpu_custom_call.1} parent=11 // pred_check
          %p343 = pneg %p236
        $region46: #{tpu_custom_call.1} parent=11 // pred_check_branch
          %345 = sbr.rel (%p343) target = $region48
        $region47: #{tpu_custom_call.1} parent=11 // pred_region
          _
        $region48: #{tpu_custom_call.1} parent=11 // pred_fallthru
          _
        // Predicated region
        $region49: #{tpu_custom_call.1} parent=11 // pred_check
          %p346 = pneg %p257
        $region50: #{tpu_custom_call.1} parent=11 // pred_check_branch
          %348 = sbr.rel (%p346) target = $region52
        $region51: #{tpu_custom_call.1} parent=11 // pred_region
          _
        $region52: #{tpu_custom_call.1} parent=11 // pred_fallthru
          _
        // Predicated region
        $region53: #{tpu_custom_call.1} parent=11 // pred_check
          %p349 = pneg %p278
        $region54: #{tpu_custom_call.1} parent=11 // pred_check_branch
          %351 = sbr.rel (%p349) target = $region56
        $region55: #{tpu_custom_call.1} parent=11 // pred_region
          _
        $region56: #{tpu_custom_call.1} parent=11 // pred_fallthru
          _
      $region12: #{tpu_custom_call.1} parent=5 // pred_fallthru
        _
      %p352 = scmp.lt.s32.totalorder %s21, 2
      // Predicated region
      $region57: #{tpu_custom_call.1} parent=5 // pred_check
        %p353 = pneg %p352
      $region58: #{tpu_custom_call.1} parent=5 // pred_check_branch
        %355 = sbr.rel (%p353) target = $region60
      $region59: #{tpu_custom_call.1} parent=5 // pred_region
        // Predicated region
        $region61: #{tpu_custom_call.1} parent=59 // pred_check
          %p356 = pneg %p41
        $region62: #{tpu_custom_call.1} parent=59 // pred_check_branch
          %358 = sbr.rel (%p356) target = $region64
        $region63: #{tpu_custom_call.1} parent=59 // pred_region
          %p359 = scmp.lt.s32.totalorder %s21, 1
          %s360 = scalar_select %p359, %s21, 1
          %s361 = smul.addr %s360, 8
          %s362 = scalar_lea.vmem %s0, %s361
        $region64: #{tpu_custom_call.1} parent=59 // pred_fallthru
          _
      $region60: #{tpu_custom_call.1} parent=5 // pred_fallthru
        _
      %p363 = scmp.le.s32.totalorder 1, %s21
      %p364 = scmp.lt.s32.totalorder %s21, 3
      %p365 = pnand %p363, %p364
      %p366 = pneg %p365
      // Predicated region
      $region65: #{tpu_custom_call.1} parent=5 // pred_check
        _
      $region66: #{tpu_custom_call.1} parent=5 // pred_check_branch
        %368 = sbr.rel (%p365) target = $region68
      $region67: #{tpu_custom_call.1} parent=5 // pred_region
        %s369 = ssub.s32 %s21, 1
        %p370 = scmp.lt.s32.totalorder %s26, 1
        %s371 = scalar_select %p370, %s26, 1
        %s372 = smul.addr %s371, 8
        %s373 = scalar_lea.vmem %s0, %s372
        %p374 = pneg %p47
        %p375 = pneg %p44
        %p376 = pneg %p68
        %p377 = pneg %p65
        %p378 = pneg %p89
        %p379 = pneg %p86
        %p380 = pneg %p110
        %p381 = pneg %p107
        %p382 = pneg %p131
        %p383 = pneg %p128
        %p384 = pneg %p152
        %p385 = pneg %p149
        %p386 = pneg %p173
        %p387 = pneg %p170
        %p388 = pneg %p194
        %p389 = pneg %p191
        %p390 = pneg %p215
        %p391 = pneg %p212
        %p392 = pneg %p236
        %p393 = pneg %p233
        %p394 = pneg %p257
        %p395 = pneg %p254
        %p396 = pneg %p278
        %p397 = pneg %p275
        %p398 = pneg %p304
        %p399 = pneg %p301
        %s400 = sand.u32 %s291, 1
        %s401 = scalar_lea.sflag [#allocation3], %s400
        %s402 = sand.u32 %s291, 1
        %s403 = smul.addr %s402, 8
        %s404 = scalar_lea.vmem [#allocation2], %s403
        %p405 = scmp.lt.s32.totalorder %s26, 1
        %s406 = scalar_select %p405, %s26, 1
        %s407 = smul.addr %s406, 8
        %s408 = scalar_lea.vmem %s0, %s407
        %v409 = vld [vmem:[%s408] sm:$0xff]
        %v410 = vld [vmem:[%s1] sm:$0x1]
        %v411 = vld [vmem:[%s2] sm:$0x1]
        %vm412 = vcmask 261120
        %v413 = vsel %vm412, %v409, 0.0
        %414 = vadd.xlane.f32.xlu0 %v413
        %v415 = vpop.xlane.xlu0 %414
        %v416 = vrcp.pop 32.0
        %v417 = vmul.f32 %v415, %v416
        %v418 = vsub.f32 %v409, %v417
        %v419 = vmul.f32 %v418, %v418
        %v420 = vsel %vm412, %v419, 0.0
        %421 = vadd.xlane.f32.xlu0 %v420
        %v422 = vpop.xlane.xlu0 %421
        %v423 = vmul.f32 %v422, %v416
        %v424 = vadd.f32 %v423, 1e-05
        %v425 = vrsqrt.pop %v424
        %v426 = vmul.f32 %v418, %v425
        %v428 = vlaneseq
        %v429 = vshrl.u32 %v428, 7
        %v430 = vsub.s32 0, %v429
        %v431 = vrot.slane %v410, %v430
        %v433 = vmul.f32 %v426, %v431
        %v435 = vlaneseq
        %v436 = vshrl.u32 %v435, 7
        %v437 = vsub.s32 0, %v436
        %v438 = vrot.slane %v411, %v437
        %v440 = vadd.f32 %v433, %v438
        %v441 = vld [vmem:[%s3] sm:$0xff]
        %v442 = vld [vmem:[%s3 + $0x8] sm:$0xff]
        %v443 = vld [vmem:[%s3 + $0x10] sm:$0xff]
        %v444 = vld [vmem:[%s3 + $0x18] sm:$0xff]
        %v446 = vsel %vm412, %v440, 0
        %448 = vmatprep.subr.mxu0 0.0
        %449 = vmatpush1.msra.mxu0 0.0
        %450 = vmatprep.subr.mxu0 0.0
        %451 = vmatpush1.msra.mxu0 0.0
        %452 = vmatprep.subr.mxu0 0.0
        %453 = vmatpush1.msra.mxu0 0.0
        %454 = vmatprep.subr.mxu0 0.0
        %455 = vmatpush1.msra.mxu0 0.0
        %456 = vmatprep.subr.mxu0 0.0
        %457 = vmatpush1.msra.mxu0 0.0
        %458 = vmatprep.subr.mxu0 0.0
        %459 = vmatpush1.msra.mxu0 0.0
        %460 = vmatprep.subr.mxu0 0.0
        %461 = vmatpush1.msra.mxu0 0.0
        %462 = vmatprep.subr.mxu0 0.0
        %463 = vmatpush1.msra.mxu0 0.0
        %464 = vmatprep.subr.mxu0 0.0
        %465 = vmatpush1.msra.mxu0 0.0
        %466 = vmatprep.subr.mxu0 0.0
        %467 = vmatpush1.msra.mxu0 0.0
        %468 = vmatprep.subr.mxu0 0.0
        %469 = vmatpush1.msra.mxu0 0.0
        %470 = vmatprep.subr.mxu0 0.0
        %471 = vmatpush1.msra.mxu0 0.0
        %472 = vmatprep.subr.mxu0 0.0
        %473 = vmatpush1.msra.mxu0 %v444
        %474 = vmatprep.subr.mxu0 0.0
        %475 = vmatpush1.msra.mxu0 %v443
        %476 = vmatprep.subr.mxu0 0.0
        %477 = vmatpush1.msra.mxu0 %v442
        %478 = vmatprep.subr.mxu0 0.0
        %479 = vmatpush1.msra.mxu0 %v441
        %480 = vmatprep.subr.mxu0 0.0
        %481 = vmatpush2.msra.mxu0 0.0
        %482 = vmatprep.subr.mxu0 0.0
        %483 = vmatpush2.msra.mxu0 0.0
        %484 = vmatprep.subr.mxu0 0.0
        %485 = vmatpush2.msra.mxu0 0.0
        %486 = vmatprep.subr.mxu0 0.0
        %487 = vmatpush2.msra.mxu0 0.0
        %488 = vmatprep.subr.mxu0 0.0
        %489 = vmatpush2.msra.mxu0 0.0
        %490 = vmatprep.subr.mxu0 0.0
        %491 = vmatpush2.msra.mxu0 0.0
        %492 = vmatprep.subr.mxu0 0.0
        %493 = vmatpush2.msra.mxu0 0.0
        %494 = vmatprep.subr.mxu0 0.0
        %495 = vmatpush2.msra.mxu0 0.0
        %496 = vmatprep.subr.mxu0 0.0
        %497 = vmatpush2.msra.mxu0 0.0
        %498 = vmatprep.subr.mxu0 0.0
        %499 = vmatpush2.msra.mxu0 0.0
        %500 = vmatprep.subr.mxu0 0.0
        %501 = vmatpush2.msra.mxu0 0.0
        %502 = vmatprep.subr.mxu0 0.0
        %503 = vmatpush2.msra.mxu0 0.0
        %504 = vmatprep.subr.mxu0 0.0
        %505 = vmatpush2.msra.mxu0 0.0
        %506 = vmatprep.subr.mxu0 0.0
        %507 = vmatpush2.msra.mxu0 0.0
        %508 = vmatprep.subr.mxu0 0.0
        %509 = vmatpush2.msra.mxu0 0.0
        %510 = vmatprep.subr.mxu0 0.0
        %511 = vmatpush2.msra.mxu0 0.0
        %512 = vmatprep.mubr.f32.mxu0 0.0
        %513 = vmatmul.mubr.f32.gmra.mxu0 %v446
        %v514 = vpop.f32.mrf.mxu0
        %v515 = vadd.f32 0.0, %v514
        %v516 = vpop.f32.mrf.mxu0
        %517 = vdwg.mxu0
        %v518 = vlaneseq
        %v519 = vshrl.u32 %v518, 7
        %v520 = vlaneseq
        %v521 = vand.u32 %v520, 127
        %vm522 = vcmp.ge.s32.totalorder %v519, %v521
        %v523 = vmul.f32 %v515, 0.17677669
        %v524 = vld [vmem:[%s4] sm:$0xff]
        %v525 = vld [vmem:[%s4 + $0x8] sm:$0xff]
        %v526 = vld [vmem:[%s4 + $0x10] sm:$0xff]
        %v527 = vld [vmem:[%s4 + $0x18] sm:$0xff]
        %v528 = vld [vmem:[%s5] sm:$0x1]
        %v530 = vlaneseq
        %v531 = vshrl.u32 %v530, 7
        %v532 = vsub.s32 0, %v531
        %v533 = vrot.slane %v528, %v532
        %v535 = vadd.f32 %v533, 0.0
        %vm536 = vcmask 64512
        %v538 = vsel %vm536, %v523, 0
        %v541 = vsel %vm536, %v515, 0
        %543 = vmatprep.subr.mxu0 0.0
        %544 = vmatpush1.xpose.msra.mxu0 0.0
        %545 = vmatprep.subr.mxu0 0.0
        %546 = vmatpush1.xpose.msra.mxu0 0.0
        %547 = vmatprep.subr.mxu0 0.0
        %548 = vmatpush1.xpose.msra.mxu0 0.0
        %549 = vmatprep.subr.mxu0 0.0
        %550 = vmatpush1.xpose.msra.mxu0 0.0
        %551 = vmatprep.subr.mxu0 0.0
        %552 = vmatpush1.xpose.msra.mxu0 0.0
        %553 = vmatprep.subr.mxu0 0.0
        %554 = vmatpush1.xpose.msra.mxu0 0.0
        %555 = vmatprep.subr.mxu0 0.0
        %556 = vmatpush1.xpose.msra.mxu0 0.0
        %557 = vmatprep.subr.mxu0 0.0
        %558 = vmatpush1.xpose.msra.mxu0 0.0
        %559 = vmatprep.subr.mxu0 0.0
        %560 = vmatpush1.xpose.msra.mxu0 0.0
        %561 = vmatprep.subr.mxu0 0.0
        %562 = vmatpush1.xpose.msra.mxu0 0.0
        %563 = vmatprep.subr.mxu0 0.0
        %564 = vmatpush1.xpose.msra.mxu0 0.0
        %565 = vmatprep.subr.mxu0 0.0
        %566 = vmatpush1.xpose.msra.mxu0 0.0
        %567 = vmatprep.subr.mxu0 0.0
        %568 = vmatpush1.xpose.msra.mxu0 0.0
        %569 = vmatprep.subr.mxu0 0.0
        %570 = vmatpush1.xpose.msra.mxu0 0.0
        %571 = vmatprep.subr.mxu0 0.0
        %572 = vmatpush1.xpose.msra.mxu0 0.0
        %573 = vmatprep.subr.mxu0 0.0
        %574 = vmatpush1.xpose.msra.mxu0 %v541
        %575 = vmatprep.subr.mxu0 0.0
        %576 = vmatpush2.xpose.msra.mxu0 0.0
        %577 = vmatprep.subr.mxu0 0.0
        %578 = vmatpush2.xpose.msra.mxu0 0.0
        %579 = vmatprep.subr.mxu0 0.0
        %580 = vmatpush2.xpose.msra.mxu0 0.0
        %581 = vmatprep.subr.mxu0 0.0
        %582 = vmatpush2.xpose.msra.mxu0 0.0
        %583 = vmatprep.subr.mxu0 0.0
        %584 = vmatpush2.xpose.msra.mxu0 0.0
        %585 = vmatprep.subr.mxu0 0.0
        %586 = vmatpush2.xpose.msra.mxu0 0.0
        %587 = vmatprep.subr.mxu0 0.0
        %588 = vmatpush2.xpose.msra.mxu0 0.0
        %589 = vmatprep.subr.mxu0 0.0
        %590 = vmatpush2.xpose.msra.mxu0 0.0
        %591 = vmatprep.subr.mxu0 0.0
        %592 = vmatpush2.xpose.msra.mxu0 0.0
        %593 = vmatprep.subr.mxu0 0.0
        %594 = vmatpush2.xpose.msra.mxu0 0.0
        %595 = vmatprep.subr.mxu0 0.0
        %596 = vmatpush2.xpose.msra.mxu0 0.0
        %597 = vmatprep.subr.mxu0 0.0
        %598 = vmatpush2.xpose.msra.mxu0 0.0
        %599 = vmatprep.subr.mxu0 0.0
        %600 = vmatpush2.xpose.msra.mxu0 0.0
        %601 = vmatprep.subr.mxu0 0.0
        %602 = vmatpush2.xpose.msra.mxu0 0.0
        %603 = vmatprep.subr.mxu0 0.0
        %604 = vmatpush2.xpose.msra.mxu0 0.0
        %605 = vmatprep.subr.mxu0 0.0
        %606 = vmatpush2.xpose.msra.mxu0 0.0
        %607 = vmatprep.mubr.f32.mxu0 0.0
        %608 = vmatmul.mubr.f32.gmra.mxu0 %v538
        %v609 = vpop.f32.mrf.mxu0
        %v610 = vadd.f32 0.0, %v609
        %v611 = vpop.f32.mrf.mxu0
        %612 = vdwg.mxu0
        %v613 = vsel %vm522, %v610, -1e+30
        %v614 = vsel %vm536, %v613, -inf
        %615 = vmax.xlane.f32.xlu0 %v614
        %v616 = vpop.xlane.xlu0 %615
        %v617 = vsub.f32 %v613, %v616
        %v618 = vmul.f32 %v617, 1.442695
        %v619 = vpow.pop %v618
        %v620 = vsel %vm536, %v619, 0.0
        %621 = vadd.xlane.f32.xlu0 %v620
        %v622 = vpop.xlane.xlu0 %621
        %v623 = vrcp.pop %v622
        %v624 = vmul.f32 %v619, %v623
        %v626 = vsel %vm536, %v624, 0
        %628 = vmatprep.subr.mxu0 0.0
        %629 = vmatpush1.msra.mxu0 0.0
        %630 = vmatprep.subr.mxu0 0.0
        %631 = vmatpush1.msra.mxu0 0.0
        %632 = vmatprep.subr.mxu0 0.0
        %633 = vmatpush1.msra.mxu0 0.0
        %634 = vmatprep.subr.mxu0 0.0
        %635 = vmatpush1.msra.mxu0 0.0
        %636 = vmatprep.subr.mxu0 0.0
        %637 = vmatpush1.msra.mxu0 0.0
        %638 = vmatprep.subr.mxu0 0.0
        %639 = vmatpush1.msra.mxu0 0.0
        %640 = vmatprep.subr.mxu0 0.0
        %641 = vmatpush1.msra.mxu0 0.0
        %642 = vmatprep.subr.mxu0 0.0
        %643 = vmatpush1.msra.mxu0 0.0
        %644 = vmatprep.subr.mxu0 0.0
        %645 = vmatpush1.msra.mxu0 0.0
        %646 = vmatprep.subr.mxu0 0.0
        %647 = vmatpush1.msra.mxu0 0.0
        %648 = vmatprep.subr.mxu0 0.0
        %649 = vmatpush1.msra.mxu0 0.0
        %650 = vmatprep.subr.mxu0 0.0
        %651 = vmatpush1.msra.mxu0 0.0
        %652 = vmatprep.subr.mxu0 0.0
        %653 = vmatpush1.msra.mxu0 0.0
        %654 = vmatprep.subr.mxu0 0.0
        %655 = vmatpush1.msra.mxu0 0.0
        %656 = vmatprep.subr.mxu0 0.0
        %657 = vmatpush1.msra.mxu0 0.0
        %658 = vmatprep.subr.mxu0 0.0
        %659 = vmatpush1.msra.mxu0 %v515
        %660 = vmatprep.subr.mxu0 0.0
        %661 = vmatpush2.msra.mxu0 0.0
        %662 = vmatprep.subr.mxu0 0.0
        %663 = vmatpush2.msra.mxu0 0.0
        %664 = vmatprep.subr.mxu0 0.0
        %665 = vmatpush2.msra.mxu0 0.0
        %666 = vmatprep.subr.mxu0 0.0
        %667 = vmatpush2.msra.mxu0 0.0
        %668 = vmatprep.subr.mxu0 0.0
        %669 = vmatpush2.msra.mxu0 0.0
        %670 = vmatprep.subr.mxu0 0.0
        %671 = vmatpush2.msra.mxu0 0.0
        %672 = vmatprep.subr.mxu0 0.0
        %673 = vmatpush2.msra.mxu0 0.0
        %674 = vmatprep.subr.mxu0 0.0
        %675 = vmatpush2.msra.mxu0 0.0
        %676 = vmatprep.subr.mxu0 0.0
        %677 = vmatpush2.msra.mxu0 0.0
        %678 = vmatprep.subr.mxu0 0.0
        %679 = vmatpush2.msra.mxu0 0.0
        %680 = vmatprep.subr.mxu0 0.0
        %681 = vmatpush2.msra.mxu0 0.0
        %682 = vmatprep.subr.mxu0 0.0
        %683 = vmatpush2.msra.mxu0 0.0
        %684 = vmatprep.subr.mxu0 0.0
        %685 = vmatpush2.msra.mxu0 0.0
        %686 = vmatprep.subr.mxu0 0.0
        %687 = vmatpush2.msra.mxu0 0.0
        %688 = vmatprep.subr.mxu0 0.0
        %689 = vmatpush2.msra.mxu0 0.0
        %690 = vmatprep.subr.mxu0 0.0
        %691 = vmatpush2.msra.mxu0 0.0
        %692 = vmatprep.mubr.f32.mxu0 0.0
        %693 = vmatmul.mubr.f32.gmra.mxu0 %v626
        %v694 = vpop.f32.mrf.mxu0
        %v695 = vadd.f32 0.0, %v694
        %v696 = vpop.f32.mrf.mxu0
        %697 = vdwg.mxu0
        %v699 = vsel %vm536, %v695, 0
        %701 = vmatprep.subr.mxu0 0.0
        %702 = vmatpush1.msra.mxu0 0.0
        %703 = vmatprep.subr.mxu0 0.0
        %704 = vmatpush1.msra.mxu0 0.0
        %705 = vmatprep.subr.mxu0 0.0
        %706 = vmatpush1.msra.mxu0 0.0
        %707 = vmatprep.subr.mxu0 0.0
        %708 = vmatpush1.msra.mxu0 0.0
        %709 = vmatprep.subr.mxu0 0.0
        %710 = vmatpush1.msra.mxu0 0.0
        %711 = vmatprep.subr.mxu0 0.0
        %712 = vmatpush1.msra.mxu0 0.0
        %713 = vmatprep.subr.mxu0 0.0
        %714 = vmatpush1.msra.mxu0 0.0
        %715 = vmatprep.subr.mxu0 0.0
        %716 = vmatpush1.msra.mxu0 0.0
        %717 = vmatprep.subr.mxu0 0.0
        %718 = vmatpush1.msra.mxu0 0.0
        %719 = vmatprep.subr.mxu0 0.0
        %720 = vmatpush1.msra.mxu0 0.0
        %721 = vmatprep.subr.mxu0 0.0
        %722 = vmatpush1.msra.mxu0 0.0
        %723 = vmatprep.subr.mxu0 0.0
        %724 = vmatpush1.msra.mxu0 0.0
        %725 = vmatprep.subr.mxu0 0.0
        %726 = vmatpush1.msra.mxu0 0.0
        %727 = vmatprep.subr.mxu0 0.0
        %728 = vmatpush1.msra.mxu0 0.0
        %729 = vmatprep.subr.mxu0 0.0
        %730 = vmatpush1.msra.mxu0 0.0
        %731 = vmatprep.subr.mxu0 0.0
        %732 = vmatpush1.msra.mxu0 %v524
        %733 = vmatprep.subr.mxu0 0.0
        %734 = vmatpush2.msra.mxu0 0.0
        %735 = vmatprep.subr.mxu0 0.0
        %736 = vmatpush2.msra.mxu0 0.0
        %737 = vmatprep.subr.mxu0 0.0
        %738 = vmatpush2.msra.mxu0 0.0
        %739 = vmatprep.subr.mxu0 0.0
        %740 = vmatpush2.msra.mxu0 0.0
        %741 = vmatprep.subr.mxu0 0.0
        %742 = vmatpush2.msra.mxu0 0.0
        %743 = vmatprep.subr.mxu0 0.0
        %744 = vmatpush2.msra.mxu0 0.0
        %745 = vmatprep.subr.mxu0 0.0
        %746 = vmatpush2.msra.mxu0 0.0
        %747 = vmatprep.subr.mxu0 0.0
        %748 = vmatpush2.msra.mxu0 0.0
        %749 = vmatprep.subr.mxu0 0.0
        %750 = vmatpush2.msra.mxu0 0.0
        %751 = vmatprep.subr.mxu0 0.0
        %752 = vmatpush2.msra.mxu0 0.0
        %753 = vmatprep.subr.mxu0 0.0
        %754 = vmatpush2.msra.mxu0 0.0
        %755 = vmatprep.subr.mxu0 0.0
        %756 = vmatpush2.msra.mxu0 0.0
        %757 = vmatprep.subr.mxu0 0.0
        %758 = vmatpush2.msra.mxu0 0.0
        %759 = vmatprep.subr.mxu0 0.0
        %760 = vmatpush2.msra.mxu0 0.0
        %761 = vmatprep.subr.mxu0 0.0
        %762 = vmatpush2.msra.mxu0 0.0
        %763 = vmatprep.subr.mxu0 0.0
        %764 = vmatpush2.msra.mxu0 0.0
        %765 = vmatprep.mubr.f32.mxu0 0.0
        %766 = vmatmul.mubr.f32.gmra.mxu0 %v699
        %v767 = vpop.f32.mrf.mxu0
        %v768 = vadd.f32 0.0, %v767
        %v769 = vpop.f32.mrf.mxu0
        %770 = vdwg.mxu0
        %v771 = vadd.f32 %v535, %v768
        %772 = vrot.lane.b32.xlu0 %v523, 120
        %v773 = vpop.permute.xlu0 %772
        %774 = vrot.lane.b32.xlu0 %v515, 120
        %v775 = vpop.permute.xlu0 %774
        %v776 = vsel %vm536, %v773, 0
        %v778 = vsel %vm536, %v775, 0
        %780 = vmatprep.subr.mxu0 0.0
        %781 = vmatpush1.xpose.msra.mxu0 0.0
        %782 = vmatprep.subr.mxu0 0.0
        %783 = vmatpush1.xpose.msra.mxu0 0.0
        %784 = vmatprep.subr.mxu0 0.0
        %785 = vmatpush1.xpose.msra.mxu0 0.0
        %786 = vmatprep.subr.mxu0 0.0
        %787 = vmatpush1.xpose.msra.mxu0 0.0
        %788 = vmatprep.subr.mxu0 0.0
        %789 = vmatpush1.xpose.msra.mxu0 0.0
        %790 = vmatprep.subr.mxu0 0.0
        %791 = vmatpush1.xpose.msra.mxu0 0.0
        %792 = vmatprep.subr.mxu0 0.0
        %793 = vmatpush1.xpose.msra.mxu0 0.0
        %794 = vmatprep.subr.mxu0 0.0
        %795 = vmatpush1.xpose.msra.mxu0 0.0
        %796 = vmatprep.subr.mxu0 0.0
        %797 = vmatpush1.xpose.msra.mxu0 0.0
        %798 = vmatprep.subr.mxu0 0.0
        %799 = vmatpush1.xpose.msra.mxu0 0.0
        %800 = vmatprep.subr.mxu0 0.0
        %801 = vmatpush1.xpose.msra.mxu0 0.0
        %802 = vmatprep.subr.mxu0 0.0
        %803 = vmatpush1.xpose.msra.mxu0 0.0
        %804 = vmatprep.subr.mxu0 0.0
        %805 = vmatpush1.xpose.msra.mxu0 0.0
        %806 = vmatprep.subr.mxu0 0.0
        %807 = vmatpush1.xpose.msra.mxu0 0.0
        %808 = vmatprep.subr.mxu0 0.0
        %809 = vmatpush1.xpose.msra.mxu0 0.0
        %810 = vmatprep.subr.mxu0 0.0
        %811 = vmatpush1.xpose.msra.mxu0 %v778
        %812 = vmatprep.subr.mxu0 0.0
        %813 = vmatpush2.xpose.msra.mxu0 0.0
        %814 = vmatprep.subr.mxu0 0.0
        %815 = vmatpush2.xpose.msra.mxu0 0.0
        %816 = vmatprep.subr.mxu0 0.0
        %817 = vmatpush2.xpose.msra.mxu0 0.0
        %818 = vmatprep.subr.mxu0 0.0
        %819 = vmatpush2.xpose.msra.mxu0 0.0
        %820 = vmatprep.subr.mxu0 0.0
        %821 = vmatpush2.xpose.msra.mxu0 0.0
        %822 = vmatprep.subr.mxu0 0.0
        %823 = vmatpush2.xpose.msra.mxu0 0.0
        %824 = vmatprep.subr.mxu0 0.0
        %825 = vmatpush2.xpose.msra.mxu0 0.0
        %826 = vmatprep.subr.mxu0 0.0
        %827 = vmatpush2.xpose.msra.mxu0 0.0
        %828 = vmatprep.subr.mxu0 0.0
        %829 = vmatpush2.xpose.msra.mxu0 0.0
        %830 = vmatprep.subr.mxu0 0.0
        %831 = vmatpush2.xpose.msra.mxu0 0.0
        %832 = vmatprep.subr.mxu0 0.0
        %833 = vmatpush2.xpose.msra.mxu0 0.0
        %834 = vmatprep.subr.mxu0 0.0
        %835 = vmatpush2.xpose.msra.mxu0 0.0
        %836 = vmatprep.subr.mxu0 0.0
        %837 = vmatpush2.xpose.msra.mxu0 0.0
        %838 = vmatprep.subr.mxu0 0.0
        %839 = vmatpush2.xpose.msra.mxu0 0.0
        %840 = vmatprep.subr.mxu0 0.0
        %841 = vmatpush2.xpose.msra.mxu0 0.0
        %842 = vmatprep.subr.mxu0 0.0
        %843 = vmatpush2.xpose.msra.mxu0 0.0
        %844 = vmatprep.mubr.f32.mxu0 0.0
        %845 = vmatmul.mubr.f32.gmra.mxu0 %v776
        %v846 = vpop.f32.mrf.mxu0
        %v847 = vadd.f32 0.0, %v846
        %v848 = vpop.f32.mrf.mxu0
        %849 = vdwg.mxu0
        %v850 = vsel %vm522, %v847, -1e+30
        %v851 = vsel %vm536, %v850, -inf
        %852 = vmax.xlane.f32.xlu0 %v851
        %v853 = vpop.xlane.xlu0 %852
        %v854 = vsub.f32 %v850, %v853
        %v855 = vmul.f32 %v854, 1.442695
        %v856 = vpow.pop %v855
        %v857 = vsel %vm536, %v856, 0.0
        %858 = vadd.xlane.f32.xlu0 %v857
        %v859 = vpop.xlane.xlu0 %858
        %v860 = vrcp.pop %v859
        %v861 = vmul.f32 %v856, %v860
        %v864 = vsel %vm536, %v861, 0
        %866 = vmatprep.subr.mxu0 0.0
        %867 = vmatpush1.msra.mxu0 0.0
        %868 = vmatprep.subr.mxu0 0.0
        %869 = vmatpush1.msra.mxu0 0.0
        %870 = vmatprep.subr.mxu0 0.0
        %871 = vmatpush1.msra.mxu0 0.0
        %872 = vmatprep.subr.mxu0 0.0
        %873 = vmatpush1.msra.mxu0 0.0
        %874 = vmatprep.subr.mxu0 0.0
        %875 = vmatpush1.msra.mxu0 0.0
        %876 = vmatprep.subr.mxu0 0.0
        %877 = vmatpush1.msra.mxu0 0.0
        %878 = vmatprep.subr.mxu0 0.0
        %879 = vmatpush1.msra.mxu0 0.0
        %880 = vmatprep.subr.mxu0 0.0
        %881 = vmatpush1.msra.mxu0 0.0
        %882 = vmatprep.subr.mxu0 0.0
        %883 = vmatpush1.msra.mxu0 0.0
        %884 = vmatprep.subr.mxu0 0.0
        %885 = vmatpush1.msra.mxu0 0.0
        %886 = vmatprep.subr.mxu0 0.0
        %887 = vmatpush1.msra.mxu0 0.0
        %888 = vmatprep.subr.mxu0 0.0
        %889 = vmatpush1.msra.mxu0 0.0
        %890 = vmatprep.subr.mxu0 0.0
        %891 = vmatpush1.msra.mxu0 0.0
        %892 = vmatprep.subr.mxu0 0.0
        %893 = vmatpush1.msra.mxu0 0.0
        %894 = vmatprep.subr.mxu0 0.0
        %895 = vmatpush1.msra.mxu0 0.0
        %896 = vmatprep.subr.mxu0 0.0
        %897 = vmatpush1.msra.mxu0 %v775
        %898 = vmatprep.subr.mxu0 0.0
        %899 = vmatpush2.msra.mxu0 0.0
        %900 = vmatprep.subr.mxu0 0.0
        %901 = vmatpush2.msra.mxu0 0.0
        %902 = vmatprep.subr.mxu0 0.0
        %903 = vmatpush2.msra.mxu0 0.0
        %904 = vmatprep.subr.mxu0 0.0
        %905 = vmatpush2.msra.mxu0 0.0
        %906 = vmatprep.subr.mxu0 0.0
        %907 = vmatpush2.msra.mxu0 0.0
        %908 = vmatprep.subr.mxu0 0.0
        %909 = vmatpush2.msra.mxu0 0.0
        %910 = vmatprep.subr.mxu0 0.0
        %911 = vmatpush2.msra.mxu0 0.0
        %912 = vmatprep.subr.mxu0 0.0
        %913 = vmatpush2.msra.mxu0 0.0
        %914 = vmatprep.subr.mxu0 0.0
        %915 = vmatpush2.msra.mxu0 0.0
        %916 = vmatprep.subr.mxu0 0.0
        %917 = vmatpush2.msra.mxu0 0.0
        %918 = vmatprep.subr.mxu0 0.0
        %919 = vmatpush2.msra.mxu0 0.0
        %920 = vmatprep.subr.mxu0 0.0
        %921 = vmatpush2.msra.mxu0 0.0
        %922 = vmatprep.subr.mxu0 0.0
        %923 = vmatpush2.msra.mxu0 0.0
        %924 = vmatprep.subr.mxu0 0.0
        %925 = vmatpush2.msra.mxu0 0.0
        %926 = vmatprep.subr.mxu0 0.0
        %927 = vmatpush2.msra.mxu0 0.0
        %928 = vmatprep.subr.mxu0 0.0
        %929 = vmatpush2.msra.mxu0 0.0
        %930 = vmatprep.mubr.f32.mxu0 0.0
        %931 = vmatmul.mubr.f32.gmra.mxu0 %v864
        %v932 = vpop.f32.mrf.mxu0
        %v933 = vadd.f32 0.0, %v932
        %v934 = vpop.f32.mrf.mxu0
        %935 = vdwg.mxu0
        %v937 = vsel %vm536, %v933, 0
        %939 = vmatprep.subr.mxu0 0.0
        %940 = vmatpush1.msra.mxu0 0.0
        %941 = vmatprep.subr.mxu0 0.0
        %942 = vmatpush1.msra.mxu0 0.0
        %943 = vmatprep.subr.mxu0 0.0
        %944 = vmatpush1.msra.mxu0 0.0
        %945 = vmatprep.subr.mxu0 0.0
        %946 = vmatpush1.msra.mxu0 0.0
        %947 = vmatprep.subr.mxu0 0.0
        %948 = vmatpush1.msra.mxu0 0.0
        %949 = vmatprep.subr.mxu0 0.0
        %950 = vmatpush1.msra.mxu0 0.0
        %951 = vmatprep.subr.mxu0 0.0
        %952 = vmatpush1.msra.mxu0 0.0
        %953 = vmatprep.subr.mxu0 0.0
        %954 = vmatpush1.msra.mxu0 0.0
        %955 = vmatprep.subr.mxu0 0.0
        %956 = vmatpush1.msra.mxu0 0.0
        %957 = vmatprep.subr.mxu0 0.0
        %958 = vmatpush1.msra.mxu0 0.0
        %959 = vmatprep.subr.mxu0 0.0
        %960 = vmatpush1.msra.mxu0 0.0
        %961 = vmatprep.subr.mxu0 0.0
        %962 = vmatpush1.msra.mxu0 0.0
        %963 = vmatprep.subr.mxu0 0.0
        %964 = vmatpush1.msra.mxu0 0.0
        %965 = vmatprep.subr.mxu0 0.0
        %966 = vmatpush1.msra.mxu0 0.0
        %967 = vmatprep.subr.mxu0 0.0
        %968 = vmatpush1.msra.mxu0 0.0
        %969 = vmatprep.subr.mxu0 0.0
        %970 = vmatpush1.msra.mxu0 %v525
        %971 = vmatprep.subr.mxu0 0.0
        %972 = vmatpush2.msra.mxu0 0.0
        %973 = vmatprep.subr.mxu0 0.0
        %974 = vmatpush2.msra.mxu0 0.0
        %975 = vmatprep.subr.mxu0 0.0
        %976 = vmatpush2.msra.mxu0 0.0
        %977 = vmatprep.subr.mxu0 0.0
        %978 = vmatpush2.msra.mxu0 0.0
        %979 = vmatprep.subr.mxu0 0.0
        %980 = vmatpush2.msra.mxu0 0.0
        %981 = vmatprep.subr.mxu0 0.0
        %982 = vmatpush2.msra.mxu0 0.0
        %983 = vmatprep.subr.mxu0 0.0
        %984 = vmatpush2.msra.mxu0 0.0
        %985 = vmatprep.subr.mxu0 0.0
        %986 = vmatpush2.msra.mxu0 0.0
        %987 = vmatprep.subr.mxu0 0.0
        %988 = vmatpush2.msra.mxu0 0.0
        %989 = vmatprep.subr.mxu0 0.0
        %990 = vmatpush2.msra.mxu0 0.0
        %991 = vmatprep.subr.mxu0 0.0
        %992 = vmatpush2.msra.mxu0 0.0
        %993 = vmatprep.subr.mxu0 0.0
        %994 = vmatpush2.msra.mxu0 0.0
        %995 = vmatprep.subr.mxu0 0.0
        %996 = vmatpush2.msra.mxu0 0.0
        %997 = vmatprep.subr.mxu0 0.0
        %998 = vmatpush2.msra.mxu0 0.0
        %999 = vmatprep.subr.mxu0 0.0
        %1000 = vmatpush2.msra.mxu0 0.0
        %1001 = vmatprep.subr.mxu0 0.0
        %1002 = vmatpush2.msra.mxu0 0.0
        %1003 = vmatprep.mubr.f32.mxu0 0.0
        %1004 = vmatmul.mubr.f32.gmra.mxu0 %v937
        %v1005 = vpop.f32.mrf.mxu0
        %v1006 = vadd.f32 0.0, %v1005
        %v1007 = vpop.f32.mrf.mxu0
        %1008 = vdwg.mxu0
        %v1009 = vadd.f32 %v771, %v1006
        %1010 = vrot.lane.b32.xlu0 %v523, 112
        %v1011 = vpop.permute.xlu0 %1010
        %1012 = vrot.lane.b32.xlu0 %v515, 112
        %v1013 = vpop.permute.xlu0 %1012
        %v1014 = vsel %vm536, %v1011, 0
        %v1016 = vsel %vm536, %v1013, 0
        %1018 = vmatprep.subr.mxu0 0.0
        %1019 = vmatpush1.xpose.msra.mxu0 0.0
        %1020 = vmatprep.subr.mxu0 0.0
        %1021 = vmatpush1.xpose.msra.mxu0 0.0
        %1022 = vmatprep.subr.mxu0 0.0
        %1023 = vmatpush1.xpose.msra.mxu0 0.0
        %1024 = vmatprep.subr.mxu0 0.0
        %1025 = vmatpush1.xpose.msra.mxu0 0.0
        %1026 = vmatprep.subr.mxu0 0.0
        %1027 = vmatpush1.xpose.msra.mxu0 0.0
        %1028 = vmatprep.subr.mxu0 0.0
        %1029 = vmatpush1.xpose.msra.mxu0 0.0
        %1030 = vmatprep.subr.mxu0 0.0
        %1031 = vmatpush1.xpose.msra.mxu0 0.0
        %1032 = vmatprep.subr.mxu0 0.0
        %1033 = vmatpush1.xpose.msra.mxu0 0.0
        %1034 = vmatprep.subr.mxu0 0.0
        %1035 = vmatpush1.xpose.msra.mxu0 0.0
        %1036 = vmatprep.subr.mxu0 0.0
        %1037 = vmatpush1.xpose.msra.mxu0 0.0
        %1038 = vmatprep.subr.mxu0 0.0
        %1039 = vmatpush1.xpose.msra.mxu0 0.0
        %1040 = vmatprep.subr.mxu0 0.0
        %1041 = vmatpush1.xpose.msra.mxu0 0.0
        %1042 = vmatprep.subr.mxu0 0.0
        %1043 = vmatpush1.xpose.msra.mxu0 0.0
        %1044 = vmatprep.subr.mxu0 0.0
        %1045 = vmatpush1.xpose.msra.mxu0 0.0
        %1046 = vmatprep.subr.mxu0 0.0
        %1047 = vmatpush1.xpose.msra.mxu0 0.0
        %1048 = vmatprep.subr.mxu0 0.0
        %1049 = vmatpush1.xpose.msra.mxu0 %v1016
        %1050 = vmatprep.subr.mxu0 0.0
        %1051 = vmatpush2.xpose.msra.mxu0 0.0
        %1052 = vmatprep.subr.mxu0 0.0
        %1053 = vmatpush2.xpose.msra.mxu0 0.0
        %1054 = vmatprep.subr.mxu0 0.0
        %1055 = vmatpush2.xpose.msra.mxu0 0.0
        %1056 = vmatprep.subr.mxu0 0.0
        %1057 = vmatpush2.xpose.msra.mxu0 0.0
        %1058 = vmatprep.subr.mxu0 0.0
        %1059 = vmatpush2.xpose.msra.mxu0 0.0
        %1060 = vmatprep.subr.mxu0 0.0
        %1061 = vmatpush2.xpose.msra.mxu0 0.0
        %1062 = vmatprep.subr.mxu0 0.0
        %1063 = vmatpush2.xpose.msra.mxu0 0.0
        %1064 = vmatprep.subr.mxu0 0.0
        %1065 = vmatpush2.xpose.msra.mxu0 0.0
        %1066 = vmatprep.subr.mxu0 0.0
        %1067 = vmatpush2.xpose.msra.mxu0 0.0
        %1068 = vmatprep.subr.mxu0 0.0
        %1069 = vmatpush2.xpose.msra.mxu0 0.0
        %1070 = vmatprep.subr.mxu0 0.0
        %1071 = vmatpush2.xpose.msra.mxu0 0.0
        %1072 = vmatprep.subr.mxu0 0.0
        %1073 = vmatpush2.xpose.msra.mxu0 0.0
        %1074 = vmatprep.subr.mxu0 0.0
        %1075 = vmatpush2.xpose.msra.mxu0 0.0
        %1076 = vmatprep.subr.mxu0 0.0
        %1077 = vmatpush2.xpose.msra.mxu0 0.0
        %1078 = vmatprep.subr.mxu0 0.0
        %1079 = vmatpush2.xpose.msra.mxu0 0.0
        %1080 = vmatprep.subr.mxu0 0.0
        %1081 = vmatpush2.xpose.msra.mxu0 0.0
        %1082 = vmatprep.mubr.f32.mxu0 0.0
        %1083 = vmatmul.mubr.f32.gmra.mxu0 %v1014
        %v1084 = vpop.f32.mrf.mxu0
        %v1085 = vadd.f32 0.0, %v1084
        %v1086 = vpop.f32.mrf.mxu0
        %1087 = vdwg.mxu0
        %v1088 = vsel %vm522, %v1085, -1e+30
        %v1089 = vsel %vm536, %v1088, -inf
        %1090 = vmax.xlane.f32.xlu0 %v1089
        %v1091 = vpop.xlane.xlu0 %1090
        %v1092 = vsub.f32 %v1088, %v1091
        %v1093 = vmul.f32 %v1092, 1.442695
        %v1094 = vpow.pop %v1093
        %v1095 = vsel %vm536, %v1094, 0.0
        %1096 = vadd.xlane.f32.xlu0 %v1095
        %v1097 = vpop.xlane.xlu0 %1096
        %v1098 = vrcp.pop %v1097
        %v1099 = vmul.f32 %v1094, %v1098
        %v1102 = vsel %vm536, %v1099, 0
        %1104 = vmatprep.subr.mxu0 0.0
        %1105 = vmatpush1.msra.mxu0 0.0
        %1106 = vmatprep.subr.mxu0 0.0
        %1107 = vmatpush1.msra.mxu0 0.0
        %1108 = vmatprep.subr.mxu0 0.0
        %1109 = vmatpush1.msra.mxu0 0.0
        %1110 = vmatprep.subr.mxu0 0.0
        %1111 = vmatpush1.msra.mxu0 0.0
        %1112 = vmatprep.subr.mxu0 0.0
        %1113 = vmatpush1.msra.mxu0 0.0
        %1114 = vmatprep.subr.mxu0 0.0
        %1115 = vmatpush1.msra.mxu0 0.0
        %1116 = vmatprep.subr.mxu0 0.0
        %1117 = vmatpush1.msra.mxu0 0.0
        %1118 = vmatprep.subr.mxu0 0.0
        %1119 = vmatpush1.msra.mxu0 0.0
        %1120 = vmatprep.subr.mxu0 0.0
        %1121 = vmatpush1.msra.mxu0 0.0
        %1122 = vmatprep.subr.mxu0 0.0
        %1123 = vmatpush1.msra.mxu0 0.0
        %1124 = vmatprep.subr.mxu0 0.0
        %1125 = vmatpush1.msra.mxu0 0.0
        %1126 = vmatprep.subr.mxu0 0.0
        %1127 = vmatpush1.msra.mxu0 0.0
        %1128 = vmatprep.subr.mxu0 0.0
        %1129 = vmatpush1.msra.mxu0 0.0
        %1130 = vmatprep.subr.mxu0 0.0
        %1131 = vmatpush1.msra.mxu0 0.0
        %1132 = vmatprep.subr.mxu0 0.0
        %1133 = vmatpush1.msra.mxu0 0.0
        %1134 = vmatprep.subr.mxu0 0.0
        %1135 = vmatpush1.msra.mxu0 %v1013
        %1136 = vmatprep.subr.mxu0 0.0
        %1137 = vmatpush2.msra.mxu0 0.0
        %1138 = vmatprep.subr.mxu0 0.0
        %1139 = vmatpush2.msra.mxu0 0.0
        %1140 = vmatprep.subr.mxu0 0.0
        %1141 = vmatpush2.msra.mxu0 0.0
        %1142 = vmatprep.subr.mxu0 0.0
        %1143 = vmatpush2.msra.mxu0 0.0
        %1144 = vmatprep.subr.mxu0 0.0
        %1145 = vmatpush2.msra.mxu0 0.0
        %1146 = vmatprep.subr.mxu0 0.0
        %1147 = vmatpush2.msra.mxu0 0.0
        %1148 = vmatprep.subr.mxu0 0.0
        %1149 = vmatpush2.msra.mxu0 0.0
        %1150 = vmatprep.subr.mxu0 0.0
        %1151 = vmatpush2.msra.mxu0 0.0
        %1152 = vmatprep.subr.mxu0 0.0
        %1153 = vmatpush2.msra.mxu0 0.0
        %1154 = vmatprep.subr.mxu0 0.0
        %1155 = vmatpush2.msra.mxu0 0.0
        %1156 = vmatprep.subr.mxu0 0.0
        %1157 = vmatpush2.msra.mxu0 0.0
        %1158 = vmatprep.subr.mxu0 0.0
        %1159 = vmatpush2.msra.mxu0 0.0
        %1160 = vmatprep.subr.mxu0 0.0
        %1161 = vmatpush2.msra.mxu0 0.0
        %1162 = vmatprep.subr.mxu0 0.0
        %1163 = vmatpush2.msra.mxu0 0.0
        %1164 = vmatprep.subr.mxu0 0.0
        %1165 = vmatpush2.msra.mxu0 0.0
        %1166 = vmatprep.subr.mxu0 0.0
        %1167 = vmatpush2.msra.mxu0 0.0
        %1168 = vmatprep.mubr.f32.mxu0 0.0
        %1169 = vmatmul.mubr.f32.gmra.mxu0 %v1102
        %v1170 = vpop.f32.mrf.mxu0
        %v1171 = vadd.f32 0.0, %v1170
        %v1172 = vpop.f32.mrf.mxu0
        %1173 = vdwg.mxu0
        %v1175 = vsel %vm536, %v1171, 0
        %1177 = vmatprep.subr.mxu0 0.0
        %1178 = vmatpush1.msra.mxu0 0.0
        %1179 = vmatprep.subr.mxu0 0.0
        %1180 = vmatpush1.msra.mxu0 0.0
        %1181 = vmatprep.subr.mxu0 0.0
        %1182 = vmatpush1.msra.mxu0 0.0
        %1183 = vmatprep.subr.mxu0 0.0
        %1184 = vmatpush1.msra.mxu0 0.0
        %1185 = vmatprep.subr.mxu0 0.0
        %1186 = vmatpush1.msra.mxu0 0.0
        %1187 = vmatprep.subr.mxu0 0.0
        %1188 = vmatpush1.msra.mxu0 0.0
        %1189 = vmatprep.subr.mxu0 0.0
        %1190 = vmatpush1.msra.mxu0 0.0
        %1191 = vmatprep.subr.mxu0 0.0
        %1192 = vmatpush1.msra.mxu0 0.0
        %1193 = vmatprep.subr.mxu0 0.0
        %1194 = vmatpush1.msra.mxu0 0.0
        %1195 = vmatprep.subr.mxu0 0.0
        %1196 = vmatpush1.msra.mxu0 0.0
        %1197 = vmatprep.subr.mxu0 0.0
        %1198 = vmatpush1.msra.mxu0 0.0
        %1199 = vmatprep.subr.mxu0 0.0
        %1200 = vmatpush1.msra.mxu0 0.0
        %1201 = vmatprep.subr.mxu0 0.0
        %1202 = vmatpush1.msra.mxu0 0.0
        %1203 = vmatprep.subr.mxu0 0.0
        %1204 = vmatpush1.msra.mxu0 0.0
        %1205 = vmatprep.subr.mxu0 0.0
        %1206 = vmatpush1.msra.mxu0 0.0
        %1207 = vmatprep.subr.mxu0 0.0
        %1208 = vmatpush1.msra.mxu0 %v526
        %1209 = vmatprep.subr.mxu0 0.0
        %1210 = vmatpush2.msra.mxu0 0.0
        %1211 = vmatprep.subr.mxu0 0.0
        %1212 = vmatpush2.msra.mxu0 0.0
        %1213 = vmatprep.subr.mxu0 0.0
        %1214 = vmatpush2.msra.mxu0 0.0
        %1215 = vmatprep.subr.mxu0 0.0
        %1216 = vmatpush2.msra.mxu0 0.0
        %1217 = vmatprep.subr.mxu0 0.0
        %1218 = vmatpush2.msra.mxu0 0.0
        %1219 = vmatprep.subr.mxu0 0.0
        %1220 = vmatpush2.msra.mxu0 0.0
        %1221 = vmatprep.subr.mxu0 0.0
        %1222 = vmatpush2.msra.mxu0 0.0
        %1223 = vmatprep.subr.mxu0 0.0
        %1224 = vmatpush2.msra.mxu0 0.0
        %1225 = vmatprep.subr.mxu0 0.0
        %1226 = vmatpush2.msra.mxu0 0.0
        %1227 = vmatprep.subr.mxu0 0.0
        %1228 = vmatpush2.msra.mxu0 0.0
        %1229 = vmatprep.subr.mxu0 0.0
        %1230 = vmatpush2.msra.mxu0 0.0
        %1231 = vmatprep.subr.mxu0 0.0
        %1232 = vmatpush2.msra.mxu0 0.0
        %1233 = vmatprep.subr.mxu0 0.0
        %1234 = vmatpush2.msra.mxu0 0.0
        %1235 = vmatprep.subr.mxu0 0.0
        %1236 = vmatpush2.msra.mxu0 0.0
        %1237 = vmatprep.subr.mxu0 0.0
        %1238 = vmatpush2.msra.mxu0 0.0
        %1239 = vmatprep.subr.mxu0 0.0
        %1240 = vmatpush2.msra.mxu0 0.0
        %1241 = vmatprep.mubr.f32.mxu0 0.0
        %1242 = vmatmul.mubr.f32.gmra.mxu0 %v1175
        %v1243 = vpop.f32.mrf.mxu0
        %v1244 = vadd.f32 0.0, %v1243
        %v1245 = vpop.f32.mrf.mxu0
        %1246 = vdwg.mxu0
        %v1247 = vadd.f32 %v1009, %v1244
        %1248 = vrot.lane.b32.xlu0 %v523, 104
        %v1249 = vpop.permute.xlu0 %1248
        %1250 = vrot.lane.b32.xlu0 %v515, 104
        %v1251 = vpop.permute.xlu0 %1250
        %v1252 = vsel %vm536, %v1249, 0
        %v1254 = vsel %vm536, %v1251, 0
        %1256 = vmatprep.subr.mxu0 0.0
        %1257 = vmatpush1.xpose.msra.mxu0 0.0
        %1258 = vmatprep.subr.mxu0 0.0
        %1259 = vmatpush1.xpose.msra.mxu0 0.0
        %1260 = vmatprep.subr.mxu0 0.0
        %1261 = vmatpush1.xpose.msra.mxu0 0.0
        %1262 = vmatprep.subr.mxu0 0.0
        %1263 = vmatpush1.xpose.msra.mxu0 0.0
        %1264 = vmatprep.subr.mxu0 0.0
        %1265 = vmatpush1.xpose.msra.mxu0 0.0
        %1266 = vmatprep.subr.mxu0 0.0
        %1267 = vmatpush1.xpose.msra.mxu0 0.0
        %1268 = vmatprep.subr.mxu0 0.0
        %1269 = vmatpush1.xpose.msra.mxu0 0.0
        %1270 = vmatprep.subr.mxu0 0.0
        %1271 = vmatpush1.xpose.msra.mxu0 0.0
        %1272 = vmatprep.subr.mxu0 0.0
        %1273 = vmatpush1.xpose.msra.mxu0 0.0
        %1274 = vmatprep.subr.mxu0 0.0
        %1275 = vmatpush1.xpose.msra.mxu0 0.0
        %1276 = vmatprep.subr.mxu0 0.0
        %1277 = vmatpush1.xpose.msra.mxu0 0.0
        %1278 = vmatprep.subr.mxu0 0.0
        %1279 = vmatpush1.xpose.msra.mxu0 0.0
        %1280 = vmatprep.subr.mxu0 0.0
        %1281 = vmatpush1.xpose.msra.mxu0 0.0
        %1282 = vmatprep.subr.mxu0 0.0
        %1283 = vmatpush1.xpose.msra.mxu0 0.0
        %1284 = vmatprep.subr.mxu0 0.0
        %1285 = vmatpush1.xpose.msra.mxu0 0.0
        %1286 = vmatprep.subr.mxu0 0.0
        %1287 = vmatpush1.xpose.msra.mxu0 %v1254
        %1288 = vmatprep.subr.mxu0 0.0
        %1289 = vmatpush2.xpose.msra.mxu0 0.0
        %1290 = vmatprep.subr.mxu0 0.0
        %1291 = vmatpush2.xpose.msra.mxu0 0.0
        %1292 = vmatprep.subr.mxu0 0.0
        %1293 = vmatpush2.xpose.msra.mxu0 0.0
        %1294 = vmatprep.subr.mxu0 0.0
        %1295 = vmatpush2.xpose.msra.mxu0 0.0
        %1296 = vmatprep.subr.mxu0 0.0
        %1297 = vmatpush2.xpose.msra.mxu0 0.0
        %1298 = vmatprep.subr.mxu0 0.0
        %1299 = vmatpush2.xpose.msra.mxu0 0.0
        %1300 = vmatprep.subr.mxu0 0.0
        %1301 = vmatpush2.xpose.msra.mxu0 0.0
        %1302 = vmatprep.subr.mxu0 0.0
        %1303 = vmatpush2.xpose.msra.mxu0 0.0
        %1304 = vmatprep.subr.mxu0 0.0
        %1305 = vmatpush2.xpose.msra.mxu0 0.0
        %1306 = vmatprep.subr.mxu0 0.0
        %1307 = vmatpush2.xpose.msra.mxu0 0.0
        %1308 = vmatprep.subr.mxu0 0.0
        %1309 = vmatpush2.xpose.msra.mxu0 0.0
        %1310 = vmatprep.subr.mxu0 0.0
        %1311 = vmatpush2.xpose.msra.mxu0 0.0
        %1312 = vmatprep.subr.mxu0 0.0
        %1313 = vmatpush2.xpose.msra.mxu0 0.0
        %1314 = vmatprep.subr.mxu0 0.0
        %1315 = vmatpush2.xpose.msra.mxu0 0.0
        %1316 = vmatprep.subr.mxu0 0.0
        %1317 = vmatpush2.xpose.msra.mxu0 0.0
        %1318 = vmatprep.subr.mxu0 0.0
        %1319 = vmatpush2.xpose.msra.mxu0 0.0
        %1320 = vmatprep.mubr.f32.mxu0 0.0
        %1321 = vmatmul.mubr.f32.gmra.mxu0 %v1252
        %v1322 = vpop.f32.mrf.mxu0
        %v1323 = vadd.f32 0.0, %v1322
        %v1324 = vpop.f32.mrf.mxu0
        %1325 = vdwg.mxu0
        %v1326 = vsel %vm522, %v1323, -1e+30
        %v1327 = vsel %vm536, %v1326, -inf
        %1328 = vmax.xlane.f32.xlu0 %v1327
        %v1329 = vpop.xlane.xlu0 %1328
        %v1330 = vsub.f32 %v1326, %v1329
        %v1331 = vmul.f32 %v1330, 1.442695
        %v1332 = vpow.pop %v1331
        %v1333 = vsel %vm536, %v1332, 0.0
        %1334 = vadd.xlane.f32.xlu0 %v1333
        %v1335 = vpop.xlane.xlu0 %1334
        %v1336 = vrcp.pop %v1335
        %v1337 = vmul.f32 %v1332, %v1336
        %v1340 = vsel %vm536, %v1337, 0
        %1342 = vmatprep.subr.mxu0 0.0
        %1343 = vmatpush1.msra.mxu0 0.0
        %1344 = vmatprep.subr.mxu0 0.0
        %1345 = vmatpush1.msra.mxu0 0.0
        %1346 = vmatprep.subr.mxu0 0.0
        %1347 = vmatpush1.msra.mxu0 0.0
        %1348 = vmatprep.subr.mxu0 0.0
        %1349 = vmatpush1.msra.mxu0 0.0
        %1350 = vmatprep.subr.mxu0 0.0
        %1351 = vmatpush1.msra.mxu0 0.0
        %1352 = vmatprep.subr.mxu0 0.0
        %1353 = vmatpush1.msra.mxu0 0.0
        %1354 = vmatprep.subr.mxu0 0.0
        %1355 = vmatpush1.msra.mxu0 0.0
        %1356 = vmatprep.subr.mxu0 0.0
        %1357 = vmatpush1.msra.mxu0 0.0
        %1358 = vmatprep.subr.mxu0 0.0
        %1359 = vmatpush1.msra.mxu0 0.0
        %1360 = vmatprep.subr.mxu0 0.0
        %1361 = vmatpush1.msra.mxu0 0.0
        %1362 = vmatprep.subr.mxu0 0.0
        %1363 = vmatpush1.msra.mxu0 0.0
        %1364 = vmatprep.subr.mxu0 0.0
        %1365 = vmatpush1.msra.mxu0 0.0
        %1366 = vmatprep.subr.mxu0 0.0
        %1367 = vmatpush1.msra.mxu0 0.0
        %1368 = vmatprep.subr.mxu0 0.0
        %1369 = vmatpush1.msra.mxu0 0.0
        %1370 = vmatprep.subr.mxu0 0.0
        %1371 = vmatpush1.msra.mxu0 0.0
        %1372 = vmatprep.subr.mxu0 0.0
        %1373 = vmatpush1.msra.mxu0 %v1251
        %1374 = vmatprep.subr.mxu0 0.0
        %1375 = vmatpush2.msra.mxu0 0.0
        %1376 = vmatprep.subr.mxu0 0.0
        %1377 = vmatpush2.msra.mxu0 0.0
        %1378 = vmatprep.subr.mxu0 0.0
        %1379 = vmatpush2.msra.mxu0 0.0
        %1380 = vmatprep.subr.mxu0 0.0
        %1381 = vmatpush2.msra.mxu0 0.0
        %1382 = vmatprep.subr.mxu0 0.0
        %1383 = vmatpush2.msra.mxu0 0.0
        %1384 = vmatprep.subr.mxu0 0.0
        %1385 = vmatpush2.msra.mxu0 0.0
        %1386 = vmatprep.subr.mxu0 0.0
        %1387 = vmatpush2.msra.mxu0 0.0
        %1388 = vmatprep.subr.mxu0 0.0
        %1389 = vmatpush2.msra.mxu0 0.0
        %1390 = vmatprep.subr.mxu0 0.0
        %1391 = vmatpush2.msra.mxu0 0.0
        %1392 = vmatprep.subr.mxu0 0.0
        %1393 = vmatpush2.msra.mxu0 0.0
        %1394 = vmatprep.subr.mxu0 0.0
        %1395 = vmatpush2.msra.mxu0 0.0
        %1396 = vmatprep.subr.mxu0 0.0
        %1397 = vmatpush2.msra.mxu0 0.0
        %1398 = vmatprep.subr.mxu0 0.0
        %1399 = vmatpush2.msra.mxu0 0.0
        %1400 = vmatprep.subr.mxu0 0.0
        %1401 = vmatpush2.msra.mxu0 0.0
        %1402 = vmatprep.subr.mxu0 0.0
        %1403 = vmatpush2.msra.mxu0 0.0
        %1404 = vmatprep.subr.mxu0 0.0
        %1405 = vmatpush2.msra.mxu0 0.0
        %1406 = vmatprep.mubr.f32.mxu0 0.0
        %1407 = vmatmul.mubr.f32.gmra.mxu0 %v1340
        %v1408 = vpop.f32.mrf.mxu0
        %v1409 = vadd.f32 0.0, %v1408
        %v1410 = vpop.f32.mrf.mxu0
        %1411 = vdwg.mxu0
        %v1413 = vsel %vm536, %v1409, 0
        %1415 = vmatprep.subr.mxu0 0.0
        %1416 = vmatpush1.msra.mxu0 0.0
        %1417 = vmatprep.subr.mxu0 0.0
        %1418 = vmatpush1.msra.mxu0 0.0
        %1419 = vmatprep.subr.mxu0 0.0
        %1420 = vmatpush1.msra.mxu0 0.0
        %1421 = vmatprep.subr.mxu0 0.0
        %1422 = vmatpush1.msra.mxu0 0.0
        %1423 = vmatprep.subr.mxu0 0.0
        %1424 = vmatpush1.msra.mxu0 0.0
        %1425 = vmatprep.subr.mxu0 0.0
        %1426 = vmatpush1.msra.mxu0 0.0
        %1427 = vmatprep.subr.mxu0 0.0
        %1428 = vmatpush1.msra.mxu0 0.0
        %1429 = vmatprep.subr.mxu0 0.0
        %1430 = vmatpush1.msra.mxu0 0.0
        %1431 = vmatprep.subr.mxu0 0.0
        %1432 = vmatpush1.msra.mxu0 0.0
        %1433 = vmatprep.subr.mxu0 0.0
        %1434 = vmatpush1.msra.mxu0 0.0
        %1435 = vmatprep.subr.mxu0 0.0
        %1436 = vmatpush1.msra.mxu0 0.0
        %1437 = vmatprep.subr.mxu0 0.0
        %1438 = vmatpush1.msra.mxu0 0.0
        %1439 = vmatprep.subr.mxu0 0.0
        %1440 = vmatpush1.msra.mxu0 0.0
        %1441 = vmatprep.subr.mxu0 0.0
        %1442 = vmatpush1.msra.mxu0 0.0
        %1443 = vmatprep.subr.mxu0 0.0
        %1444 = vmatpush1.msra.mxu0 0.0
        %1445 = vmatprep.subr.mxu0 0.0
        %1446 = vmatpush1.msra.mxu0 %v527
        %1447 = vmatprep.subr.mxu0 0.0
        %1448 = vmatpush2.msra.mxu0 0.0
        %1449 = vmatprep.subr.mxu0 0.0
        %1450 = vmatpush2.msra.mxu0 0.0
        %1451 = vmatprep.subr.mxu0 0.0
        %1452 = vmatpush2.msra.mxu0 0.0
        %1453 = vmatprep.subr.mxu0 0.0
        %1454 = vmatpush2.msra.mxu0 0.0
        %1455 = vmatprep.subr.mxu0 0.0
        %1456 = vmatpush2.msra.mxu0 0.0
        %1457 = vmatprep.subr.mxu0 0.0
        %1458 = vmatpush2.msra.mxu0 0.0
        %1459 = vmatprep.subr.mxu0 0.0
        %1460 = vmatpush2.msra.mxu0 0.0
        %1461 = vmatprep.subr.mxu0 0.0
        %1462 = vmatpush2.msra.mxu0 0.0
        %1463 = vmatprep.subr.mxu0 0.0
        %1464 = vmatpush2.msra.mxu0 0.0
        %1465 = vmatprep.subr.mxu0 0.0
        %1466 = vmatpush2.msra.mxu0 0.0
        %1467 = vmatprep.subr.mxu0 0.0
        %1468 = vmatpush2.msra.mxu0 0.0
        %1469 = vmatprep.subr.mxu0 0.0
        %1470 = vmatpush2.msra.mxu0 0.0
        %1471 = vmatprep.subr.mxu0 0.0
        %1472 = vmatpush2.msra.mxu0 0.0
        %1473 = vmatprep.subr.mxu0 0.0
        %1474 = vmatpush2.msra.mxu0 0.0
        %1475 = vmatprep.subr.mxu0 0.0
        %1476 = vmatpush2.msra.mxu0 0.0
        %1477 = vmatprep.subr.mxu0 0.0
        %1478 = vmatpush2.msra.mxu0 0.0
        %1479 = vmatprep.mubr.f32.mxu0 0.0
        %1480 = vmatmul.mubr.f32.gmra.mxu0 %v1413
        %v1481 = vpop.f32.mrf.mxu0
        %v1482 = vadd.f32 0.0, %v1481
        %v1483 = vpop.f32.mrf.mxu0
        %1484 = vdwg.mxu0
        %v1485 = vadd.f32 %v1247, %v1482
        %v1486 = vadd.f32 %v409, %v1485
        %v1487 = vld [vmem:[%s6] sm:$0x1]
        %v1488 = vld [vmem:[%s7] sm:$0x1]
        %v1489 = vsel %vm412, %v1486, 0.0
        %1490 = vadd.xlane.f32.xlu0 %v1489
        %v1491 = vpop.xlane.xlu0 %1490
        %v1492 = vmul.f32 %v1491, %v416
        %v1493 = vsub.f32 %v1486, %v1492
        %v1494 = vmul.f32 %v1493, %v1493
        %v1495 = vsel %vm412, %v1494, 0.0
        %1496 = vadd.xlane.f32.xlu0 %v1495
        %v1497 = vpop.xlane.xlu0 %1496
        %v1498 = vmul.f32 %v1497, %v416
        %v1499 = vadd.f32 %v1498, 1e-05
        %v1500 = vrsqrt.pop %v1499
        %v1501 = vmul.f32 %v1493, %v1500
        %v1503 = vlaneseq
        %v1504 = vshrl.u32 %v1503, 7
        %v1505 = vsub.s32 0, %v1504
        %v1506 = vrot.slane %v1487, %v1505
        %v1508 = vmul.f32 %v1501, %v1506
        %v1510 = vlaneseq
        %v1511 = vshrl.u32 %v1510, 7
        %v1512 = vsub.s32 0, %v1511
        %v1513 = vrot.slane %v1488, %v1512
        %v1515 = vadd.f32 %v1508, %v1513
        %v1516 = vld [vmem:[%s8] sm:$0xff]
        %v1517 = vld [vmem:[%s8 + $0x8] sm:$0xff]
        %v1518 = vld [vmem:[%s8 + $0x10] sm:$0xff]
        %v1519 = vld [vmem:[%s8 + $0x18] sm:$0xff]
        %v1520 = vld [vmem:[%s9] sm:$0x1]
        %v1522 = vlaneseq
        %v1523 = vshrl.u32 %v1522, 7
        %v1524 = vsub.s32 0, %v1523
        %v1525 = vrot.slane %v1520, %v1524
        %v1528 = vsel %vm412, %v1515, 0
        %1530 = vmatprep.subr.mxu0 0.0
        %1531 = vmatpush1.msra.mxu0 0.0
        %1532 = vmatprep.subr.mxu0 0.0
        %1533 = vmatpush1.msra.mxu0 0.0
        %1534 = vmatprep.subr.mxu0 0.0
        %1535 = vmatpush1.msra.mxu0 0.0
        %1536 = vmatprep.subr.mxu0 0.0
        %1537 = vmatpush1.msra.mxu0 0.0
        %1538 = vmatprep.subr.mxu0 0.0
        %1539 = vmatpush1.msra.mxu0 0.0
        %1540 = vmatprep.subr.mxu0 0.0
        %1541 = vmatpush1.msra.mxu0 0.0
        %1542 = vmatprep.subr.mxu0 0.0
        %1543 = vmatpush1.msra.mxu0 0.0
        %1544 = vmatprep.subr.mxu0 0.0
        %1545 = vmatpush1.msra.mxu0 0.0
        %1546 = vmatprep.subr.mxu0 0.0
        %1547 = vmatpush1.msra.mxu0 0.0
        %1548 = vmatprep.subr.mxu0 0.0
        %1549 = vmatpush1.msra.mxu0 0.0
        %1550 = vmatprep.subr.mxu0 0.0
        %1551 = vmatpush1.msra.mxu0 0.0
        %1552 = vmatprep.subr.mxu0 0.0
        %1553 = vmatpush1.msra.mxu0 0.0
        %1554 = vmatprep.subr.mxu0 0.0
        %1555 = vmatpush1.msra.mxu0 %v1519
        %1556 = vmatprep.subr.mxu0 0.0
        %1557 = vmatpush1.msra.mxu0 %v1518
        %1558 = vmatprep.subr.mxu0 0.0
        %1559 = vmatpush1.msra.mxu0 %v1517
        %1560 = vmatprep.subr.mxu0 0.0
        %1561 = vmatpush1.msra.mxu0 %v1516
        %1562 = vmatprep.subr.mxu0 0.0
        %1563 = vmatpush2.msra.mxu0 0.0
        %1564 = vmatprep.subr.mxu0 0.0
        %1565 = vmatpush2.msra.mxu0 0.0
        %1566 = vmatprep.subr.mxu0 0.0
        %1567 = vmatpush2.msra.mxu0 0.0
        %1568 = vmatprep.subr.mxu0 0.0
        %1569 = vmatpush2.msra.mxu0 0.0
        %1570 = vmatprep.subr.mxu0 0.0
        %1571 = vmatpush2.msra.mxu0 0.0
        %1572 = vmatprep.subr.mxu0 0.0
        %1573 = vmatpush2.msra.mxu0 0.0
        %1574 = vmatprep.subr.mxu0 0.0
        %1575 = vmatpush2.msra.mxu0 0.0
        %1576 = vmatprep.subr.mxu0 0.0
        %1577 = vmatpush2.msra.mxu0 0.0
        %1578 = vmatprep.subr.mxu0 0.0
        %1579 = vmatpush2.msra.mxu0 0.0
        %1580 = vmatprep.subr.mxu0 0.0
        %1581 = vmatpush2.msra.mxu0 0.0
        %1582 = vmatprep.subr.mxu0 0.0
        %1583 = vmatpush2.msra.mxu0 0.0
        %1584 = vmatprep.subr.mxu0 0.0
        %1585 = vmatpush2.msra.mxu0 0.0
        %1586 = vmatprep.subr.mxu0 0.0
        %1587 = vmatpush2.msra.mxu0 0.0
        %1588 = vmatprep.subr.mxu0 0.0
        %1589 = vmatpush2.msra.mxu0 0.0
        %1590 = vmatprep.subr.mxu0 0.0
        %1591 = vmatpush2.msra.mxu0 0.0
        %1592 = vmatprep.subr.mxu0 0.0
        %1593 = vmatpush2.msra.mxu0 0.0
        %1594 = vmatprep.mubr.f32.mxu0 0.0
        %1595 = vmatmul.mubr.f32.gmra.mxu0 %v1528
        %v1596 = vpop.f32.mrf.mxu0
        %v1597 = vadd.f32 %v1525, %v1596
        %v1598 = vpop.f32.mrf.mxu0
        %1599 = vdwg.mxu0
        %v1600 = vmax.f32 %v1597, 0.0
        %v1601 = vld [vmem:[%s10] sm:$0xff]
        %v1602 = vld [vmem:[%s10 + $0x8] sm:$0xff]
        %v1603 = vld [vmem:[%s10 + $0x10] sm:$0xff]
        %v1604 = vld [vmem:[%s10 + $0x18] sm:$0xff]
        %v1605 = vld [vmem:[%s10 + $0x20] sm:$0xff]
        %v1606 = vld [vmem:[%s10 + $0x28] sm:$0xff]
        %v1607 = vld [vmem:[%s10 + $0x30] sm:$0xff]
        %v1608 = vld [vmem:[%s10 + $0x38] sm:$0xff]
        %v1609 = vld [vmem:[%s10 + $0x40] sm:$0xff]
        %v1610 = vld [vmem:[%s10 + $0x48] sm:$0xff]
        %v1611 = vld [vmem:[%s10 + $0x50] sm:$0xff]
        %v1612 = vld [vmem:[%s10 + $0x58] sm:$0xff]
        %v1613 = vld [vmem:[%s10 + $0x60] sm:$0xff]
        %v1614 = vld [vmem:[%s10 + $0x68] sm:$0xff]
        %v1615 = vld [vmem:[%s10 + $0x70] sm:$0xff]
        %v1616 = vld [vmem:[%s10 + $0x78] sm:$0xff]
        %v1617 = vld [vmem:[%s11] sm:$0x1]
        %v1619 = vlaneseq
        %v1620 = vshrl.u32 %v1619, 7
        %v1621 = vsub.s32 0, %v1620
        %v1622 = vrot.slane %v1617, %v1621
        %1624 = vmatprep.subr.mxu0 0.0
        %1625 = vmatpush1.msra.mxu0 %v1616
        %1626 = vmatprep.subr.mxu0 0.0
        %1627 = vmatpush1.msra.mxu0 %v1615
        %1628 = vmatprep.subr.mxu0 0.0
        %1629 = vmatpush1.msra.mxu0 %v1614
        %1630 = vmatprep.subr.mxu0 0.0
        %1631 = vmatpush1.msra.mxu0 %v1613
        %1632 = vmatprep.subr.mxu0 0.0
        %1633 = vmatpush1.msra.mxu0 %v1612
        %1634 = vmatprep.subr.mxu0 0.0
        %1635 = vmatpush1.msra.mxu0 %v1611
        %1636 = vmatprep.subr.mxu0 0.0
        %1637 = vmatpush1.msra.mxu0 %v1610
        %1638 = vmatprep.subr.mxu0 0.0
        %1639 = vmatpush1.msra.mxu0 %v1609
        %1640 = vmatprep.subr.mxu0 0.0
        %1641 = vmatpush1.msra.mxu0 %v1608
        %1642 = vmatprep.subr.mxu0 0.0
        %1643 = vmatpush1.msra.mxu0 %v1607
        %1644 = vmatprep.subr.mxu0 0.0
        %1645 = vmatpush1.msra.mxu0 %v1606
        %1646 = vmatprep.subr.mxu0 0.0
        %1647 = vmatpush1.msra.mxu0 %v1605
        %1648 = vmatprep.subr.mxu0 0.0
        %1649 = vmatpush1.msra.mxu0 %v1604
        %1650 = vmatprep.subr.mxu0 0.0
        %1651 = vmatpush1.msra.mxu0 %v1603
        %1652 = vmatprep.subr.mxu0 0.0
        %1653 = vmatpush1.msra.mxu0 %v1602
        %1654 = vmatprep.subr.mxu0 0.0
        %1655 = vmatpush1.msra.mxu0 %v1601
        %1656 = vmatprep.subr.mxu0 0.0
        %1657 = vmatpush2.msra.mxu0 0.0
        %1658 = vmatprep.subr.mxu0 0.0
        %1659 = vmatpush2.msra.mxu0 0.0
        %1660 = vmatprep.subr.mxu0 0.0
        %1661 = vmatpush2.msra.mxu0 0.0
        %1662 = vmatprep.subr.mxu0 0.0
        %1663 = vmatpush2.msra.mxu0 0.0
        %1664 = vmatprep.subr.mxu0 0.0
        %1665 = vmatpush2.msra.mxu0 0.0
        %1666 = vmatprep.subr.mxu0 0.0
        %1667 = vmatpush2.msra.mxu0 0.0
        %1668 = vmatprep.subr.mxu0 0.0
        %1669 = vmatpush2.msra.mxu0 0.0
        %1670 = vmatprep.subr.mxu0 0.0
        %1671 = vmatpush2.msra.mxu0 0.0
        %1672 = vmatprep.subr.mxu0 0.0
        %1673 = vmatpush2.msra.mxu0 0.0
        %1674 = vmatprep.subr.mxu0 0.0
        %1675 = vmatpush2.msra.mxu0 0.0
        %1676 = vmatprep.subr.mxu0 0.0
        %1677 = vmatpush2.msra.mxu0 0.0
        %1678 = vmatprep.subr.mxu0 0.0
        %1679 = vmatpush2.msra.mxu0 0.0
        %1680 = vmatprep.subr.mxu0 0.0
        %1681 = vmatpush2.msra.mxu0 0.0
        %1682 = vmatprep.subr.mxu0 0.0
        %1683 = vmatpush2.msra.mxu0 0.0
        %1684 = vmatprep.subr.mxu0 0.0
        %1685 = vmatpush2.msra.mxu0 0.0
        %1686 = vmatprep.subr.mxu0 0.0
        %1687 = vmatpush2.msra.mxu0 0.0
        %1688 = vmatprep.mubr.f32.mxu0 0.0
        %1689 = vmatmul.mubr.f32.gmra.mxu0 %v1600
        %v1690 = vpop.f32.mrf.mxu0
        %v1691 = vadd.f32 %v1622, %v1690
        %v1692 = vpop.f32.mrf.mxu0
        %1693 = vdwg.mxu0
        %v1694 = vadd.f32 %v1486, %v1691
        %1695 = vst.msk [vmem:[%s404] sm:$0xff] %vm412, %v1694
        %s1696 = sand.u32 %s291, 1
        %s1697 = scalar_lea.sflag [#allocation3], %s1696
        %s1698 = sand.u32 %s291, 1
        %s1699 = smul.addr %s1698, 8
        %s1700 = scalar_lea.vmem [#allocation2], %s1699
        // Predicated region
        $region69: #{tpu_custom_call.1} parent=67 // pred_check
          %p1701 = pneg %p301
        $region70: #{tpu_custom_call.1} parent=67 // pred_check_branch
          %1703 = sbr.rel (%p1701) target = $region72
        $region71: #{tpu_custom_call.1} parent=67 // pred_region
          %s1705 = ssub.s32 128, 128
          %1706 = vsyncadd %s1697, %s1705
          %s1707 = smul.addr %s26, 128
          %s1708 = scalar_lea.hbm %s12, %s1707
          %s1710 = sshll.u32 %s1700, 4
          %s1711 = int_to_ptr.vmem [resolvable:$true] %s1710
          %1713 = dma.vmem_to_hbm [thread:$0]  %s1711, 128, %s1708, %s1697
        $region72: #{tpu_custom_call.1} parent=67 // pred_fallthru
          _
      $region68: #{tpu_custom_call.1} parent=5 // pred_fallthru
        _
      %p1714 = scmp.le.s32.totalorder 2, %s21
      // Predicated region
      $region73: #{tpu_custom_call.1} parent=5 // pred_check
        %p1715 = pneg %p1714
      $region74: #{tpu_custom_call.1} parent=5 // pred_check_branch
        %1717 = sbr.rel (%p1715) target = $region76
      $region75: #{tpu_custom_call.1} parent=5 // pred_region
        %s1718 = ssub.s32 %s21, 2
        // Predicated region
        $region77: #{tpu_custom_call.1} parent=75 // pred_check
          %p1719 = pneg %p307
        $region78: #{tpu_custom_call.1} parent=75 // pred_check_branch
          %1721 = sbr.rel (%p1719) target = $region80
        $region79: #{tpu_custom_call.1} parent=75 // pred_region
          %s1722 = sand.u32 %s292, 1
          %s1723 = scalar_lea.sflag [#allocation3], %s1722
          %s1724 = sand.u32 %s292, 1
          %s1725 = smul.addr %s1724, 8
          %s1726 = scalar_lea.vmem [#allocation2], %s1725
          %1727 = dma.done %s1723, 128
        $region80: #{tpu_custom_call.1} parent=75 // pred_fallthru
          _
      $region76: #{tpu_custom_call.1} parent=5 // pred_fallthru
        _
    $region6: #{tpu_custom_call.1} parent=1 // loop_footer
      %s25 = sadd.s32 1, %s21
    $region7: #{tpu_custom_call.1} parent=1 // loop_footer_branch
      %20 = sbr.rel target = $region3
    $region8: #{tpu_custom_call.1} parent=1 // loop_exit
      _
    %1728 = vsyncpa [#allocation3], 1
    %s1729 = scalar_lea.sflag [#allocation3], 1
    %1730 = vsyncpa %s1729, 1

</llo_original>
